<compile_context>
chip_gen: v7x
topology: tpu7x:2x2x1
jax: 0.10.0
libtpu: 0.0.40
codegen_flags: <defaults>
</compile_context>

<pallas_src>
import functools

import jax
import jax.numpy as jnp
from jax.experimental import pallas as pl
from jax.experimental.pallas import tpu as pltpu

START = 2


# ---- scaled-down hyperparameters (same structure as elmo_param) ----
class elmo_param:
    vocab_size = 128
    embedding_size = 32
    seq_len = 8
    num_layers = 1
    lstm_dim = 32
    project_dim = 32
    dropout = 0.3


# -------------------------- fused Pallas kernel --------------------------

def _dec_elmo_kernel(tok_ref, embed_ref, w1_ref, b1_ref, w2_ref, b2_ref,
                     p1_ref, p2_ref, out_ref, x_scr, f1_scr, *, T, B, H, V):
    """Whole dec_elmo forward for one (small) batch in a single grid step.

    tok_ref : (T*B, 1) int32   time-major flattened tokens (START prepended)
    embed   : (V, E)           embedding matrix
    w1/w2   : (D_in+H, 4H)     stacked+transposed LSTM weights ([W_ih|W_hh]^T)
    b1/b2   : (1, 4H)          b_ih + b_hh
    p1      : (E, H)           projection1^T          p2 : (H, V) projection2^T
    out     : (T*B, V)         logits, time-major flattened (lane-dense V=128)
    x_scr   : (T*B, E) VMEM    embedded inputs
    f1_scr  : (T*B, H) VMEM    forward1 -> forward2 accumulator
    """
    TB = T * B

    # ---- embedding lookup via one-hot matmul (gather-free, MXU friendly) ----
    tok = tok_ref[...]                                            # (TB, 1) int32
    iota = jax.lax.broadcasted_iota(jnp.int32, (TB, V), 1)
    onehot = (tok == iota).astype(jnp.float32)                    # (TB, V)
    x_all = jnp.dot(onehot, embed_ref[...],
                    preferred_element_type=jnp.float32)           # (TB, E)
    x_scr[...] = x_all
    # TODO(synk): nn.Dropout(0.2/0.3/0.4) are stochastic; eval-mode identity here.

    # ---- proj1(embed) contribution seeds the forward1 accumulator ----
    f1_scr[...] = jnp.dot(x_all, p1_ref[...],
                          preferred_element_type=jnp.float32)     # (TB, H)

    # hoist weights/bias loads out of the time loops (no per-step re-reads)
    w1 = w1_ref[...]
    b1 = b1_ref[...]
    w2 = w2_ref[...]
    b2 = b2_ref[...]

    def lstm_step(x_t, h_prev, c_prev, w, b):
        # single (B, D+H) @ (D+H, 4H) matmul per step (PyTorch gate order i,f,g,o)
        x_cat = jnp.concatenate([x_t, h_prev], axis=-1)
        gates = jnp.dot(x_cat, w, preferred_element_type=jnp.float32) + b
        i = jax.nn.sigmoid(gates[:, 0 * H:1 * H])
        f = jax.nn.sigmoid(gates[:, 1 * H:2 * H])
        g = jnp.tanh(gates[:, 2 * H:3 * H])
        o = jax.nn.sigmoid(gates[:, 3 * H:4 * H])
        c_new = f * c_prev + i * g
        h_new = o * jnp.tanh(c_new)
        return h_new, c_new

    zeros_bh = jnp.zeros((B, H), jnp.float32)

    # ---- LSTM1 over time: forward1 = h1_seq + proj1(embed) (accumulated) ----
    def body1(t, carry):
        h_prev, c_prev = carry
        rows = pl.ds(t * B, B)
        x_t = x_scr[rows, :]
        h_new, c_new = lstm_step(x_t, h_prev, c_prev, w1, b1)
        f1_scr[rows, :] += h_new
        return (h_new, c_new)

    jax.lax.fori_loop(0, T, body1, (zeros_bh, zeros_bh), unroll=True)

    # ---- LSTM2 over forward1: forward2 = h2_seq + forward1 (in place) ----
    def body2(t, carry):
        h_prev, c_prev = carry
        rows = pl.ds(t * B, B)
        x_t = f1_scr[rows, :]
        h_new, c_new = lstm_step(x_t, h_prev, c_prev, w2, b2)
        f1_scr[rows, :] = x_t + h_new
        return (h_new, c_new)

    jax.lax.fori_loop(0, T, body2, (zeros_bh, zeros_bh), unroll=True)

    # ---- vocab projection: single lane-dense (TB, V=128) store ----
    out_ref[...] = jnp.dot(f1_scr[...], p2_ref[...],
                           preferred_element_type=jnp.float32).astype(out_ref.dtype)


# -------------------------- parameter init --------------------------

def _xavier_uniform(key, shape, gain=1.0):
    fan_out, fan_in = shape
    bound = gain * jnp.sqrt(6.0 / (fan_in + fan_out))
    return jax.random.uniform(key, shape, jnp.float32, -bound, bound)


def init_params(arg, key):
    ks = jax.random.split(key, 8)
    H, E, V = arg.lstm_dim, arg.embedding_size, arg.vocab_size
    params = {
        # embedding matrix (stands in for ../data/embedding.npy)
        "embed": jax.random.normal(ks[0], (V, E), jnp.float32) * 0.1,
        # LSTM1: input E -> hidden H (PyTorch layout: (4H, in))
        "lstm1_w_ih": _xavier_uniform(ks[1], (4 * H, E)),
        "lstm1_w_hh": _xavier_uniform(ks[2], (4 * H, H)),
        "lstm1_b_ih": jnp.zeros((4 * H,), jnp.float32),
        "lstm1_b_hh": jnp.zeros((4 * H,), jnp.float32),
        # LSTM2: hidden H -> hidden H
        "lstm2_w_ih": _xavier_uniform(ks[3], (4 * H, H)),
        "lstm2_w_hh": _xavier_uniform(ks[4], (4 * H, H)),
        "lstm2_b_ih": jnp.zeros((4 * H,), jnp.float32),
        "lstm2_b_hh": jnp.zeros((4 * H,), jnp.float32),
        # projections (nn.Linear weight layout: (out, in), no bias)
        "proj1_w": _xavier_uniform(ks[5], (H, E)),
        "proj2_w": _xavier_uniform(ks[6], (V, H), gain=jnp.sqrt(6.0)),
    }
    return params


def prepare_kernel_params(params):
    """One-time layout prep: stack/transposed LSTM weights, pre-summed biases,
    transposed projections. Done once at setup, not per forward call."""
    h4 = params["lstm1_w_ih"].shape[0]
    return {
        "embed": params["embed"],
        "w1": jnp.transpose(jnp.concatenate(
            [params["lstm1_w_ih"], params["lstm1_w_hh"]], axis=1)),   # (E+H, 4H)
        "b1": (params["lstm1_b_ih"] + params["lstm1_b_hh"]).reshape(1, h4),
        "w2": jnp.transpose(jnp.concatenate(
            [params["lstm2_w_ih"], params["lstm2_w_hh"]], axis=1)),   # (2H, 4H)
        "b2": (params["lstm2_b_ih"] + params["lstm2_b_hh"]).reshape(1, h4),
        "p1": jnp.transpose(params["proj1_w"]),                       # (E, H)
        "p2": jnp.transpose(params["proj2_w"]),                       # (H, V)
    }


# -------------------------- forward --------------------------

def dec_elmo_forward(kparams, inputs):
    """inputs: (B, seq) int tokens. Returns logits (B, seq+1, vocab)."""
    B, S = inputs.shape
    T = S + 1
    V, E = kparams["embed"].shape
    H = kparams["p1"].shape[1]
    TB = T * B

    start_col = jnp.full((B, 1), START, dtype=inputs.dtype)
    tokens = jnp.concatenate([start_col, inputs], axis=1)              # (B, T)
    tok_tm = jnp.transpose(tokens).reshape(TB, 1).astype(jnp.int32)    # time-major

    kernel = functools.partial(_dec_elmo_kernel, T=T, B=B, H=H, V=V)
    logits_flat = pl.pallas_call(
        kernel,
        out_shape=jax.ShapeDtypeStruct((TB, V), jnp.float32),
        grid=(1,),
        in_specs=[
            pl.BlockSpec((TB, 1), lambda i: (0, 0)),        # tokens
            pl.BlockSpec((V, E), lambda i: (0, 0)),         # embedding
            pl.BlockSpec((E + H, 4 * H), lambda i: (0, 0)),  # lstm1 stacked W
            pl.BlockSpec((1, 4 * H), lambda i: (0, 0)),      # lstm1 bias
            pl.BlockSpec((2 * H, 4 * H), lambda i: (0, 0)),  # lstm2 stacked W
            pl.BlockSpec((1, 4 * H), lambda i: (0, 0)),      # lstm2 bias
            pl.BlockSpec((E, H), lambda i: (0, 0)),          # proj1^T
            pl.BlockSpec((H, V), lambda i: (0, 0)),          # proj2^T
        ],
        out_specs=pl.BlockSpec((TB, V), lambda i: (0, 0)),
        scratch_shapes=[pltpu.VMEM((TB, E), jnp.float32),    # embedded inputs
                        pltpu.VMEM((TB, H), jnp.float32)],   # forward1/forward2
        compiler_params=pltpu.CompilerParams(
            dimension_semantics=("arbitrary",)),
    )(tok_tm, kparams["embed"], kparams["w1"], kparams["b1"],
      kparams["w2"], kparams["b2"], kparams["p1"], kparams["p2"])

    logits = logits_flat.reshape(T, B, V)
    return jnp.transpose(logits, (1, 0, 2))                            # (B, T, V)


# -------------------------- pure-JAX reference (correctness check) -----------

def _lstm_ref(x_tbe, w_ih, w_hh, b_ih, b_hh):
    H = w_hh.shape[1]
    B = x_tbe.shape[1]

    def step(carry, x_t):
        h, c = carry
        gates = x_t @ w_ih.T + h @ w_hh.T + b_ih + b_hh
        i, f, g, o = jnp.split(gates, 4, axis=-1)
        c = jax.nn.sigmoid(f) * c + jax.nn.sigmoid(i) * jnp.tanh(g)
        h = jax.nn.sigmoid(o) * jnp.tanh(c)
        return (h, c), h

    init = (jnp.zeros((B, H), jnp.float32), jnp.zeros((B, H), jnp.float32))
    _, hs = jax.lax.scan(step, init, x_tbe)
    return hs


def dec_elmo_reference(params, inputs):
    B, S = inputs.shape
    start_col = jnp.full((B, 1), START, dtype=inputs.dtype)
    tokens = jnp.concatenate([start_col, inputs], axis=1)
    x = jnp.take(params["embed"], tokens, axis=0)              # (B, T, E)
    x_t = jnp.transpose(x, (1, 0, 2))                          # (T, B, E)
    h1 = _lstm_ref(x_t, params["lstm1_w_ih"], params["lstm1_w_hh"],
                   params["lstm1_b_ih"], params["lstm1_b_hh"])
    f1 = h1 + jnp.einsum("tbe,he->tbh", x_t, params["proj1_w"])
    h2 = _lstm_ref(f1, params["lstm2_w_ih"], params["lstm2_w_hh"],
                   params["lstm2_b_ih"], params["lstm2_b_hh"])
    f2 = h2 + f1
    logits = jnp.einsum("tbh,vh->tbv", f2, params["proj2_w"])
    return jnp.transpose(logits, (1, 0, 2))


# -------------------------- main --------------------------

if __name__ == "__main__":
    arg = elmo_param()
    key = jax.random.PRNGKey(0)
    k_param, k_tok = jax.random.split(key)

    params = init_params(arg, k_param)
    kparams = prepare_kernel_params(params)      # one-time weight layout prep

    batch = 2
    inputs = jax.random.randint(k_tok, (batch, arg.seq_len), 0,
                                arg.vocab_size, dtype=jnp.int32)

    fwd = jax.jit(dec_elmo_forward)
    out = fwd(kparams, inputs)
    jax.block_until_ready(out)

    assert out.shape == (batch, arg.seq_len + 1, arg.vocab_size), out.shape
    assert bool(jnp.all(jnp.isfinite(out)))

    ref = dec_elmo_reference(params, inputs)
    max_err = float(jnp.max(jnp.abs(out - ref)))
    assert max_err < 1e-2, max_err

    print("KERNEL_OK")
</pallas_src>

<mosaic_0001>
module attributes {stable_mosaic.version = 11 : i64} {
  func.func @_dec_elmo_kernel(%arg0: i32, %arg1: memref<18x1xi32, #tpu.memory_space<vmem>>, %arg2: memref<128x32xf32, #tpu.memory_space<vmem>>, %arg3: memref<64x128xf32, #tpu.memory_space<vmem>>, %arg4: memref<1x128xf32, #tpu.memory_space<vmem>>, %arg5: memref<64x128xf32, #tpu.memory_space<vmem>>, %arg6: memref<1x128xf32, #tpu.memory_space<vmem>>, %arg7: memref<32x32xf32, #tpu.memory_space<vmem>>, %arg8: memref<32x128xf32, #tpu.memory_space<vmem>>, %arg9: memref<18x128xf32, #tpu.memory_space<vmem>>, %arg10: memref<18x32xf32, #tpu.memory_space<vmem>>, %arg11: memref<18x32xf32, #tpu.memory_space<vmem>>) attributes {dimension_semantics = [#tpu.dimension_semantics<arbitrary>], iteration_bounds = array<i64: 1>, scalar_prefetch = 0 : i64, scratch_operands = 2 : i64, tpu.core_type = #tpu.core_type<tc>, window_params = [{pipeline_mode = #tpu.pipeline_mode<synchronous>, transform_indices = @transform_0, window_bounds = array<i64: 18, 1>}, {pipeline_mode = #tpu.pipeline_mode<synchronous>, transform_indices = @transform_1, window_bounds = array<i64: 128, 32>}, {pipeline_mode = #tpu.pipeline_mode<synchronous>, transform_indices = @transform_2, window_bounds = array<i64: 64, 128>}, {pipeline_mode = #tpu.pipeline_mode<synchronous>, transform_indices = @transform_3, window_bounds = array<i64: 1, 128>}, {pipeline_mode = #tpu.pipeline_mode<synchronous>, transform_indices = @transform_4, window_bounds = array<i64: 64, 128>}, {pipeline_mode = #tpu.pipeline_mode<synchronous>, transform_indices = @transform_5, window_bounds = array<i64: 1, 128>}, {pipeline_mode = #tpu.pipeline_mode<synchronous>, transform_indices = @transform_6, window_bounds = array<i64: 32, 32>}, {pipeline_mode = #tpu.pipeline_mode<synchronous>, transform_indices = @transform_7, window_bounds = array<i64: 32, 128>}, {pipeline_mode = #tpu.pipeline_mode<synchronous>, transform_indices = @transform_8, window_bounds = array<i64: 18, 128>}]} {
    %c0 = arith.constant 0 : index
    %c0_0 = arith.constant 0 : index
    %0 = vector.load %arg1[%c0, %c0_0] : memref<18x1xi32, #tpu.memory_space<vmem>>, vector<18x1xi32>
    %1 = tpu.iota {dimensions = array<i32: 1>} : vector<18x128xi32>
    %2 = vector.broadcast %0 : vector<18x1xi32> to vector<18x128xi32>
    %3 = arith.cmpi eq, %2, %1 : vector<18x128xi32>
    %4 = arith.extui %3 : vector<18x128xi1> to vector<18x128xi32>
    %5 = arith.sitofp %4 : vector<18x128xi32> to vector<18x128xf32>
    %c0_1 = arith.constant 0 : index
    %c0_2 = arith.constant 0 : index
    %6 = vector.load %arg2[%c0_1, %c0_2] : memref<128x32xf32, #tpu.memory_space<vmem>>, vector<128x32xf32>
    %cst = arith.constant dense<0.000000e+00> : vector<18x32xf32>
    %7 = tpu.matmul %5, %6, %cst {dimension_numbers = #tpu.dot_dimension_numbers<[1], [0], [0], [1], [0, 0, 1, 1], [], []>} : vector<18x128xf32>, vector<128x32xf32>, vector<18x32xf32> -> vector<18x32xf32>
    %c0_3 = arith.constant 0 : index
    %c0_4 = arith.constant 0 : index
    %8 = vector.load %arg10[%c0_3, %c0_4] : memref<18x32xf32, #tpu.memory_space<vmem>>, vector<18x32xf32>
    tpu.vector_store %arg10[%c0_3, %c0_4], %7 {strides = array<i32>} : memref<18x32xf32, #tpu.memory_space<vmem>>, vector<18x32xf32>,
    %c0_5 = arith.constant 0 : index
    %c0_6 = arith.constant 0 : index
    %9 = vector.load %arg7[%c0_5, %c0_6] : memref<32x32xf32, #tpu.memory_space<vmem>>, vector<32x32xf32>
    %cst_7 = arith.constant dense<0.000000e+00> : vector<18x32xf32>
    %10 = tpu.matmul %7, %9, %cst_7 {dimension_numbers = #tpu.dot_dimension_numbers<[1], [0], [0], [1], [0, 0, 1, 1], [], []>} : vector<18x32xf32>, vector<32x32xf32>, vector<18x32xf32> -> vector<18x32xf32>
    %c0_8 = arith.constant 0 : index
    %c0_9 = arith.constant 0 : index
    %11 = vector.load %arg11[%c0_8, %c0_9] : memref<18x32xf32, #tpu.memory_space<vmem>>, vector<18x32xf32>
    tpu.vector_store %arg11[%c0_8, %c0_9], %10 {strides = array<i32>} : memref<18x32xf32, #tpu.memory_space<vmem>>, vector<18x32xf32>,
    %c0_10 = arith.constant 0 : index
    %c0_11 = arith.constant 0 : index
    %12 = vector.load %arg3[%c0_10, %c0_11] : memref<64x128xf32, #tpu.memory_space<vmem>>, vector<64x128xf32>
    %c0_12 = arith.constant 0 : index
    %c0_13 = arith.constant 0 : index
    %13 = vector.load %arg4[%c0_12, %c0_13] : memref<1x128xf32, #tpu.memory_space<vmem>>, vector<1x128xf32>
    %c0_14 = arith.constant 0 : index
    %c0_15 = arith.constant 0 : index
    %14 = vector.load %arg5[%c0_14, %c0_15] : memref<64x128xf32, #tpu.memory_space<vmem>>, vector<64x128xf32>
    %c0_16 = arith.constant 0 : index
    %c0_17 = arith.constant 0 : index
    %15 = vector.load %arg6[%c0_16, %c0_17] : memref<1x128xf32, #tpu.memory_space<vmem>>, vector<1x128xf32>
    %cst_18 = arith.constant 0.000000e+00 : f32
    %16 = vector.broadcast %cst_18 : f32 to vector<2x32xf32>
    %c0_i32 = arith.constant 0 : i32
    %c2_i32 = arith.constant 2 : i32
    %17 = arith.muli %c0_i32, %c2_i32 : i32
    %18 = arith.index_cast %17 : i32 to index
    %c0_19 = arith.constant 0 : index
    %19 = vector.load %arg10[%18, %c0_19] : memref<18x32xf32, #tpu.memory_space<vmem>>, vector<2x32xf32>
    %20 = tpu.concatenate %19, %16 in 1 : vector<2x32xf32>, vector<2x32xf32> -> vector<2x64xf32>
    %cst_20 = arith.constant dense<0.000000e+00> : vector<2x128xf32>
    %21 = tpu.matmul %20, %12, %cst_20 {dimension_numbers = #tpu.dot_dimension_numbers<[1], [0], [0], [1], [0, 0, 1, 1], [], []>} : vector<2x64xf32>, vector<64x128xf32>, vector<2x128xf32> -> vector<2x128xf32>
    %22 = vector.broadcast %13 : vector<1x128xf32> to vector<2x128xf32>
    %23 = arith.addf %21, %22 : vector<2x128xf32>
    %24 = vector.extract_strided_slice %23 {offsets = [0, 0], sizes = [2, 32], strides = [1, 1]} : vector<2x128xf32> to vector<2x32xf32>
    %25 = arith.negf %24 : vector<2x32xf32>
    %26 = math.exp %25 : vector<2x32xf32>
    %cst_21 = arith.constant 1.000000e+00 : f32
    %27 = vector.broadcast %cst_21 : f32 to vector<2x32xf32>
    %28 = arith.addf %27, %26 : vector<2x32xf32>
    %29 = arith.divf %27, %28 : vector<2x32xf32>
    %30 = vector.extract_strided_slice %23 {offsets = [0, 32], sizes = [2, 32], strides = [1, 1]} : vector<2x128xf32> to vector<2x32xf32>
    %31 = arith.negf %30 : vector<2x32xf32>
    %32 = math.exp %31 : vector<2x32xf32>
    %cst_22 = arith.constant 1.000000e+00 : f32
    %33 = vector.broadcast %cst_22 : f32 to vector<2x32xf32>
    %34 = arith.addf %33, %32 : vector<2x32xf32>
    %35 = arith.divf %33, %34 : vector<2x32xf32>
    %36 = vector.extract_strided_slice %23 {offsets = [0, 64], sizes = [2, 32], strides = [1, 1]} : vector<2x128xf32> to vector<2x32xf32>
    %37 = math.tanh %36 : vector<2x32xf32>
    %38 = vector.extract_strided_slice %23 {offsets = [0, 96], sizes = [2, 32], strides = [1, 1]} : vector<2x128xf32> to vector<2x32xf32>
    %39 = arith.negf %38 : vector<2x32xf32>
    %40 = math.exp %39 : vector<2x32xf32>
    %cst_23 = arith.constant 1.000000e+00 : f32
    %41 = vector.broadcast %cst_23 : f32 to vector<2x32xf32>
    %42 = arith.addf %41, %40 : vector<2x32xf32>
    %43 = arith.divf %41, %42 : vector<2x32xf32>
    %44 = arith.mulf %35, %16 : vector<2x32xf32>
    %45 = arith.mulf %29, %37 : vector<2x32xf32>
    %46 = arith.addf %44, %45 : vector<2x32xf32>
    %47 = math.tanh %46 : vector<2x32xf32>
    %48 = arith.mulf %43, %47 : vector<2x32xf32>
    %49 = arith.index_cast %17 : i32 to index
    %c0_24 = arith.constant 0 : index
    %50 = vector.load %arg11[%49, %c0_24] : memref<18x32xf32, #tpu.memory_space<vmem>>, vector<2x32xf32>
    %51 = arith.addf %50, %48 : vector<2x32xf32>
    %52 = arith.index_cast %17 : i32 to index
    %c0_25 = arith.constant 0 : index
    %53 = vector.load %arg11[%52, %c0_25] : memref<18x32xf32, #tpu.memory_space<vmem>>, vector<2x32xf32>
    tpu.vector_store %arg11[%52, %c0_25], %51 {strides = array<i32>} : memref<18x32xf32, #tpu.memory_space<vmem>>, vector<2x32xf32>,
    %c1_i32 = arith.constant 1 : i32
    %c2_i32_26 = arith.constant 2 : i32
    %54 = arith.muli %c1_i32, %c2_i32_26 : i32
    %55 = arith.index_cast %54 : i32 to index
    %c0_27 = arith.constant 0 : index
    %56 = vector.load %arg10[%55, %c0_27] : memref<18x32xf32, #tpu.memory_space<vmem>>, vector<2x32xf32>
    %57 = tpu.concatenate %56, %48 in 1 : vector<2x32xf32>, vector<2x32xf32> -> vector<2x64xf32>
    %cst_28 = arith.constant dense<0.000000e+00> : vector<2x128xf32>
    %58 = tpu.matmul %57, %12, %cst_28 {dimension_numbers = #tpu.dot_dimension_numbers<[1], [0], [0], [1], [0, 0, 1, 1], [], []>} : vector<2x64xf32>, vector<64x128xf32>, vector<2x128xf32> -> vector<2x128xf32>
    %59 = vector.broadcast %13 : vector<1x128xf32> to vector<2x128xf32>
    %60 = arith.addf %58, %59 : vector<2x128xf32>
    %61 = vector.extract_strided_slice %60 {offsets = [0, 0], sizes = [2, 32], strides = [1, 1]} : vector<2x128xf32> to vector<2x32xf32>
    %62 = arith.negf %61 : vector<2x32xf32>
    %63 = math.exp %62 : vector<2x32xf32>
    %cst_29 = arith.constant 1.000000e+00 : f32
    %64 = vector.broadcast %cst_29 : f32 to vector<2x32xf32>
    %65 = arith.addf %64, %63 : vector<2x32xf32>
    %66 = arith.divf %64, %65 : vector<2x32xf32>
    %67 = vector.extract_strided_slice %60 {offsets = [0, 32], sizes = [2, 32], strides = [1, 1]} : vector<2x128xf32> to vector<2x32xf32>
    %68 = arith.negf %67 : vector<2x32xf32>
    %69 = math.exp %68 : vector<2x32xf32>
    %cst_30 = arith.constant 1.000000e+00 : f32
    %70 = vector.broadcast %cst_30 : f32 to vector<2x32xf32>
    %71 = arith.addf %70, %69 : vector<2x32xf32>
    %72 = arith.divf %70, %71 : vector<2x32xf32>
    %73 = vector.extract_strided_slice %60 {offsets = [0, 64], sizes = [2, 32], strides = [1, 1]} : vector<2x128xf32> to vector<2x32xf32>
    %74 = math.tanh %73 : vector<2x32xf32>
    %75 = vector.extract_strided_slice %60 {offsets = [0, 96], sizes = [2, 32], strides = [1, 1]} : vector<2x128xf32> to vector<2x32xf32>
    %76 = arith.negf %75 : vector<2x32xf32>
    %77 = math.exp %76 : vector<2x32xf32>
    %cst_31 = arith.constant 1.000000e+00 : f32
    %78 = vector.broadcast %cst_31 : f32 to vector<2x32xf32>
    %79 = arith.addf %78, %77 : vector<2x32xf32>
    %80 = arith.divf %78, %79 : vector<2x32xf32>
    %81 = arith.mulf %72, %46 : vector<2x32xf32>
    %82 = arith.mulf %66, %74 : vector<2x32xf32>
    %83 = arith.addf %81, %82 : vector<2x32xf32>
    %84 = math.tanh %83 : vector<2x32xf32>
    %85 = arith.mulf %80, %84 : vector<2x32xf32>
    %86 = arith.index_cast %54 : i32 to index
    %c0_32 = arith.constant 0 : index
    %87 = vector.load %arg11[%86, %c0_32] : memref<18x32xf32, #tpu.memory_space<vmem>>, vector<2x32xf32>
    %88 = arith.addf %87, %85 : vector<2x32xf32>
    %89 = arith.index_cast %54 : i32 to index
    %c0_33 = arith.constant 0 : index
    %90 = vector.load %arg11[%89, %c0_33] : memref<18x32xf32, #tpu.memory_space<vmem>>, vector<2x32xf32>
    tpu.vector_store %arg11[%89, %c0_33], %88 {strides = array<i32>} : memref<18x32xf32, #tpu.memory_space<vmem>>, vector<2x32xf32>,
    %c2_i32_34 = arith.constant 2 : i32
    %c2_i32_35 = arith.constant 2 : i32
    %91 = arith.muli %c2_i32_34, %c2_i32_35 : i32
    %92 = arith.index_cast %91 : i32 to index
    %c0_36 = arith.constant 0 : index
    %93 = vector.load %arg10[%92, %c0_36] : memref<18x32xf32, #tpu.memory_space<vmem>>, vector<2x32xf32>
    %94 = tpu.concatenate %93, %85 in 1 : vector<2x32xf32>, vector<2x32xf32> -> vector<2x64xf32>
    %cst_37 = arith.constant dense<0.000000e+00> : vector<2x128xf32>
    %95 = tpu.matmul %94, %12, %cst_37 {dimension_numbers = #tpu.dot_dimension_numbers<[1], [0], [0], [1], [0, 0, 1, 1], [], []>} : vector<2x64xf32>, vector<64x128xf32>, vector<2x128xf32> -> vector<2x128xf32>
    %96 = vector.broadcast %13 : vector<1x128xf32> to vector<2x128xf32>
    %97 = arith.addf %95, %96 : vector<2x128xf32>
    %98 = vector.extract_strided_slice %97 {offsets = [0, 0], sizes = [2, 32], strides = [1, 1]} : vector<2x128xf32> to vector<2x32xf32>
    %99 = arith.negf %98 : vector<2x32xf32>
    %100 = math.exp %99 : vector<2x32xf32>
    %cst_38 = arith.constant 1.000000e+00 : f32
    %101 = vector.broadcast %cst_38 : f32 to vector<2x32xf32>
    %102 = arith.addf %101, %100 : vector<2x32xf32>
    %103 = arith.divf %101, %102 : vector<2x32xf32>
    %104 = vector.extract_strided_slice %97 {offsets = [0, 32], sizes = [2, 32], strides = [1, 1]} : vector<2x128xf32> to vector<2x32xf32>
    %105 = arith.negf %104 : vector<2x32xf32>
    %106 = math.exp %105 : vector<2x32xf32>
    %cst_39 = arith.constant 1.000000e+00 : f32
    %107 = vector.broadcast %cst_39 : f32 to vector<2x32xf32>
    %108 = arith.addf %107, %106 : vector<2x32xf32>
    %109 = arith.divf %107, %108 : vector<2x32xf32>
    %110 = vector.extract_strided_slice %97 {offsets = [0, 64], sizes = [2, 32], strides = [1, 1]} : vector<2x128xf32> to vector<2x32xf32>
    %111 = math.tanh %110 : vector<2x32xf32>
    %112 = vector.extract_strided_slice %97 {offsets = [0, 96], sizes = [2, 32], strides = [1, 1]} : vector<2x128xf32> to vector<2x32xf32>
    %113 = arith.negf %112 : vector<2x32xf32>
    %114 = math.exp %113 : vector<2x32xf32>
    %cst_40 = arith.constant 1.000000e+00 : f32
    %115 = vector.broadcast %cst_40 : f32 to vector<2x32xf32>
    %116 = arith.addf %115, %114 : vector<2x32xf32>
    %117 = arith.divf %115, %116 : vector<2x32xf32>
    %118 = arith.mulf %109, %83 : vector<2x32xf32>
    %119 = arith.mulf %103, %111 : vector<2x32xf32>
    %120 = arith.addf %118, %119 : vector<2x32xf32>
    %121 = math.tanh %120 : vector<2x32xf32>
    %122 = arith.mulf %117, %121 : vector<2x32xf32>
    %123 = arith.index_cast %91 : i32 to index
    %c0_41 = arith.constant 0 : index
    %124 = vector.load %arg11[%123, %c0_41] : memref<18x32xf32, #tpu.memory_space<vmem>>, vector<2x32xf32>
    %125 = arith.addf %124, %122 : vector<2x32xf32>
    %126 = arith.index_cast %91 : i32 to index
    %c0_42 = arith.constant 0 : index
    %127 = vector.load %arg11[%126, %c0_42] : memref<18x32xf32, #tpu.memory_space<vmem>>, vector<2x32xf32>
    tpu.vector_store %arg11[%126, %c0_42], %125 {strides = array<i32>} : memref<18x32xf32, #tpu.memory_space<vmem>>, vector<2x32xf32>,
    %c3_i32 = arith.constant 3 : i32
    %c2_i32_43 = arith.constant 2 : i32
    %128 = arith.muli %c3_i32, %c2_i32_43 : i32
    %129 = arith.index_cast %128 : i32 to index
    %c0_44 = arith.constant 0 : index
    %130 = vector.load %arg10[%129, %c0_44] : memref<18x32xf32, #tpu.memory_space<vmem>>, vector<2x32xf32>
    %131 = tpu.concatenate %130, %122 in 1 : vector<2x32xf32>, vector<2x32xf32> -> vector<2x64xf32>
    %cst_45 = arith.constant dense<0.000000e+00> : vector<2x128xf32>
    %132 = tpu.matmul %131, %12, %cst_45 {dimension_numbers = #tpu.dot_dimension_numbers<[1], [0], [0], [1], [0, 0, 1, 1], [], []>} : vector<2x64xf32>, vector<64x128xf32>, vector<2x128xf32> -> vector<2x128xf32>
    %133 = vector.broadcast %13 : vector<1x128xf32> to vector<2x128xf32>
    %134 = arith.addf %132, %133 : vector<2x128xf32>
    %135 = vector.extract_strided_slice %134 {offsets = [0, 0], sizes = [2, 32], strides = [1, 1]} : vector<2x128xf32> to vector<2x32xf32>
    %136 = arith.negf %135 : vector<2x32xf32>
    %137 = math.exp %136 : vector<2x32xf32>
    %cst_46 = arith.constant 1.000000e+00 : f32
    %138 = vector.broadcast %cst_46 : f32 to vector<2x32xf32>
    %139 = arith.addf %138, %137 : vector<2x32xf32>
    %140 = arith.divf %138, %139 : vector<2x32xf32>
    %141 = vector.extract_strided_slice %134 {offsets = [0, 32], sizes = [2, 32], strides = [1, 1]} : vector<2x128xf32> to vector<2x32xf32>
    %142 = arith.negf %141 : vector<2x32xf32>
    %143 = math.exp %142 : vector<2x32xf32>
    %cst_47 = arith.constant 1.000000e+00 : f32
    %144 = vector.broadcast %cst_47 : f32 to vector<2x32xf32>
    %145 = arith.addf %144, %143 : vector<2x32xf32>
    %146 = arith.divf %144, %145 : vector<2x32xf32>
    %147 = vector.extract_strided_slice %134 {offsets = [0, 64], sizes = [2, 32], strides = [1, 1]} : vector<2x128xf32> to vector<2x32xf32>
    %148 = math.tanh %147 : vector<2x32xf32>
    %149 = vector.extract_strided_slice %134 {offsets = [0, 96], sizes = [2, 32], strides = [1, 1]} : vector<2x128xf32> to vector<2x32xf32>
    %150 = arith.negf %149 : vector<2x32xf32>
    %151 = math.exp %150 : vector<2x32xf32>
    %cst_48 = arith.constant 1.000000e+00 : f32
    %152 = vector.broadcast %cst_48 : f32 to vector<2x32xf32>
    %153 = arith.addf %152, %151 : vector<2x32xf32>
    %154 = arith.divf %152, %153 : vector<2x32xf32>
    %155 = arith.mulf %146, %120 : vector<2x32xf32>
    %156 = arith.mulf %140, %148 : vector<2x32xf32>
    %157 = arith.addf %155, %156 : vector<2x32xf32>
    %158 = math.tanh %157 : vector<2x32xf32>
    %159 = arith.mulf %154, %158 : vector<2x32xf32>
    %160 = arith.index_cast %128 : i32 to index
    %c0_49 = arith.constant 0 : index
    %161 = vector.load %arg11[%160, %c0_49] : memref<18x32xf32, #tpu.memory_space<vmem>>, vector<2x32xf32>
    %162 = arith.addf %161, %159 : vector<2x32xf32>
    %163 = arith.index_cast %128 : i32 to index
    %c0_50 = arith.constant 0 : index
    %164 = vector.load %arg11[%163, %c0_50] : memref<18x32xf32, #tpu.memory_space<vmem>>, vector<2x32xf32>
    tpu.vector_store %arg11[%163, %c0_50], %162 {strides = array<i32>} : memref<18x32xf32, #tpu.memory_space<vmem>>, vector<2x32xf32>,
    %c4_i32 = arith.constant 4 : i32
    %c2_i32_51 = arith.constant 2 : i32
    %165 = arith.muli %c4_i32, %c2_i32_51 : i32
    %166 = arith.index_cast %165 : i32 to index
    %c0_52 = arith.constant 0 : index
    %167 = vector.load %arg10[%166, %c0_52] : memref<18x32xf32, #tpu.memory_space<vmem>>, vector<2x32xf32>
    %168 = tpu.concatenate %167, %159 in 1 : vector<2x32xf32>, vector<2x32xf32> -> vector<2x64xf32>
    %cst_53 = arith.constant dense<0.000000e+00> : vector<2x128xf32>
    %169 = tpu.matmul %168, %12, %cst_53 {dimension_numbers = #tpu.dot_dimension_numbers<[1], [0], [0], [1], [0, 0, 1, 1], [], []>} : vector<2x64xf32>, vector<64x128xf32>, vector<2x128xf32> -> vector<2x128xf32>
    %170 = vector.broadcast %13 : vector<1x128xf32> to vector<2x128xf32>
    %171 = arith.addf %169, %170 : vector<2x128xf32>
    %172 = vector.extract_strided_slice %171 {offsets = [0, 0], sizes = [2, 32], strides = [1, 1]} : vector<2x128xf32> to vector<2x32xf32>
    %173 = arith.negf %172 : vector<2x32xf32>
    %174 = math.exp %173 : vector<2x32xf32>
    %cst_54 = arith.constant 1.000000e+00 : f32
    %175 = vector.broadcast %cst_54 : f32 to vector<2x32xf32>
    %176 = arith.addf %175, %174 : vector<2x32xf32>
    %177 = arith.divf %175, %176 : vector<2x32xf32>
    %178 = vector.extract_strided_slice %171 {offsets = [0, 32], sizes = [2, 32], strides = [1, 1]} : vector<2x128xf32> to vector<2x32xf32>
    %179 = arith.negf %178 : vector<2x32xf32>
    %180 = math.exp %179 : vector<2x32xf32>
    %cst_55 = arith.constant 1.000000e+00 : f32
    %181 = vector.broadcast %cst_55 : f32 to vector<2x32xf32>
    %182 = arith.addf %181, %180 : vector<2x32xf32>
    %183 = arith.divf %181, %182 : vector<2x32xf32>
    %184 = vector.extract_strided_slice %171 {offsets = [0, 64], sizes = [2, 32], strides = [1, 1]} : vector<2x128xf32> to vector<2x32xf32>
    %185 = math.tanh %184 : vector<2x32xf32>
    %186 = vector.extract_strided_slice %171 {offsets = [0, 96], sizes = [2, 32], strides = [1, 1]} : vector<2x128xf32> to vector<2x32xf32>
    %187 = arith.negf %186 : vector<2x32xf32>
    %188 = math.exp %187 : vector<2x32xf32>
    %cst_56 = arith.constant 1.000000e+00 : f32
    %189 = vector.broadcast %cst_56 : f32 to vector<2x32xf32>
    %190 = arith.addf %189, %188 : vector<2x32xf32>
    %191 = arith.divf %189, %190 : vector<2x32xf32>
    %192 = arith.mulf %183, %157 : vector<2x32xf32>
    %193 = arith.mulf %177, %185 : vector<2x32xf32>
    %194 = arith.addf %192, %193 : vector<2x32xf32>
    %195 = math.tanh %194 : vector<2x32xf32>
    %196 = arith.mulf %191, %195 : vector<2x32xf32>
    %197 = arith.index_cast %165 : i32 to index
    %c0_57 = arith.constant 0 : index
    %198 = vector.load %arg11[%197, %c0_57] : memref<18x32xf32, #tpu.memory_space<vmem>>, vector<2x32xf32>
    %199 = arith.addf %198, %196 : vector<2x32xf32>
    %200 = arith.index_cast %165 : i32 to index
    %c0_58 = arith.constant 0 : index
    %201 = vector.load %arg11[%200, %c0_58] : memref<18x32xf32, #tpu.memory_space<vmem>>, vector<2x32xf32>
    tpu.vector_store %arg11[%200, %c0_58], %199 {strides = array<i32>} : memref<18x32xf32, #tpu.memory_space<vmem>>, vector<2x32xf32>,
    %c5_i32 = arith.constant 5 : i32
    %c2_i32_59 = arith.constant 2 : i32
    %202 = arith.muli %c5_i32, %c2_i32_59 : i32
    %203 = arith.index_cast %202 : i32 to index
    %c0_60 = arith.constant 0 : index
    %204 = vector.load %arg10[%203, %c0_60] : memref<18x32xf32, #tpu.memory_space<vmem>>, vector<2x32xf32>
    %205 = tpu.concatenate %204, %196 in 1 : vector<2x32xf32>, vector<2x32xf32> -> vector<2x64xf32>
    %cst_61 = arith.constant dense<0.000000e+00> : vector<2x128xf32>
    %206 = tpu.matmul %205, %12, %cst_61 {dimension_numbers = #tpu.dot_dimension_numbers<[1], [0], [0], [1], [0, 0, 1, 1], [], []>} : vector<2x64xf32>, vector<64x128xf32>, vector<2x128xf32> -> vector<2x128xf32>
    %207 = vector.broadcast %13 : vector<1x128xf32> to vector<2x128xf32>
    %208 = arith.addf %206, %207 : vector<2x128xf32>
    %209 = vector.extract_strided_slice %208 {offsets = [0, 0], sizes = [2, 32], strides = [1, 1]} : vector<2x128xf32> to vector<2x32xf32>
    %210 = arith.negf %209 : vector<2x32xf32>
    %211 = math.exp %210 : vector<2x32xf32>
    %cst_62 = arith.constant 1.000000e+00 : f32
    %212 = vector.broadcast %cst_62 : f32 to vector<2x32xf32>
    %213 = arith.addf %212, %211 : vector<2x32xf32>
    %214 = arith.divf %212, %213 : vector<2x32xf32>
    %215 = vector.extract_strided_slice %208 {offsets = [0, 32], sizes = [2, 32], strides = [1, 1]} : vector<2x128xf32> to vector<2x32xf32>
    %216 = arith.negf %215 : vector<2x32xf32>
    %217 = math.exp %216 : vector<2x32xf32>
    %cst_63 = arith.constant 1.000000e+00 : f32
    %218 = vector.broadcast %cst_63 : f32 to vector<2x32xf32>
    %219 = arith.addf %218, %217 : vector<2x32xf32>
    %220 = arith.divf %218, %219 : vector<2x32xf32>
    %221 = vector.extract_strided_slice %208 {offsets = [0, 64], sizes = [2, 32], strides = [1, 1]} : vector<2x128xf32> to vector<2x32xf32>
    %222 = math.tanh %221 : vector<2x32xf32>
    %223 = vector.extract_strided_slice %208 {offsets = [0, 96], sizes = [2, 32], strides = [1, 1]} : vector<2x128xf32> to vector<2x32xf32>
    %224 = arith.negf %223 : vector<2x32xf32>
    %225 = math.exp %224 : vector<2x32xf32>
    %cst_64 = arith.constant 1.000000e+00 : f32
    %226 = vector.broadcast %cst_64 : f32 to vector<2x32xf32>
    %227 = arith.addf %226, %225 : vector<2x32xf32>
    %228 = arith.divf %226, %227 : vector<2x32xf32>
    %229 = arith.mulf %220, %194 : vector<2x32xf32>
    %230 = arith.mulf %214, %222 : vector<2x32xf32>
    %231 = arith.addf %229, %230 : vector<2x32xf32>
    %232 = math.tanh %231 : vector<2x32xf32>
    %233 = arith.mulf %228, %232 : vector<2x32xf32>
    %234 = arith.index_cast %202 : i32 to index
    %c0_65 = arith.constant 0 : index
    %235 = vector.load %arg11[%234, %c0_65] : memref<18x32xf32, #tpu.memory_space<vmem>>, vector<2x32xf32>
    %236 = arith.addf %235, %233 : vector<2x32xf32>
    %237 = arith.index_cast %202 : i32 to index
    %c0_66 = arith.constant 0 : index
    %238 = vector.load %arg11[%237, %c0_66] : memref<18x32xf32, #tpu.memory_space<vmem>>, vector<2x32xf32>
    tpu.vector_store %arg11[%237, %c0_66], %236 {strides = array<i32>} : memref<18x32xf32, #tpu.memory_space<vmem>>, vector<2x32xf32>,
    %c6_i32 = arith.constant 6 : i32
    %c2_i32_67 = arith.constant 2 : i32
    %239 = arith.muli %c6_i32, %c2_i32_67 : i32
    %240 = arith.index_cast %239 : i32 to index
    %c0_68 = arith.constant 0 : index
    %241 = vector.load %arg10[%240, %c0_68] : memref<18x32xf32, #tpu.memory_space<vmem>>, vector<2x32xf32>
    %242 = tpu.concatenate %241, %233 in 1 : vector<2x32xf32>, vector<2x32xf32> -> vector<2x64xf32>
    %cst_69 = arith.constant dense<0.000000e+00> : vector<2x128xf32>
    %243 = tpu.matmul %242, %12, %cst_69 {dimension_numbers = #tpu.dot_dimension_numbers<[1], [0], [0], [1], [0, 0, 1, 1], [], []>} : vector<2x64xf32>, vector<64x128xf32>, vector<2x128xf32> -> vector<2x128xf32>
    %244 = vector.broadcast %13 : vector<1x128xf32> to vector<2x128xf32>
    %245 = arith.addf %243, %244 : vector<2x128xf32>
    %246 = vector.extract_strided_slice %245 {offsets = [0, 0], sizes = [2, 32], strides = [1, 1]} : vector<2x128xf32> to vector<2x32xf32>
    %247 = arith.negf %246 : vector<2x32xf32>
    %248 = math.exp %247 : vector<2x32xf32>
    %cst_70 = arith.constant 1.000000e+00 : f32
    %249 = vector.broadcast %cst_70 : f32 to vector<2x32xf32>
    %250 = arith.addf %249, %248 : vector<2x32xf32>
    %251 = arith.divf %249, %250 : vector<2x32xf32>
    %252 = vector.extract_strided_slice %245 {offsets = [0, 32], sizes = [2, 32], strides = [1, 1]} : vector<2x128xf32> to vector<2x32xf32>
    %253 = arith.negf %252 : vector<2x32xf32>
    %254 = math.exp %253 : vector<2x32xf32>
    %cst_71 = arith.constant 1.000000e+00 : f32
    %255 = vector.broadcast %cst_71 : f32 to vector<2x32xf32>
    %256 = arith.addf %255, %254 : vector<2x32xf32>
    %257 = arith.divf %255, %256 : vector<2x32xf32>
    %258 = vector.extract_strided_slice %245 {offsets = [0, 64], sizes = [2, 32], strides = [1, 1]} : vector<2x128xf32> to vector<2x32xf32>
    %259 = math.tanh %258 : vector<2x32xf32>
    %260 = vector.extract_strided_slice %245 {offsets = [0, 96], sizes = [2, 32], strides = [1, 1]} : vector<2x128xf32> to vector<2x32xf32>
    %261 = arith.negf %260 : vector<2x32xf32>
    %262 = math.exp %261 : vector<2x32xf32>
    %cst_72 = arith.constant 1.000000e+00 : f32
    %263 = vector.broadcast %cst_72 : f32 to vector<2x32xf32>
    %264 = arith.addf %263, %262 : vector<2x32xf32>
    %265 = arith.divf %263, %264 : vector<2x32xf32>
    %266 = arith.mulf %257, %231 : vector<2x32xf32>
    %267 = arith.mulf %251, %259 : vector<2x32xf32>
    %268 = arith.addf %266, %267 : vector<2x32xf32>
    %269 = math.tanh %268 : vector<2x32xf32>
    %270 = arith.mulf %265, %269 : vector<2x32xf32>
    %271 = arith.index_cast %239 : i32 to index
    %c0_73 = arith.constant 0 : index
    %272 = vector.load %arg11[%271, %c0_73] : memref<18x32xf32, #tpu.memory_space<vmem>>, vector<2x32xf32>
    %273 = arith.addf %272, %270 : vector<2x32xf32>
    %274 = arith.index_cast %239 : i32 to index
    %c0_74 = arith.constant 0 : index
    %275 = vector.load %arg11[%274, %c0_74] : memref<18x32xf32, #tpu.memory_space<vmem>>, vector<2x32xf32>
    tpu.vector_store %arg11[%274, %c0_74], %273 {strides = array<i32>} : memref<18x32xf32, #tpu.memory_space<vmem>>, vector<2x32xf32>,
    %c7_i32 = arith.constant 7 : i32
    %c2_i32_75 = arith.constant 2 : i32
    %276 = arith.muli %c7_i32, %c2_i32_75 : i32
    %277 = arith.index_cast %276 : i32 to index
    %c0_76 = arith.constant 0 : index
    %278 = vector.load %arg10[%277, %c0_76] : memref<18x32xf32, #tpu.memory_space<vmem>>, vector<2x32xf32>
    %279 = tpu.concatenate %278, %270 in 1 : vector<2x32xf32>, vector<2x32xf32> -> vector<2x64xf32>
    %cst_77 = arith.constant dense<0.000000e+00> : vector<2x128xf32>
    %280 = tpu.matmul %279, %12, %cst_77 {dimension_numbers = #tpu.dot_dimension_numbers<[1], [0], [0], [1], [0, 0, 1, 1], [], []>} : vector<2x64xf32>, vector<64x128xf32>, vector<2x128xf32> -> vector<2x128xf32>
    %281 = vector.broadcast %13 : vector<1x128xf32> to vector<2x128xf32>
    %282 = arith.addf %280, %281 : vector<2x128xf32>
    %283 = vector.extract_strided_slice %282 {offsets = [0, 0], sizes = [2, 32], strides = [1, 1]} : vector<2x128xf32> to vector<2x32xf32>
    %284 = arith.negf %283 : vector<2x32xf32>
    %285 = math.exp %284 : vector<2x32xf32>
    %cst_78 = arith.constant 1.000000e+00 : f32
    %286 = vector.broadcast %cst_78 : f32 to vector<2x32xf32>
    %287 = arith.addf %286, %285 : vector<2x32xf32>
    %288 = arith.divf %286, %287 : vector<2x32xf32>
    %289 = vector.extract_strided_slice %282 {offsets = [0, 32], sizes = [2, 32], strides = [1, 1]} : vector<2x128xf32> to vector<2x32xf32>
    %290 = arith.negf %289 : vector<2x32xf32>
    %291 = math.exp %290 : vector<2x32xf32>
    %cst_79 = arith.constant 1.000000e+00 : f32
    %292 = vector.broadcast %cst_79 : f32 to vector<2x32xf32>
    %293 = arith.addf %292, %291 : vector<2x32xf32>
    %294 = arith.divf %292, %293 : vector<2x32xf32>
    %295 = vector.extract_strided_slice %282 {offsets = [0, 64], sizes = [2, 32], strides = [1, 1]} : vector<2x128xf32> to vector<2x32xf32>
    %296 = math.tanh %295 : vector<2x32xf32>
    %297 = vector.extract_strided_slice %282 {offsets = [0, 96], sizes = [2, 32], strides = [1, 1]} : vector<2x128xf32> to vector<2x32xf32>
    %298 = arith.negf %297 : vector<2x32xf32>
    %299 = math.exp %298 : vector<2x32xf32>
    %cst_80 = arith.constant 1.000000e+00 : f32
    %300 = vector.broadcast %cst_80 : f32 to vector<2x32xf32>
    %301 = arith.addf %300, %299 : vector<2x32xf32>
    %302 = arith.divf %300, %301 : vector<2x32xf32>
    %303 = arith.mulf %294, %268 : vector<2x32xf32>
    %304 = arith.mulf %288, %296 : vector<2x32xf32>
    %305 = arith.addf %303, %304 : vector<2x32xf32>
    %306 = math.tanh %305 : vector<2x32xf32>
    %307 = arith.mulf %302, %306 : vector<2x32xf32>
    %308 = arith.index_cast %276 : i32 to index
    %c0_81 = arith.constant 0 : index
    %309 = vector.load %arg11[%308, %c0_81] : memref<18x32xf32, #tpu.memory_space<vmem>>, vector<2x32xf32>
    %310 = arith.addf %309, %307 : vector<2x32xf32>
    %311 = arith.index_cast %276 : i32 to index
    %c0_82 = arith.constant 0 : index
    %312 = vector.load %arg11[%311, %c0_82] : memref<18x32xf32, #tpu.memory_space<vmem>>, vector<2x32xf32>
    tpu.vector_store %arg11[%311, %c0_82], %310 {strides = array<i32>} : memref<18x32xf32, #tpu.memory_space<vmem>>, vector<2x32xf32>,
    %c8_i32 = arith.constant 8 : i32
    %c2_i32_83 = arith.constant 2 : i32
    %313 = arith.muli %c8_i32, %c2_i32_83 : i32
    %314 = arith.index_cast %313 : i32 to index
    %c0_84 = arith.constant 0 : index
    %315 = vector.load %arg10[%314, %c0_84] : memref<18x32xf32, #tpu.memory_space<vmem>>, vector<2x32xf32>
    %316 = tpu.concatenate %315, %307 in 1 : vector<2x32xf32>, vector<2x32xf32> -> vector<2x64xf32>
    %cst_85 = arith.constant dense<0.000000e+00> : vector<2x128xf32>
    %317 = tpu.matmul %316, %12, %cst_85 {dimension_numbers = #tpu.dot_dimension_numbers<[1], [0], [0], [1], [0, 0, 1, 1], [], []>} : vector<2x64xf32>, vector<64x128xf32>, vector<2x128xf32> -> vector<2x128xf32>
    %318 = vector.broadcast %13 : vector<1x128xf32> to vector<2x128xf32>
    %319 = arith.addf %317, %318 : vector<2x128xf32>
    %320 = vector.extract_strided_slice %319 {offsets = [0, 0], sizes = [2, 32], strides = [1, 1]} : vector<2x128xf32> to vector<2x32xf32>
    %321 = arith.negf %320 : vector<2x32xf32>
    %322 = math.exp %321 : vector<2x32xf32>
    %cst_86 = arith.constant 1.000000e+00 : f32
    %323 = vector.broadcast %cst_86 : f32 to vector<2x32xf32>
    %324 = arith.addf %323, %322 : vector<2x32xf32>
    %325 = arith.divf %323, %324 : vector<2x32xf32>
    %326 = vector.extract_strided_slice %319 {offsets = [0, 32], sizes = [2, 32], strides = [1, 1]} : vector<2x128xf32> to vector<2x32xf32>
    %327 = arith.negf %326 : vector<2x32xf32>
    %328 = math.exp %327 : vector<2x32xf32>
    %cst_87 = arith.constant 1.000000e+00 : f32
    %329 = vector.broadcast %cst_87 : f32 to vector<2x32xf32>
    %330 = arith.addf %329, %328 : vector<2x32xf32>
    %331 = arith.divf %329, %330 : vector<2x32xf32>
    %332 = vector.extract_strided_slice %319 {offsets = [0, 64], sizes = [2, 32], strides = [1, 1]} : vector<2x128xf32> to vector<2x32xf32>
    %333 = math.tanh %332 : vector<2x32xf32>
    %334 = vector.extract_strided_slice %319 {offsets = [0, 96], sizes = [2, 32], strides = [1, 1]} : vector<2x128xf32> to vector<2x32xf32>
    %335 = arith.negf %334 : vector<2x32xf32>
    %336 = math.exp %335 : vector<2x32xf32>
    %cst_88 = arith.constant 1.000000e+00 : f32
    %337 = vector.broadcast %cst_88 : f32 to vector<2x32xf32>
    %338 = arith.addf %337, %336 : vector<2x32xf32>
    %339 = arith.divf %337, %338 : vector<2x32xf32>
    %340 = arith.mulf %331, %305 : vector<2x32xf32>
    %341 = arith.mulf %325, %333 : vector<2x32xf32>
    %342 = arith.addf %340, %341 : vector<2x32xf32>
    %343 = math.tanh %342 : vector<2x32xf32>
    %344 = arith.mulf %339, %343 : vector<2x32xf32>
    %345 = arith.index_cast %313 : i32 to index
    %c0_89 = arith.constant 0 : index
    %346 = vector.load %arg11[%345, %c0_89] : memref<18x32xf32, #tpu.memory_space<vmem>>, vector<2x32xf32>
    %347 = arith.addf %346, %344 : vector<2x32xf32>
    %348 = arith.index_cast %313 : i32 to index
    %c0_90 = arith.constant 0 : index
    %349 = vector.load %arg11[%348, %c0_90] : memref<18x32xf32, #tpu.memory_space<vmem>>, vector<2x32xf32>
    tpu.vector_store %arg11[%348, %c0_90], %347 {strides = array<i32>} : memref<18x32xf32, #tpu.memory_space<vmem>>, vector<2x32xf32>,
    %c9_i32 = arith.constant 9 : i32
    %c0_i32_91 = arith.constant 0 : i32
    %c2_i32_92 = arith.constant 2 : i32
    %350 = arith.muli %c0_i32_91, %c2_i32_92 : i32
    %351 = arith.index_cast %350 : i32 to index
    %c0_93 = arith.constant 0 : index
    %352 = vector.load %arg11[%351, %c0_93] : memref<18x32xf32, #tpu.memory_space<vmem>>, vector<2x32xf32>
    %353 = tpu.concatenate %352, %16 in 1 : vector<2x32xf32>, vector<2x32xf32> -> vector<2x64xf32>
    %cst_94 = arith.constant dense<0.000000e+00> : vector<2x128xf32>
    %354 = tpu.matmul %353, %14, %cst_94 {dimension_numbers = #tpu.dot_dimension_numbers<[1], [0], [0], [1], [0, 0, 1, 1], [], []>} : vector<2x64xf32>, vector<64x128xf32>, vector<2x128xf32> -> vector<2x128xf32>
    %355 = vector.broadcast %15 : vector<1x128xf32> to vector<2x128xf32>
    %356 = arith.addf %354, %355 : vector<2x128xf32>
    %357 = vector.extract_strided_slice %356 {offsets = [0, 0], sizes = [2, 32], strides = [1, 1]} : vector<2x128xf32> to vector<2x32xf32>
    %358 = arith.negf %357 : vector<2x32xf32>
    %359 = math.exp %358 : vector<2x32xf32>
    %cst_95 = arith.constant 1.000000e+00 : f32
    %360 = vector.broadcast %cst_95 : f32 to vector<2x32xf32>
    %361 = arith.addf %360, %359 : vector<2x32xf32>
    %362 = arith.divf %360, %361 : vector<2x32xf32>
    %363 = vector.extract_strided_slice %356 {offsets = [0, 32], sizes = [2, 32], strides = [1, 1]} : vector<2x128xf32> to vector<2x32xf32>
    %364 = arith.negf %363 : vector<2x32xf32>
    %365 = math.exp %364 : vector<2x32xf32>
    %cst_96 = arith.constant 1.000000e+00 : f32
    %366 = vector.broadcast %cst_96 : f32 to vector<2x32xf32>
    %367 = arith.addf %366, %365 : vector<2x32xf32>
    %368 = arith.divf %366, %367 : vector<2x32xf32>
    %369 = vector.extract_strided_slice %356 {offsets = [0, 64], sizes = [2, 32], strides = [1, 1]} : vector<2x128xf32> to vector<2x32xf32>
    %370 = math.tanh %369 : vector<2x32xf32>
    %371 = vector.extract_strided_slice %356 {offsets = [0, 96], sizes = [2, 32], strides = [1, 1]} : vector<2x128xf32> to vector<2x32xf32>
    %372 = arith.negf %371 : vector<2x32xf32>
    %373 = math.exp %372 : vector<2x32xf32>
    %cst_97 = arith.constant 1.000000e+00 : f32
    %374 = vector.broadcast %cst_97 : f32 to vector<2x32xf32>
    %375 = arith.addf %374, %373 : vector<2x32xf32>
    %376 = arith.divf %374, %375 : vector<2x32xf32>
    %377 = arith.mulf %368, %16 : vector<2x32xf32>
    %378 = arith.mulf %362, %370 : vector<2x32xf32>
    %379 = arith.addf %377, %378 : vector<2x32xf32>
    %380 = math.tanh %379 : vector<2x32xf32>
    %381 = arith.mulf %376, %380 : vector<2x32xf32>
    %382 = arith.addf %352, %381 : vector<2x32xf32>
    %383 = arith.index_cast %350 : i32 to index
    %c0_98 = arith.constant 0 : index
    %384 = vector.load %arg11[%383, %c0_98] : memref<18x32xf32, #tpu.memory_space<vmem>>, vector<2x32xf32>
    tpu.vector_store %arg11[%383, %c0_98], %382 {strides = array<i32>} : memref<18x32xf32, #tpu.memory_space<vmem>>, vector<2x32xf32>,
    %c1_i32_99 = arith.constant 1 : i32
    %c2_i32_100 = arith.constant 2 : i32
    %385 = arith.muli %c1_i32_99, %c2_i32_100 : i32
    %386 = arith.index_cast %385 : i32 to index
    %c0_101 = arith.constant 0 : index
    %387 = vector.load %arg11[%386, %c0_101] : memref<18x32xf32, #tpu.memory_space<vmem>>, vector<2x32xf32>
    %388 = tpu.concatenate %387, %381 in 1 : vector<2x32xf32>, vector<2x32xf32> -> vector<2x64xf32>
    %cst_102 = arith.constant dense<0.000000e+00> : vector<2x128xf32>
    %389 = tpu.matmul %388, %14, %cst_102 {dimension_numbers = #tpu.dot_dimension_numbers<[1], [0], [0], [1], [0, 0, 1, 1], [], []>} : vector<2x64xf32>, vector<64x128xf32>, vector<2x128xf32> -> vector<2x128xf32>
    %390 = vector.broadcast %15 : vector<1x128xf32> to vector<2x128xf32>
    %391 = arith.addf %389, %390 : vector<2x128xf32>
    %392 = vector.extract_strided_slice %391 {offsets = [0, 0], sizes = [2, 32], strides = [1, 1]} : vector<2x128xf32> to vector<2x32xf32>
    %393 = arith.negf %392 : vector<2x32xf32>
    %394 = math.exp %393 : vector<2x32xf32>
    %cst_103 = arith.constant 1.000000e+00 : f32
    %395 = vector.broadcast %cst_103 : f32 to vector<2x32xf32>
    %396 = arith.addf %395, %394 : vector<2x32xf32>
    %397 = arith.divf %395, %396 : vector<2x32xf32>
    %398 = vector.extract_strided_slice %391 {offsets = [0, 32], sizes = [2, 32], strides = [1, 1]} : vector<2x128xf32> to vector<2x32xf32>
    %399 = arith.negf %398 : vector<2x32xf32>
    %400 = math.exp %399 : vector<2x32xf32>
    %cst_104 = arith.constant 1.000000e+00 : f32
    %401 = vector.broadcast %cst_104 : f32 to vector<2x32xf32>
    %402 = arith.addf %401, %400 : vector<2x32xf32>
    %403 = arith.divf %401, %402 : vector<2x32xf32>
    %404 = vector.extract_strided_slice %391 {offsets = [0, 64], sizes = [2, 32], strides = [1, 1]} : vector<2x128xf32> to vector<2x32xf32>
    %405 = math.tanh %404 : vector<2x32xf32>
    %406 = vector.extract_strided_slice %391 {offsets = [0, 96], sizes = [2, 32], strides = [1, 1]} : vector<2x128xf32> to vector<2x32xf32>
    %407 = arith.negf %406 : vector<2x32xf32>
    %408 = math.exp %407 : vector<2x32xf32>
    %cst_105 = arith.constant 1.000000e+00 : f32
    %409 = vector.broadcast %cst_105 : f32 to vector<2x32xf32>
    %410 = arith.addf %409, %408 : vector<2x32xf32>
    %411 = arith.divf %409, %410 : vector<2x32xf32>
    %412 = arith.mulf %403, %379 : vector<2x32xf32>
    %413 = arith.mulf %397, %405 : vector<2x32xf32>
    %414 = arith.addf %412, %413 : vector<2x32xf32>
    %415 = math.tanh %414 : vector<2x32xf32>
    %416 = arith.mulf %411, %415 : vector<2x32xf32>
    %417 = arith.addf %387, %416 : vector<2x32xf32>
    %418 = arith.index_cast %385 : i32 to index
    %c0_106 = arith.constant 0 : index
    %419 = vector.load %arg11[%418, %c0_106] : memref<18x32xf32, #tpu.memory_space<vmem>>, vector<2x32xf32>
    tpu.vector_store %arg11[%418, %c0_106], %417 {strides = array<i32>} : memref<18x32xf32, #tpu.memory_space<vmem>>, vector<2x32xf32>,
    %c2_i32_107 = arith.constant 2 : i32
    %c2_i32_108 = arith.constant 2 : i32
    %420 = arith.muli %c2_i32_107, %c2_i32_108 : i32
    %421 = arith.index_cast %420 : i32 to index
    %c0_109 = arith.constant 0 : index
    %422 = vector.load %arg11[%421, %c0_109] : memref<18x32xf32, #tpu.memory_space<vmem>>, vector<2x32xf32>
    %423 = tpu.concatenate %422, %416 in 1 : vector<2x32xf32>, vector<2x32xf32> -> vector<2x64xf32>
    %cst_110 = arith.constant dense<0.000000e+00> : vector<2x128xf32>
    %424 = tpu.matmul %423, %14, %cst_110 {dimension_numbers = #tpu.dot_dimension_numbers<[1], [0], [0], [1], [0, 0, 1, 1], [], []>} : vector<2x64xf32>, vector<64x128xf32>, vector<2x128xf32> -> vector<2x128xf32>
    %425 = vector.broadcast %15 : vector<1x128xf32> to vector<2x128xf32>
    %426 = arith.addf %424, %425 : vector<2x128xf32>
    %427 = vector.extract_strided_slice %426 {offsets = [0, 0], sizes = [2, 32], strides = [1, 1]} : vector<2x128xf32> to vector<2x32xf32>
    %428 = arith.negf %427 : vector<2x32xf32>
    %429 = math.exp %428 : vector<2x32xf32>
    %cst_111 = arith.constant 1.000000e+00 : f32
    %430 = vector.broadcast %cst_111 : f32 to vector<2x32xf32>
    %431 = arith.addf %430, %429 : vector<2x32xf32>
    %432 = arith.divf %430, %431 : vector<2x32xf32>
    %433 = vector.extract_strided_slice %426 {offsets = [0, 32], sizes = [2, 32], strides = [1, 1]} : vector<2x128xf32> to vector<2x32xf32>
    %434 = arith.negf %433 : vector<2x32xf32>
    %435 = math.exp %434 : vector<2x32xf32>
    %cst_112 = arith.constant 1.000000e+00 : f32
    %436 = vector.broadcast %cst_112 : f32 to vector<2x32xf32>
    %437 = arith.addf %436, %435 : vector<2x32xf32>
    %438 = arith.divf %436, %437 : vector<2x32xf32>
    %439 = vector.extract_strided_slice %426 {offsets = [0, 64], sizes = [2, 32], strides = [1, 1]} : vector<2x128xf32> to vector<2x32xf32>
    %440 = math.tanh %439 : vector<2x32xf32>
    %441 = vector.extract_strided_slice %426 {offsets = [0, 96], sizes = [2, 32], strides = [1, 1]} : vector<2x128xf32> to vector<2x32xf32>
    %442 = arith.negf %441 : vector<2x32xf32>
    %443 = math.exp %442 : vector<2x32xf32>
    %cst_113 = arith.constant 1.000000e+00 : f32
    %444 = vector.broadcast %cst_113 : f32 to vector<2x32xf32>
    %445 = arith.addf %444, %443 : vector<2x32xf32>
    %446 = arith.divf %444, %445 : vector<2x32xf32>
    %447 = arith.mulf %438, %414 : vector<2x32xf32>
    %448 = arith.mulf %432, %440 : vector<2x32xf32>
    %449 = arith.addf %447, %448 : vector<2x32xf32>
    %450 = math.tanh %449 : vector<2x32xf32>
    %451 = arith.mulf %446, %450 : vector<2x32xf32>
    %452 = arith.addf %422, %451 : vector<2x32xf32>
    %453 = arith.index_cast %420 : i32 to index
    %c0_114 = arith.constant 0 : index
    %454 = vector.load %arg11[%453, %c0_114] : memref<18x32xf32, #tpu.memory_space<vmem>>, vector<2x32xf32>
    tpu.vector_store %arg11[%453, %c0_114], %452 {strides = array<i32>} : memref<18x32xf32, #tpu.memory_space<vmem>>, vector<2x32xf32>,
    %c3_i32_115 = arith.constant 3 : i32
    %c2_i32_116 = arith.constant 2 : i32
    %455 = arith.muli %c3_i32_115, %c2_i32_116 : i32
    %456 = arith.index_cast %455 : i32 to index
    %c0_117 = arith.constant 0 : index
    %457 = vector.load %arg11[%456, %c0_117] : memref<18x32xf32, #tpu.memory_space<vmem>>, vector<2x32xf32>
    %458 = tpu.concatenate %457, %451 in 1 : vector<2x32xf32>, vector<2x32xf32> -> vector<2x64xf32>
    %cst_118 = arith.constant dense<0.000000e+00> : vector<2x128xf32>
    %459 = tpu.matmul %458, %14, %cst_118 {dimension_numbers = #tpu.dot_dimension_numbers<[1], [0], [0], [1], [0, 0, 1, 1], [], []>} : vector<2x64xf32>, vector<64x128xf32>, vector<2x128xf32> -> vector<2x128xf32>
    %460 = vector.broadcast %15 : vector<1x128xf32> to vector<2x128xf32>
    %461 = arith.addf %459, %460 : vector<2x128xf32>
    %462 = vector.extract_strided_slice %461 {offsets = [0, 0], sizes = [2, 32], strides = [1, 1]} : vector<2x128xf32> to vector<2x32xf32>
    %463 = arith.negf %462 : vector<2x32xf32>
    %464 = math.exp %463 : vector<2x32xf32>
    %cst_119 = arith.constant 1.000000e+00 : f32
    %465 = vector.broadcast %cst_119 : f32 to vector<2x32xf32>
    %466 = arith.addf %465, %464 : vector<2x32xf32>
    %467 = arith.divf %465, %466 : vector<2x32xf32>
    %468 = vector.extract_strided_slice %461 {offsets = [0, 32], sizes = [2, 32], strides = [1, 1]} : vector<2x128xf32> to vector<2x32xf32>
    %469 = arith.negf %468 : vector<2x32xf32>
    %470 = math.exp %469 : vector<2x32xf32>
    %cst_120 = arith.constant 1.000000e+00 : f32
    %471 = vector.broadcast %cst_120 : f32 to vector<2x32xf32>
    %472 = arith.addf %471, %470 : vector<2x32xf32>
    %473 = arith.divf %471, %472 : vector<2x32xf32>
    %474 = vector.extract_strided_slice %461 {offsets = [0, 64], sizes = [2, 32], strides = [1, 1]} : vector<2x128xf32> to vector<2x32xf32>
    %475 = math.tanh %474 : vector<2x32xf32>
    %476 = vector.extract_strided_slice %461 {offsets = [0, 96], sizes = [2, 32], strides = [1, 1]} : vector<2x128xf32> to vector<2x32xf32>
    %477 = arith.negf %476 : vector<2x32xf32>
    %478 = math.exp %477 : vector<2x32xf32>
    %cst_121 = arith.constant 1.000000e+00 : f32
    %479 = vector.broadcast %cst_121 : f32 to vector<2x32xf32>
    %480 = arith.addf %479, %478 : vector<2x32xf32>
    %481 = arith.divf %479, %480 : vector<2x32xf32>
    %482 = arith.mulf %473, %449 : vector<2x32xf32>
    %483 = arith.mulf %467, %475 : vector<2x32xf32>
    %484 = arith.addf %482, %483 : vector<2x32xf32>
    %485 = math.tanh %484 : vector<2x32xf32>
    %486 = arith.mulf %481, %485 : vector<2x32xf32>
    %487 = arith.addf %457, %486 : vector<2x32xf32>
    %488 = arith.index_cast %455 : i32 to index
    %c0_122 = arith.constant 0 : index
    %489 = vector.load %arg11[%488, %c0_122] : memref<18x32xf32, #tpu.memory_space<vmem>>, vector<2x32xf32>
    tpu.vector_store %arg11[%488, %c0_122], %487 {strides = array<i32>} : memref<18x32xf32, #tpu.memory_space<vmem>>, vector<2x32xf32>,
    %c4_i32_123 = arith.constant 4 : i32
    %c2_i32_124 = arith.constant 2 : i32
    %490 = arith.muli %c4_i32_123, %c2_i32_124 : i32
    %491 = arith.index_cast %490 : i32 to index
    %c0_125 = arith.constant 0 : index
    %492 = vector.load %arg11[%491, %c0_125] : memref<18x32xf32, #tpu.memory_space<vmem>>, vector<2x32xf32>
    %493 = tpu.concatenate %492, %486 in 1 : vector<2x32xf32>, vector<2x32xf32> -> vector<2x64xf32>
    %cst_126 = arith.constant dense<0.000000e+00> : vector<2x128xf32>
    %494 = tpu.matmul %493, %14, %cst_126 {dimension_numbers = #tpu.dot_dimension_numbers<[1], [0], [0], [1], [0, 0, 1, 1], [], []>} : vector<2x64xf32>, vector<64x128xf32>, vector<2x128xf32> -> vector<2x128xf32>
    %495 = vector.broadcast %15 : vector<1x128xf32> to vector<2x128xf32>
    %496 = arith.addf %494, %495 : vector<2x128xf32>
    %497 = vector.extract_strided_slice %496 {offsets = [0, 0], sizes = [2, 32], strides = [1, 1]} : vector<2x128xf32> to vector<2x32xf32>
    %498 = arith.negf %497 : vector<2x32xf32>
    %499 = math.exp %498 : vector<2x32xf32>
    %cst_127 = arith.constant 1.000000e+00 : f32
    %500 = vector.broadcast %cst_127 : f32 to vector<2x32xf32>
    %501 = arith.addf %500, %499 : vector<2x32xf32>
    %502 = arith.divf %500, %501 : vector<2x32xf32>
    %503 = vector.extract_strided_slice %496 {offsets = [0, 32], sizes = [2, 32], strides = [1, 1]} : vector<2x128xf32> to vector<2x32xf32>
    %504 = arith.negf %503 : vector<2x32xf32>
    %505 = math.exp %504 : vector<2x32xf32>
    %cst_128 = arith.constant 1.000000e+00 : f32
    %506 = vector.broadcast %cst_128 : f32 to vector<2x32xf32>
    %507 = arith.addf %506, %505 : vector<2x32xf32>
    %508 = arith.divf %506, %507 : vector<2x32xf32>
    %509 = vector.extract_strided_slice %496 {offsets = [0, 64], sizes = [2, 32], strides = [1, 1]} : vector<2x128xf32> to vector<2x32xf32>
    %510 = math.tanh %509 : vector<2x32xf32>
    %511 = vector.extract_strided_slice %496 {offsets = [0, 96], sizes = [2, 32], strides = [1, 1]} : vector<2x128xf32> to vector<2x32xf32>
    %512 = arith.negf %511 : vector<2x32xf32>
    %513 = math.exp %512 : vector<2x32xf32>
    %cst_129 = arith.constant 1.000000e+00 : f32
    %514 = vector.broadcast %cst_129 : f32 to vector<2x32xf32>
    %515 = arith.addf %514, %513 : vector<2x32xf32>
    %516 = arith.divf %514, %515 : vector<2x32xf32>
    %517 = arith.mulf %508, %484 : vector<2x32xf32>
    %518 = arith.mulf %502, %510 : vector<2x32xf32>
    %519 = arith.addf %517, %518 : vector<2x32xf32>
    %520 = math.tanh %519 : vector<2x32xf32>
    %521 = arith.mulf %516, %520 : vector<2x32xf32>
    %522 = arith.addf %492, %521 : vector<2x32xf32>
    %523 = arith.index_cast %490 : i32 to index
    %c0_130 = arith.constant 0 : index
    %524 = vector.load %arg11[%523, %c0_130] : memref<18x32xf32, #tpu.memory_space<vmem>>, vector<2x32xf32>
    tpu.vector_store %arg11[%523, %c0_130], %522 {strides = array<i32>} : memref<18x32xf32, #tpu.memory_space<vmem>>, vector<2x32xf32>,
    %c5_i32_131 = arith.constant 5 : i32
    %c2_i32_132 = arith.constant 2 : i32
    %525 = arith.muli %c5_i32_131, %c2_i32_132 : i32
    %526 = arith.index_cast %525 : i32 to index
    %c0_133 = arith.constant 0 : index
    %527 = vector.load %arg11[%526, %c0_133] : memref<18x32xf32, #tpu.memory_space<vmem>>, vector<2x32xf32>
    %528 = tpu.concatenate %527, %521 in 1 : vector<2x32xf32>, vector<2x32xf32> -> vector<2x64xf32>
    %cst_134 = arith.constant dense<0.000000e+00> : vector<2x128xf32>
    %529 = tpu.matmul %528, %14, %cst_134 {dimension_numbers = #tpu.dot_dimension_numbers<[1], [0], [0], [1], [0, 0, 1, 1], [], []>} : vector<2x64xf32>, vector<64x128xf32>, vector<2x128xf32> -> vector<2x128xf32>
    %530 = vector.broadcast %15 : vector<1x128xf32> to vector<2x128xf32>
    %531 = arith.addf %529, %530 : vector<2x128xf32>
    %532 = vector.extract_strided_slice %531 {offsets = [0, 0], sizes = [2, 32], strides = [1, 1]} : vector<2x128xf32> to vector<2x32xf32>
    %533 = arith.negf %532 : vector<2x32xf32>
    %534 = math.exp %533 : vector<2x32xf32>
    %cst_135 = arith.constant 1.000000e+00 : f32
    %535 = vector.broadcast %cst_135 : f32 to vector<2x32xf32>
    %536 = arith.addf %535, %534 : vector<2x32xf32>
    %537 = arith.divf %535, %536 : vector<2x32xf32>
    %538 = vector.extract_strided_slice %531 {offsets = [0, 32], sizes = [2, 32], strides = [1, 1]} : vector<2x128xf32> to vector<2x32xf32>
    %539 = arith.negf %538 : vector<2x32xf32>
    %540 = math.exp %539 : vector<2x32xf32>
    %cst_136 = arith.constant 1.000000e+00 : f32
    %541 = vector.broadcast %cst_136 : f32 to vector<2x32xf32>
    %542 = arith.addf %541, %540 : vector<2x32xf32>
    %543 = arith.divf %541, %542 : vector<2x32xf32>
    %544 = vector.extract_strided_slice %531 {offsets = [0, 64], sizes = [2, 32], strides = [1, 1]} : vector<2x128xf32> to vector<2x32xf32>
    %545 = math.tanh %544 : vector<2x32xf32>
    %546 = vector.extract_strided_slice %531 {offsets = [0, 96], sizes = [2, 32], strides = [1, 1]} : vector<2x128xf32> to vector<2x32xf32>
    %547 = arith.negf %546 : vector<2x32xf32>
    %548 = math.exp %547 : vector<2x32xf32>
    %cst_137 = arith.constant 1.000000e+00 : f32
    %549 = vector.broadcast %cst_137 : f32 to vector<2x32xf32>
    %550 = arith.addf %549, %548 : vector<2x32xf32>
    %551 = arith.divf %549, %550 : vector<2x32xf32>
    %552 = arith.mulf %543, %519 : vector<2x32xf32>
    %553 = arith.mulf %537, %545 : vector<2x32xf32>
    %554 = arith.addf %552, %553 : vector<2x32xf32>
    %555 = math.tanh %554 : vector<2x32xf32>
    %556 = arith.mulf %551, %555 : vector<2x32xf32>
    %557 = arith.addf %527, %556 : vector<2x32xf32>
    %558 = arith.index_cast %525 : i32 to index
    %c0_138 = arith.constant 0 : index
    %559 = vector.load %arg11[%558, %c0_138] : memref<18x32xf32, #tpu.memory_space<vmem>>, vector<2x32xf32>
    tpu.vector_store %arg11[%558, %c0_138], %557 {strides = array<i32>} : memref<18x32xf32, #tpu.memory_space<vmem>>, vector<2x32xf32>,
    %c6_i32_139 = arith.constant 6 : i32
    %c2_i32_140 = arith.constant 2 : i32
    %560 = arith.muli %c6_i32_139, %c2_i32_140 : i32
    %561 = arith.index_cast %560 : i32 to index
    %c0_141 = arith.constant 0 : index
    %562 = vector.load %arg11[%561, %c0_141] : memref<18x32xf32, #tpu.memory_space<vmem>>, vector<2x32xf32>
    %563 = tpu.concatenate %562, %556 in 1 : vector<2x32xf32>, vector<2x32xf32> -> vector<2x64xf32>
    %cst_142 = arith.constant dense<0.000000e+00> : vector<2x128xf32>
    %564 = tpu.matmul %563, %14, %cst_142 {dimension_numbers = #tpu.dot_dimension_numbers<[1], [0], [0], [1], [0, 0, 1, 1], [], []>} : vector<2x64xf32>, vector<64x128xf32>, vector<2x128xf32> -> vector<2x128xf32>
    %565 = vector.broadcast %15 : vector<1x128xf32> to vector<2x128xf32>
    %566 = arith.addf %564, %565 : vector<2x128xf32>
    %567 = vector.extract_strided_slice %566 {offsets = [0, 0], sizes = [2, 32], strides = [1, 1]} : vector<2x128xf32> to vector<2x32xf32>
    %568 = arith.negf %567 : vector<2x32xf32>
    %569 = math.exp %568 : vector<2x32xf32>
    %cst_143 = arith.constant 1.000000e+00 : f32
    %570 = vector.broadcast %cst_143 : f32 to vector<2x32xf32>
    %571 = arith.addf %570, %569 : vector<2x32xf32>
    %572 = arith.divf %570, %571 : vector<2x32xf32>
    %573 = vector.extract_strided_slice %566 {offsets = [0, 32], sizes = [2, 32], strides = [1, 1]} : vector<2x128xf32> to vector<2x32xf32>
    %574 = arith.negf %573 : vector<2x32xf32>
    %575 = math.exp %574 : vector<2x32xf32>
    %cst_144 = arith.constant 1.000000e+00 : f32
    %576 = vector.broadcast %cst_144 : f32 to vector<2x32xf32>
    %577 = arith.addf %576, %575 : vector<2x32xf32>
    %578 = arith.divf %576, %577 : vector<2x32xf32>
    %579 = vector.extract_strided_slice %566 {offsets = [0, 64], sizes = [2, 32], strides = [1, 1]} : vector<2x128xf32> to vector<2x32xf32>
    %580 = math.tanh %579 : vector<2x32xf32>
    %581 = vector.extract_strided_slice %566 {offsets = [0, 96], sizes = [2, 32], strides = [1, 1]} : vector<2x128xf32> to vector<2x32xf32>
    %582 = arith.negf %581 : vector<2x32xf32>
    %583 = math.exp %582 : vector<2x32xf32>
    %cst_145 = arith.constant 1.000000e+00 : f32
    %584 = vector.broadcast %cst_145 : f32 to vector<2x32xf32>
    %585 = arith.addf %584, %583 : vector<2x32xf32>
    %586 = arith.divf %584, %585 : vector<2x32xf32>
    %587 = arith.mulf %578, %554 : vector<2x32xf32>
    %588 = arith.mulf %572, %580 : vector<2x32xf32>
    %589 = arith.addf %587, %588 : vector<2x32xf32>
    %590 = math.tanh %589 : vector<2x32xf32>
    %591 = arith.mulf %586, %590 : vector<2x32xf32>
    %592 = arith.addf %562, %591 : vector<2x32xf32>
    %593 = arith.index_cast %560 : i32 to index
    %c0_146 = arith.constant 0 : index
    %594 = vector.load %arg11[%593, %c0_146] : memref<18x32xf32, #tpu.memory_space<vmem>>, vector<2x32xf32>
    tpu.vector_store %arg11[%593, %c0_146], %592 {strides = array<i32>} : memref<18x32xf32, #tpu.memory_space<vmem>>, vector<2x32xf32>,
    %c7_i32_147 = arith.constant 7 : i32
    %c2_i32_148 = arith.constant 2 : i32
    %595 = arith.muli %c7_i32_147, %c2_i32_148 : i32
    %596 = arith.index_cast %595 : i32 to index
    %c0_149 = arith.constant 0 : index
    %597 = vector.load %arg11[%596, %c0_149] : memref<18x32xf32, #tpu.memory_space<vmem>>, vector<2x32xf32>
    %598 = tpu.concatenate %597, %591 in 1 : vector<2x32xf32>, vector<2x32xf32> -> vector<2x64xf32>
    %cst_150 = arith.constant dense<0.000000e+00> : vector<2x128xf32>
    %599 = tpu.matmul %598, %14, %cst_150 {dimension_numbers = #tpu.dot_dimension_numbers<[1], [0], [0], [1], [0, 0, 1, 1], [], []>} : vector<2x64xf32>, vector<64x128xf32>, vector<2x128xf32> -> vector<2x128xf32>
    %600 = vector.broadcast %15 : vector<1x128xf32> to vector<2x128xf32>
    %601 = arith.addf %599, %600 : vector<2x128xf32>
    %602 = vector.extract_strided_slice %601 {offsets = [0, 0], sizes = [2, 32], strides = [1, 1]} : vector<2x128xf32> to vector<2x32xf32>
    %603 = arith.negf %602 : vector<2x32xf32>
    %604 = math.exp %603 : vector<2x32xf32>
    %cst_151 = arith.constant 1.000000e+00 : f32
    %605 = vector.broadcast %cst_151 : f32 to vector<2x32xf32>
    %606 = arith.addf %605, %604 : vector<2x32xf32>
    %607 = arith.divf %605, %606 : vector<2x32xf32>
    %608 = vector.extract_strided_slice %601 {offsets = [0, 32], sizes = [2, 32], strides = [1, 1]} : vector<2x128xf32> to vector<2x32xf32>
    %609 = arith.negf %608 : vector<2x32xf32>
    %610 = math.exp %609 : vector<2x32xf32>
    %cst_152 = arith.constant 1.000000e+00 : f32
    %611 = vector.broadcast %cst_152 : f32 to vector<2x32xf32>
    %612 = arith.addf %611, %610 : vector<2x32xf32>
    %613 = arith.divf %611, %612 : vector<2x32xf32>
    %614 = vector.extract_strided_slice %601 {offsets = [0, 64], sizes = [2, 32], strides = [1, 1]} : vector<2x128xf32> to vector<2x32xf32>
    %615 = math.tanh %614 : vector<2x32xf32>
    %616 = vector.extract_strided_slice %601 {offsets = [0, 96], sizes = [2, 32], strides = [1, 1]} : vector<2x128xf32> to vector<2x32xf32>
    %617 = arith.negf %616 : vector<2x32xf32>
    %618 = math.exp %617 : vector<2x32xf32>
    %cst_153 = arith.constant 1.000000e+00 : f32
    %619 = vector.broadcast %cst_153 : f32 to vector<2x32xf32>
    %620 = arith.addf %619, %618 : vector<2x32xf32>
    %621 = arith.divf %619, %620 : vector<2x32xf32>
    %622 = arith.mulf %613, %589 : vector<2x32xf32>
    %623 = arith.mulf %607, %615 : vector<2x32xf32>
    %624 = arith.addf %622, %623 : vector<2x32xf32>
    %625 = math.tanh %624 : vector<2x32xf32>
    %626 = arith.mulf %621, %625 : vector<2x32xf32>
    %627 = arith.addf %597, %626 : vector<2x32xf32>
    %628 = arith.index_cast %595 : i32 to index
    %c0_154 = arith.constant 0 : index
    %629 = vector.load %arg11[%628, %c0_154] : memref<18x32xf32, #tpu.memory_space<vmem>>, vector<2x32xf32>
    tpu.vector_store %arg11[%628, %c0_154], %627 {strides = array<i32>} : memref<18x32xf32, #tpu.memory_space<vmem>>, vector<2x32xf32>,
    %c8_i32_155 = arith.constant 8 : i32
    %c2_i32_156 = arith.constant 2 : i32
    %630 = arith.muli %c8_i32_155, %c2_i32_156 : i32
    %631 = arith.index_cast %630 : i32 to index
    %c0_157 = arith.constant 0 : index
    %632 = vector.load %arg11[%631, %c0_157] : memref<18x32xf32, #tpu.memory_space<vmem>>, vector<2x32xf32>
    %633 = tpu.concatenate %632, %626 in 1 : vector<2x32xf32>, vector<2x32xf32> -> vector<2x64xf32>
    %cst_158 = arith.constant dense<0.000000e+00> : vector<2x128xf32>
    %634 = tpu.matmul %633, %14, %cst_158 {dimension_numbers = #tpu.dot_dimension_numbers<[1], [0], [0], [1], [0, 0, 1, 1], [], []>} : vector<2x64xf32>, vector<64x128xf32>, vector<2x128xf32> -> vector<2x128xf32>
    %635 = vector.broadcast %15 : vector<1x128xf32> to vector<2x128xf32>
    %636 = arith.addf %634, %635 : vector<2x128xf32>
    %637 = vector.extract_strided_slice %636 {offsets = [0, 0], sizes = [2, 32], strides = [1, 1]} : vector<2x128xf32> to vector<2x32xf32>
    %638 = arith.negf %637 : vector<2x32xf32>
    %639 = math.exp %638 : vector<2x32xf32>
    %cst_159 = arith.constant 1.000000e+00 : f32
    %640 = vector.broadcast %cst_159 : f32 to vector<2x32xf32>
    %641 = arith.addf %640, %639 : vector<2x32xf32>
    %642 = arith.divf %640, %641 : vector<2x32xf32>
    %643 = vector.extract_strided_slice %636 {offsets = [0, 32], sizes = [2, 32], strides = [1, 1]} : vector<2x128xf32> to vector<2x32xf32>
    %644 = arith.negf %643 : vector<2x32xf32>
    %645 = math.exp %644 : vector<2x32xf32>
    %cst_160 = arith.constant 1.000000e+00 : f32
    %646 = vector.broadcast %cst_160 : f32 to vector<2x32xf32>
    %647 = arith.addf %646, %645 : vector<2x32xf32>
    %648 = arith.divf %646, %647 : vector<2x32xf32>
    %649 = vector.extract_strided_slice %636 {offsets = [0, 64], sizes = [2, 32], strides = [1, 1]} : vector<2x128xf32> to vector<2x32xf32>
    %650 = math.tanh %649 : vector<2x32xf32>
    %651 = vector.extract_strided_slice %636 {offsets = [0, 96], sizes = [2, 32], strides = [1, 1]} : vector<2x128xf32> to vector<2x32xf32>
    %652 = arith.negf %651 : vector<2x32xf32>
    %653 = math.exp %652 : vector<2x32xf32>
    %cst_161 = arith.constant 1.000000e+00 : f32
    %654 = vector.broadcast %cst_161 : f32 to vector<2x32xf32>
    %655 = arith.addf %654, %653 : vector<2x32xf32>
    %656 = arith.divf %654, %655 : vector<2x32xf32>
    %657 = arith.mulf %648, %624 : vector<2x32xf32>
    %658 = arith.mulf %642, %650 : vector<2x32xf32>
    %659 = arith.addf %657, %658 : vector<2x32xf32>
    %660 = math.tanh %659 : vector<2x32xf32>
    %661 = arith.mulf %656, %660 : vector<2x32xf32>
    %662 = arith.addf %632, %661 : vector<2x32xf32>
    %663 = arith.index_cast %630 : i32 to index
    %c0_162 = arith.constant 0 : index
    %664 = vector.load %arg11[%663, %c0_162] : memref<18x32xf32, #tpu.memory_space<vmem>>, vector<2x32xf32>
    tpu.vector_store %arg11[%663, %c0_162], %662 {strides = array<i32>} : memref<18x32xf32, #tpu.memory_space<vmem>>, vector<2x32xf32>,
    %c9_i32_163 = arith.constant 9 : i32
    %c0_164 = arith.constant 0 : index
    %c0_165 = arith.constant 0 : index
    %665 = vector.load %arg11[%c0_164, %c0_165] : memref<18x32xf32, #tpu.memory_space<vmem>>, vector<18x32xf32>
    %c0_166 = arith.constant 0 : index
    %c0_167 = arith.constant 0 : index
    %666 = vector.load %arg8[%c0_166, %c0_167] : memref<32x128xf32, #tpu.memory_space<vmem>>, vector<32x128xf32>
    %cst_168 = arith.constant dense<0.000000e+00> : vector<18x128xf32>
    %667 = tpu.matmul %665, %666, %cst_168 {dimension_numbers = #tpu.dot_dimension_numbers<[1], [0], [0], [1], [0, 0, 1, 1], [], []>} : vector<18x32xf32>, vector<32x128xf32>, vector<18x128xf32> -> vector<18x128xf32>
    %c0_169 = arith.constant 0 : index
    %c0_170 = arith.constant 0 : index
    %668 = vector.load %arg9[%c0_169, %c0_170] : memref<18x128xf32, #tpu.memory_space<vmem>>, vector<18x128xf32>
    tpu.vector_store %arg9[%c0_169, %c0_170], %667 {strides = array<i32>} : memref<18x128xf32, #tpu.memory_space<vmem>>, vector<18x128xf32>,
    return
  }
  func.func @transform_0(%arg0: i32) -> (i32, i32) {
    %c0_i32 = arith.constant 0 : i32
    %c0_i32_0 = arith.constant 0 : i32
    %c0_i32_1 = arith.constant 0 : i32
    return %c0_i32, %c0_i32_0 : i32, i32
  }
  func.func @transform_1(%arg0: i32) -> (i32, i32) {
    %c0_i32 = arith.constant 0 : i32
    %c0_i32_0 = arith.constant 0 : i32
    %c0_i32_1 = arith.constant 0 : i32
    return %c0_i32, %c0_i32_0 : i32, i32
  }
  func.func @transform_2(%arg0: i32) -> (i32, i32) {
    %c0_i32 = arith.constant 0 : i32
    %c0_i32_0 = arith.constant 0 : i32
    %c0_i32_1 = arith.constant 0 : i32
    return %c0_i32, %c0_i32_0 : i32, i32
  }
  func.func @transform_3(%arg0: i32) -> (i32, i32) {
    %c0_i32 = arith.constant 0 : i32
    %c0_i32_0 = arith.constant 0 : i32
    %c0_i32_1 = arith.constant 0 : i32
    return %c0_i32, %c0_i32_0 : i32, i32
  }
  func.func @transform_4(%arg0: i32) -> (i32, i32) {
    %c0_i32 = arith.constant 0 : i32
    %c0_i32_0 = arith.constant 0 : i32
    %c0_i32_1 = arith.constant 0 : i32
    return %c0_i32, %c0_i32_0 : i32, i32
  }
  func.func @transform_5(%arg0: i32) -> (i32, i32) {
    %c0_i32 = arith.constant 0 : i32
    %c0_i32_0 = arith.constant 0 : i32
    %c0_i32_1 = arith.constant 0 : i32
    return %c0_i32, %c0_i32_0 : i32, i32
  }
  func.func @transform_6(%arg0: i32) -> (i32, i32) {
    %c0_i32 = arith.constant 0 : i32
    %c0_i32_0 = arith.constant 0 : i32
    %c0_i32_1 = arith.constant 0 : i32
    return %c0_i32, %c0_i32_0 : i32, i32
  }
  func.func @transform_7(%arg0: i32) -> (i32, i32) {
    %c0_i32 = arith.constant 0 : i32
    %c0_i32_0 = arith.constant 0 : i32
    %c0_i32_1 = arith.constant 0 : i32
    return %c0_i32, %c0_i32_0 : i32, i32
  }
  func.func @transform_8(%arg0: i32) -> (i32, i32) {
    %c0_i32 = arith.constant 0 : i32
    %c0_i32_0 = arith.constant 0 : i32
    %c0_i32_1 = arith.constant 0 : i32
    return %c0_i32, %c0_i32_0 : i32, i32
  }
}

</mosaic_0001>

<llo_original>
// kernel: dec_elmo_forward.1
$region0: #{dec_elmo_forward.1}
  #allocation0 [shape = 'u32[]', space=smem, size = 0x4, offset = 0x4, fixed_abs, tag = 'smem constant byte address 0x4 - core index']
  #allocation1 [shape = 'u32[144,128]{1,0:T(1,128)}', space=vmem, size = 0x12000, scoped, tag = 'internal scratch']
  #allocation2 [shape = 'f32[18,32]{1,0:T(8,128)}', space=vmem, size = 0x3000, scoped, tag = 'scratch operand']
  #allocation3 [shape = 'f32[18,32]{1,0:T(8,128)}', space=vmem, size = 0x3000, scoped, tag = 'scratch operand']
  %s0 = inlined_call_operand.vmem [shape: s32[18,1], index: 0, kind: input, shape index: {}]
  %s1 = inlined_call_operand.vmem [shape: f32[128,32], index: 1, kind: input, shape index: {}]
  %s2 = inlined_call_operand.vmem [shape: f32[64,128], index: 2, kind: input, shape index: {}]
  %s3 = inlined_call_operand.vmem [shape: f32[1,128], index: 3, kind: input, shape index: {}]
  %s4 = inlined_call_operand.vmem [shape: f32[64,128], index: 4, kind: input, shape index: {}]
  %s5 = inlined_call_operand.hbm [shape: f32[1,128], index: 5, kind: input, shape index: {}]
  %s6 = inlined_call_operand.vmem [shape: f32[32,32], index: 6, kind: input, shape index: {}]
  %s7 = inlined_call_operand.vmem [shape: f32[32,128], index: 7, kind: input, shape index: {}]
  %s8 = inlined_call_operand.vmem [shape: f32[18,128], index: 8, kind: output, shape index: {}]
  %s9 = sld [smem:[#allocation0]]
  $region46: #{dec_elmo_forward.1} parent=0
    _
  %s11 = ssub.s32 1, %s9
  %s12 = scalar_select 0, %s11, %s9
  $region1: #{dec_elmo_forward.1} parent=0
    #allocation4 [shape = 'u8[512]{0}', space=vmem, size = 0x400, scoped, tag = 'input window, operand 5, single buffered']
    #allocation5 [shape = 's32[1]{0}', space=sflag, size = 0x4, scoped, tag = 'scoped memory for dec_elmo_forward.1']
    %13 = vsyncpa [#allocation5], 0
    // Predicated region
    $region2: #{dec_elmo_forward.1} parent=1 // pred_check
      _
    $region3: #{dec_elmo_forward.1} parent=1 // pred_check_branch
      %15 = sbr.rel (0) target = $region5
    $region4: #{dec_elmo_forward.1} parent=1 // pred_region
      _
    $region5: #{dec_elmo_forward.1} parent=1 // pred_fallthru
      _
    // Predicated region
    $region6: #{dec_elmo_forward.1} parent=1 // pred_check
      _
    $region7: #{dec_elmo_forward.1} parent=1 // pred_check_branch
      %17 = sbr.rel (0) target = $region9
    $region8: #{dec_elmo_forward.1} parent=1 // pred_region
      _
    $region9: #{dec_elmo_forward.1} parent=1 // pred_fallthru
      _
    // Predicated region
    $region10: #{dec_elmo_forward.1} parent=1 // pred_check
      _
    $region11: #{dec_elmo_forward.1} parent=1 // pred_check_branch
      %19 = sbr.rel (0) target = $region13
    $region12: #{dec_elmo_forward.1} parent=1 // pred_region
      _
    $region13: #{dec_elmo_forward.1} parent=1 // pred_fallthru
      _
    // Predicated region
    $region14: #{dec_elmo_forward.1} parent=1 // pred_check
      _
    $region15: #{dec_elmo_forward.1} parent=1 // pred_check_branch
      %21 = sbr.rel (0) target = $region17
    $region16: #{dec_elmo_forward.1} parent=1 // pred_region
      _
    $region17: #{dec_elmo_forward.1} parent=1 // pred_fallthru
      _
    // Predicated region
    $region18: #{dec_elmo_forward.1} parent=1 // pred_check
      _
    $region19: #{dec_elmo_forward.1} parent=1 // pred_check_branch
      %23 = sbr.rel (0) target = $region21
    $region20: #{dec_elmo_forward.1} parent=1 // pred_region
      _
    $region21: #{dec_elmo_forward.1} parent=1 // pred_fallthru
      _
    // Predicated region
    $region22: #{dec_elmo_forward.1} parent=1 // pred_check
      _
    $region23: #{dec_elmo_forward.1} parent=1 // pred_check_branch
      %25 = sbr.rel (0) target = $region25
    $region24: #{dec_elmo_forward.1} parent=1 // pred_region
      %s27 = ssub.s32 16, 16
      %28 = vsyncadd [#allocation5], %s27
      %s30 = sshll.u32 [#allocation4], 4
      %s31 = int_to_ptr.vmem [resolvable:$true] %s30
      %33 = dma.hbm_to_vmem [thread:$0]  %s5, 16, %s31, [#allocation5]
    $region25: #{dec_elmo_forward.1} parent=1 // pred_fallthru
      _
    // Predicated region
    $region26: #{dec_elmo_forward.1} parent=1 // pred_check
      _
    $region27: #{dec_elmo_forward.1} parent=1 // pred_check_branch
      %35 = sbr.rel (0) target = $region29
    $region28: #{dec_elmo_forward.1} parent=1 // pred_region
      _
    $region29: #{dec_elmo_forward.1} parent=1 // pred_fallthru
      _
    // Predicated region
    $region30: #{dec_elmo_forward.1} parent=1 // pred_check
      _
    $region31: #{dec_elmo_forward.1} parent=1 // pred_check_branch
      %37 = sbr.rel (0) target = $region33
    $region32: #{dec_elmo_forward.1} parent=1 // pred_region
      _
    $region33: #{dec_elmo_forward.1} parent=1 // pred_fallthru
      _
    // Predicated region
    $region34: #{dec_elmo_forward.1} parent=1 // pred_check
      _
    $region35: #{dec_elmo_forward.1} parent=1 // pred_check_branch
      %39 = sbr.rel (0) target = $region37
    $region36: #{dec_elmo_forward.1} parent=1 // pred_region
      %40 = dma.done [#allocation5], 16
    $region37: #{dec_elmo_forward.1} parent=1 // pred_fallthru
      _
    %v41 = vld [vmem:[%s0] sm:$0xff]
    %v42 = vld [vmem:[%s0 + $0x8] sm:$0xff]
    %v43 = vld [vmem:[%s0 + $0x10] sm:$0x3]
    %v44 = vlaneseq
    %v45 = vand.u32 %v44, 127
    %46 = vset.pattern.permute.xlu0 0
    %47 = vperm.xlu0 %46, %v41
    %v48 = vpop.permute.xlu0 %47
    %49 = vset.pattern.permute.xlu0 0
    %50 = vperm.xlu0 %49, %v42
    %v51 = vpop.permute.xlu0 %50
    %52 = vset.pattern.permute.xlu0 0
    %53 = vperm.xlu0 %52, %v43
    %v54 = vpop.permute.xlu0 %53
    %vm55 = vcmp.eq.s32.totalorder %v48, %v45
    %vm56 = vcmp.eq.s32.totalorder %v51, %v45
    %vm57 = vcmp.eq.s32.totalorder %v54, %v45
    %v58 = vsel %vm55, 1, 0
    %v59 = vsel %vm56, 1, 0
    %v60 = vsel %vm57, 1, 0
    %v61 = vcvt.s32.f32 %v58
    %v62 = vcvt.s32.f32 %v59
    %v63 = vcvt.s32.f32 %v60
    %v64 = vld [vmem:[%s1] sm:$0xff]
    %v65 = vld [vmem:[%s1 + $0x8] sm:$0xff]
    %v66 = vld [vmem:[%s1 + $0x10] sm:$0xff]
    %v67 = vld [vmem:[%s1 + $0x18] sm:$0xff]
    %v68 = vld [vmem:[%s1 + $0x20] sm:$0xff]
    %v69 = vld [vmem:[%s1 + $0x28] sm:$0xff]
    %v70 = vld [vmem:[%s1 + $0x30] sm:$0xff]
    %v71 = vld [vmem:[%s1 + $0x38] sm:$0xff]
    %v72 = vld [vmem:[%s1 + $0x40] sm:$0xff]
    %v73 = vld [vmem:[%s1 + $0x48] sm:$0xff]
    %v74 = vld [vmem:[%s1 + $0x50] sm:$0xff]
    %v75 = vld [vmem:[%s1 + $0x58] sm:$0xff]
    %v76 = vld [vmem:[%s1 + $0x60] sm:$0xff]
    %v77 = vld [vmem:[%s1 + $0x68] sm:$0xff]
    %v78 = vld [vmem:[%s1 + $0x70] sm:$0xff]
    %v79 = vld [vmem:[%s1 + $0x78] sm:$0xff]
    %80 = vmatprep.subr.mxu0 0.0
    %81 = vmatpush1.msra.mxu0 %v64
    %82 = vmatprep.subr.mxu0 0.0
    %83 = vmatpush1.msra.mxu0 %v65
    %84 = vmatprep.subr.mxu0 0.0
    %85 = vmatpush1.msra.mxu0 %v66
    %86 = vmatprep.subr.mxu0 0.0
    %87 = vmatpush1.msra.mxu0 %v67
    %88 = vmatprep.subr.mxu0 0.0
    %89 = vmatpush1.msra.mxu0 %v68
    %90 = vmatprep.subr.mxu0 0.0
    %91 = vmatpush1.msra.mxu0 %v69
    %92 = vmatprep.subr.mxu0 0.0
    %93 = vmatpush1.msra.mxu0 %v70
    %94 = vmatprep.subr.mxu0 0.0
    %95 = vmatpush1.msra.mxu0 %v71
    %96 = vmatprep.subr.mxu0 0.0
    %97 = vmatpush1.msra.mxu0 %v72
    %98 = vmatprep.subr.mxu0 0.0
    %99 = vmatpush1.msra.mxu0 %v73
    %100 = vmatprep.subr.mxu0 0.0
    %101 = vmatpush1.msra.mxu0 %v74
    %102 = vmatprep.subr.mxu0 0.0
    %103 = vmatpush1.msra.mxu0 %v75
    %104 = vmatprep.subr.mxu0 0.0
    %105 = vmatpush1.msra.mxu0 %v76
    %106 = vmatprep.subr.mxu0 0.0
    %107 = vmatpush1.msra.mxu0 %v77
    %108 = vmatprep.subr.mxu0 0.0
    %109 = vmatpush1.msra.mxu0 %v78
    %110 = vmatprep.subr.mxu0 0.0
    %111 = vmatpush1.msra.mxu0 %v79
    %112 = vmatprep.subr.mxu0 0.0
    %113 = vmatpush1.msra.mxu0 0.0
    %114 = vmatprep.subr.mxu0 0.0
    %115 = vmatpush1.msra.mxu0 0.0
    %116 = vmatprep.subr.mxu0 0.0
    %117 = vmatpush1.msra.mxu0 0.0
    %118 = vmatprep.subr.mxu0 0.0
    %119 = vmatpush1.msra.mxu0 0.0
    %120 = vmatprep.subr.mxu0 0.0
    %121 = vmatpush1.msra.mxu0 0.0
    %122 = vmatprep.subr.mxu0 0.0
    %123 = vmatpush1.msra.mxu0 0.0
    %124 = vmatprep.subr.mxu0 0.0
    %125 = vmatpush1.msra.mxu0 0.0
    %126 = vmatprep.subr.mxu0 0.0
    %127 = vmatpush1.msra.mxu0 0.0
    %128 = vmatprep.subr.mxu0 0.0
    %129 = vmatpush1.msra.mxu0 0.0
    %130 = vmatprep.subr.mxu0 0.0
    %131 = vmatpush1.msra.mxu0 0.0
    %132 = vmatprep.subr.mxu0 0.0
    %133 = vmatpush1.msra.mxu0 0.0
    %134 = vmatprep.subr.mxu0 0.0
    %135 = vmatpush1.msra.mxu0 0.0
    %136 = vmatprep.subr.mxu0 0.0
    %137 = vmatpush1.msra.mxu0 0.0
    %138 = vmatprep.subr.mxu0 0.0
    %139 = vmatpush1.msra.mxu0 0.0
    %140 = vmatprep.subr.mxu0 0.0
    %141 = vmatpush1.msra.mxu0 0.0
    %142 = vmatprep.subr.mxu0 0.0
    %143 = vmatpush1.msra.mxu0 0.0
    %144 = vmatprep.mubr.f32.mxu0 0.0
    %145 = vmatmul.mubr.f32.gmra.mrb[0].mxu0 %v61
    %v146 = vpop.f32.mrb[0].mxu0
    %v147 = vadd.f32 0.0, %v146
    %v148 = vpop.f32.mrb[0].mxu0
    %149 = vmatprep.mubr.f32.mxu0 0.0
    %150 = vmatmul.mubr.f32.gmra.mrb[0].mxu0 %v62
    %v151 = vpop.f32.mrb[0].mxu0
    %v152 = vadd.f32 0.0, %v151
    %v153 = vpop.f32.mrb[0].mxu0
    %154 = vmatprep.mubr.f32.mxu0 0.0
    %155 = vmatmul.mubr.f32.gmra.mrb[0].mxu0 %v63
    %v156 = vpop.f32.mrb[0].mxu0
    %v157 = vadd.f32 0.0, %v156
    %v158 = vpop.f32.mrb[0].mxu0
    %159 = vdwg.mxu0
    %vm160 = vcmask 261120
    %161 = vst.msk [vmem:[#allocation2] sm:$0xff] %vm160, %v147
    %162 = vst.msk [vmem:[#allocation2 + $0x8] sm:$0xff] %vm160, %v152
    %vm163 = vcmask 254976
    %164 = vst.msk [vmem:[#allocation2 + $0x10] sm:$0x3] %vm163, %v157
    %v165 = vld [vmem:[%s6] sm:$0xff]
    %v166 = vld [vmem:[%s6 + $0x8] sm:$0xff]
    %v167 = vld [vmem:[%s6 + $0x10] sm:$0xff]
    %v168 = vld [vmem:[%s6 + $0x18] sm:$0xff]
    %v170 = vsel %vm160, %v147, 0
    %v173 = vsel %vm160, %v152, 0
    %v176 = vsel %vm160, %v157, 0
    %178 = vmatprep.subr.mxu0 0.0
    %179 = vmatpush1.msra.mxu0 %v165
    %180 = vmatprep.subr.mxu0 0.0
    %181 = vmatpush1.msra.mxu0 %v166
    %182 = vmatprep.subr.mxu0 0.0
    %183 = vmatpush1.msra.mxu0 %v167
    %184 = vmatprep.subr.mxu0 0.0
    %185 = vmatpush1.msra.mxu0 %v168
    %186 = vmatprep.subr.mxu0 0.0
    %187 = vmatpush1.msra.mxu0 0.0
    %188 = vmatprep.subr.mxu0 0.0
    %189 = vmatpush1.msra.mxu0 0.0
    %190 = vmatprep.subr.mxu0 0.0
    %191 = vmatpush1.msra.mxu0 0.0
    %192 = vmatprep.subr.mxu0 0.0
    %193 = vmatpush1.msra.mxu0 0.0
    %194 = vmatprep.subr.mxu0 0.0
    %195 = vmatpush1.msra.mxu0 0.0
    %196 = vmatprep.subr.mxu0 0.0
    %197 = vmatpush1.msra.mxu0 0.0
    %198 = vmatprep.subr.mxu0 0.0
    %199 = vmatpush1.msra.mxu0 0.0
    %200 = vmatprep.subr.mxu0 0.0
    %201 = vmatpush1.msra.mxu0 0.0
    %202 = vmatprep.subr.mxu0 0.0
    %203 = vmatpush1.msra.mxu0 0.0
    %204 = vmatprep.subr.mxu0 0.0
    %205 = vmatpush1.msra.mxu0 0.0
    %206 = vmatprep.subr.mxu0 0.0
    %207 = vmatpush1.msra.mxu0 0.0
    %208 = vmatprep.subr.mxu0 0.0
    %209 = vmatpush1.msra.mxu0 0.0
    %210 = vmatprep.subr.mxu0 0.0
    %211 = vmatpush1.msra.mxu0 0.0
    %212 = vmatprep.subr.mxu0 0.0
    %213 = vmatpush1.msra.mxu0 0.0
    %214 = vmatprep.subr.mxu0 0.0
    %215 = vmatpush1.msra.mxu0 0.0
    %216 = vmatprep.subr.mxu0 0.0
    %217 = vmatpush1.msra.mxu0 0.0
    %218 = vmatprep.subr.mxu0 0.0
    %219 = vmatpush1.msra.mxu0 0.0
    %220 = vmatprep.subr.mxu0 0.0
    %221 = vmatpush1.msra.mxu0 0.0
    %222 = vmatprep.subr.mxu0 0.0
    %223 = vmatpush1.msra.mxu0 0.0
    %224 = vmatprep.subr.mxu0 0.0
    %225 = vmatpush1.msra.mxu0 0.0
    %226 = vmatprep.subr.mxu0 0.0
    %227 = vmatpush1.msra.mxu0 0.0
    %228 = vmatprep.subr.mxu0 0.0
    %229 = vmatpush1.msra.mxu0 0.0
    %230 = vmatprep.subr.mxu0 0.0
    %231 = vmatpush1.msra.mxu0 0.0
    %232 = vmatprep.subr.mxu0 0.0
    %233 = vmatpush1.msra.mxu0 0.0
    %234 = vmatprep.subr.mxu0 0.0
    %235 = vmatpush1.msra.mxu0 0.0
    %236 = vmatprep.subr.mxu0 0.0
    %237 = vmatpush1.msra.mxu0 0.0
    %238 = vmatprep.subr.mxu0 0.0
    %239 = vmatpush1.msra.mxu0 0.0
    %240 = vmatprep.subr.mxu0 0.0
    %241 = vmatpush1.msra.mxu0 0.0
    %242 = vmatprep.mubr.f32.mxu0 0.0
    %243 = vmatmul.mubr.f32.gmra.mrb[0].mxu0 %v170
    %v244 = vpop.f32.mrb[0].mxu0
    %v245 = vadd.f32 0.0, %v244
    %v246 = vpop.f32.mrb[0].mxu0
    %247 = vmatprep.mubr.f32.mxu0 0.0
    %248 = vmatmul.mubr.f32.gmra.mrb[0].mxu0 %v173
    %v249 = vpop.f32.mrb[0].mxu0
    %v250 = vadd.f32 0.0, %v249
    %v251 = vpop.f32.mrb[0].mxu0
    %252 = vmatprep.mubr.f32.mxu0 0.0
    %253 = vmatmul.mubr.f32.gmra.mrb[0].mxu0 %v176
    %v254 = vpop.f32.mrb[0].mxu0
    %v255 = vadd.f32 0.0, %v254
    %v256 = vpop.f32.mrb[0].mxu0
    %257 = vdwg.mxu0
    %258 = vst.msk [vmem:[#allocation3] sm:$0xff] %vm160, %v245
    %259 = vst.msk [vmem:[#allocation3 + $0x8] sm:$0xff] %vm160, %v250
    %260 = vst.msk [vmem:[#allocation3 + $0x10] sm:$0x3] %vm163, %v255
    %v261 = vld [vmem:[%s2] sm:$0xff]
    %v262 = vld [vmem:[%s2 + $0x8] sm:$0xff]
    %v263 = vld [vmem:[%s2 + $0x10] sm:$0xff]
    %v264 = vld [vmem:[%s2 + $0x18] sm:$0xff]
    %v265 = vld [vmem:[%s2 + $0x20] sm:$0xff]
    %v266 = vld [vmem:[%s2 + $0x28] sm:$0xff]
    %v267 = vld [vmem:[%s2 + $0x30] sm:$0xff]
    %v268 = vld [vmem:[%s2 + $0x38] sm:$0xff]
    %v269 = vld [vmem:[%s3] sm:$0x1]
    %v270 = vld [vmem:[%s4] sm:$0xff]
    %v271 = vld [vmem:[%s4 + $0x8] sm:$0xff]
    %v272 = vld [vmem:[%s4 + $0x10] sm:$0xff]
    %v273 = vld [vmem:[%s4 + $0x18] sm:$0xff]
    %v274 = vld [vmem:[%s4 + $0x20] sm:$0xff]
    %v275 = vld [vmem:[%s4 + $0x28] sm:$0xff]
    %v276 = vld [vmem:[%s4 + $0x30] sm:$0xff]
    %v277 = vld [vmem:[%s4 + $0x38] sm:$0xff]
    %v278 = vld [vmem:[#allocation4] sm:$0x1]
    %v279 = vld [vmem:[#allocation2] sm:$0x3]
    %v280 = vsel %vm160, %v279, 0.0
    %v282 = vlaneseq
    %v283 = vshrl.u32 %v282, 7
    %v284 = vsub.s32 0, %v283
    %v285 = vrot.slane %v269, %v284
    %vm287 = vcmask 523264
    %v289 = vsel %vm287, %v280, 0
    %291 = vmatprep.subr.mxu0 0.0
    %292 = vmatpush1.msra.mxu0 %v261
    %293 = vmatprep.subr.mxu0 0.0
    %294 = vmatpush1.msra.mxu0 %v262
    %295 = vmatprep.subr.mxu0 0.0
    %296 = vmatpush1.msra.mxu0 %v263
    %297 = vmatprep.subr.mxu0 0.0
    %298 = vmatpush1.msra.mxu0 %v264
    %299 = vmatprep.subr.mxu0 0.0
    %300 = vmatpush1.msra.mxu0 %v265
    %301 = vmatprep.subr.mxu0 0.0
    %302 = vmatpush1.msra.mxu0 %v266
    %303 = vmatprep.subr.mxu0 0.0
    %304 = vmatpush1.msra.mxu0 %v267
    %305 = vmatprep.subr.mxu0 0.0
    %306 = vmatpush1.msra.mxu0 %v268
    %307 = vmatprep.subr.mxu0 0.0
    %308 = vmatpush1.msra.mxu0 0.0
    %309 = vmatprep.subr.mxu0 0.0
    %310 = vmatpush1.msra.mxu0 0.0
    %311 = vmatprep.subr.mxu0 0.0
    %312 = vmatpush1.msra.mxu0 0.0
    %313 = vmatprep.subr.mxu0 0.0
    %314 = vmatpush1.msra.mxu0 0.0
    %315 = vmatprep.subr.mxu0 0.0
    %316 = vmatpush1.msra.mxu0 0.0
    %317 = vmatprep.subr.mxu0 0.0
    %318 = vmatpush1.msra.mxu0 0.0
    %319 = vmatprep.subr.mxu0 0.0
    %320 = vmatpush1.msra.mxu0 0.0
    %321 = vmatprep.subr.mxu0 0.0
    %322 = vmatpush1.msra.mxu0 0.0
    %323 = vmatprep.subr.mxu0 0.0
    %324 = vmatpush1.msra.mxu0 0.0
    %325 = vmatprep.subr.mxu0 0.0
    %326 = vmatpush1.msra.mxu0 0.0
    %327 = vmatprep.subr.mxu0 0.0
    %328 = vmatpush1.msra.mxu0 0.0
    %329 = vmatprep.subr.mxu0 0.0
    %330 = vmatpush1.msra.mxu0 0.0
    %331 = vmatprep.subr.mxu0 0.0
    %332 = vmatpush1.msra.mxu0 0.0
    %333 = vmatprep.subr.mxu0 0.0
    %334 = vmatpush1.msra.mxu0 0.0
    %335 = vmatprep.subr.mxu0 0.0
    %336 = vmatpush1.msra.mxu0 0.0
    %337 = vmatprep.subr.mxu0 0.0
    %338 = vmatpush1.msra.mxu0 0.0
    %339 = vmatprep.subr.mxu0 0.0
    %340 = vmatpush1.msra.mxu0 0.0
    %341 = vmatprep.subr.mxu0 0.0
    %342 = vmatpush1.msra.mxu0 0.0
    %343 = vmatprep.subr.mxu0 0.0
    %344 = vmatpush1.msra.mxu0 0.0
    %345 = vmatprep.subr.mxu0 0.0
    %346 = vmatpush1.msra.mxu0 0.0
    %347 = vmatprep.subr.mxu0 0.0
    %348 = vmatpush1.msra.mxu0 0.0
    %349 = vmatprep.subr.mxu0 0.0
    %350 = vmatpush1.msra.mxu0 0.0
    %351 = vmatprep.subr.mxu0 0.0
    %352 = vmatpush1.msra.mxu0 0.0
    %353 = vmatprep.subr.mxu0 0.0
    %354 = vmatpush1.msra.mxu0 0.0
    %355 = vmatprep.mubr.f32.mxu0 0.0
    %356 = vmatmul.mubr.f32.gmra.mrb[0].mxu0 %v289
    %v357 = vpop.f32.mrb[0].mxu0
    %v358 = vadd.f32 %v285, %v357
    %v359 = vpop.f32.mrb[0].mxu0
    %360 = vdwg.mxu0
    %v361 = vxor.u32 %v358, 2147483648
    %v362 = vmul.f32 %v361, 1.442695
    %v363 = vpow.pop %v362
    %v364 = vadd.f32 %v363, 1.0
    %v365 = vrcp.pop %v364
    %v366 = vmul.f32 1.0, %v365
    %v367 = vtanh.pop %v358
    %v368 = vmul.f32 %v366, 0.0
    %370 = vrot.lane.b32.xlu0 %v367, 64
    %v371 = vpop.permute.xlu0 %370
    %v373 = vmul.f32 %v366, %v371
    %375 = vrot.lane.b32.xlu0 %v373, 32
    %v376 = vpop.permute.xlu0 %375
    %v378 = vadd.f32 %v368, %v376
    %v379 = vtanh.pop %v378
    %381 = vrot.lane.b32.xlu0 %v379, 64
    %v382 = vpop.permute.xlu0 %381
    %v384 = vmul.f32 %v366, %v382
    %v385 = vld [vmem:[#allocation3] sm:$0x3]
    %387 = vrot.lane.b32.xlu0 %v384, 32
    %v388 = vpop.permute.xlu0 %387
    %v390 = vadd.f32 %v385, %v388
    %391 = vst.msk [vmem:[#allocation3] sm:$0x3] %vm163, %v390
    %v392 = vld [vmem:[#allocation2 + $0x2] sm:$0x3]
    %393 = vrot.lane.b32.xlu0 %v384, 64
    %v394 = vpop.permute.xlu0 %393
    %v396 = vsel %vm160, %v392, %v394
    %v398 = vsel %vm287, %v396, 0
    %400 = vmatprep.subr.mxu0 0.0
    %401 = vmatpush1.msra.mxu0 %v261
    %402 = vmatprep.subr.mxu0 0.0
    %403 = vmatpush1.msra.mxu0 %v262
    %404 = vmatprep.subr.mxu0 0.0
    %405 = vmatpush1.msra.mxu0 %v263
    %406 = vmatprep.subr.mxu0 0.0
    %407 = vmatpush1.msra.mxu0 %v264
    %408 = vmatprep.subr.mxu0 0.0
    %409 = vmatpush1.msra.mxu0 %v265
    %410 = vmatprep.subr.mxu0 0.0
    %411 = vmatpush1.msra.mxu0 %v266
    %412 = vmatprep.subr.mxu0 0.0
    %413 = vmatpush1.msra.mxu0 %v267
    %414 = vmatprep.subr.mxu0 0.0
    %415 = vmatpush1.msra.mxu0 %v268
    %416 = vmatprep.subr.mxu0 0.0
    %417 = vmatpush1.msra.mxu0 0.0
    %418 = vmatprep.subr.mxu0 0.0
    %419 = vmatpush1.msra.mxu0 0.0
    %420 = vmatprep.subr.mxu0 0.0
    %421 = vmatpush1.msra.mxu0 0.0
    %422 = vmatprep.subr.mxu0 0.0
    %423 = vmatpush1.msra.mxu0 0.0
    %424 = vmatprep.subr.mxu0 0.0
    %425 = vmatpush1.msra.mxu0 0.0
    %426 = vmatprep.subr.mxu0 0.0
    %427 = vmatpush1.msra.mxu0 0.0
    %428 = vmatprep.subr.mxu0 0.0
    %429 = vmatpush1.msra.mxu0 0.0
    %430 = vmatprep.subr.mxu0 0.0
    %431 = vmatpush1.msra.mxu0 0.0
    %432 = vmatprep.subr.mxu0 0.0
    %433 = vmatpush1.msra.mxu0 0.0
    %434 = vmatprep.subr.mxu0 0.0
    %435 = vmatpush1.msra.mxu0 0.0
    %436 = vmatprep.subr.mxu0 0.0
    %437 = vmatpush1.msra.mxu0 0.0
    %438 = vmatprep.subr.mxu0 0.0
    %439 = vmatpush1.msra.mxu0 0.0
    %440 = vmatprep.subr.mxu0 0.0
    %441 = vmatpush1.msra.mxu0 0.0
    %442 = vmatprep.subr.mxu0 0.0
    %443 = vmatpush1.msra.mxu0 0.0
    %444 = vmatprep.subr.mxu0 0.0
    %445 = vmatpush1.msra.mxu0 0.0
    %446 = vmatprep.subr.mxu0 0.0
    %447 = vmatpush1.msra.mxu0 0.0
    %448 = vmatprep.subr.mxu0 0.0
    %449 = vmatpush1.msra.mxu0 0.0
    %450 = vmatprep.subr.mxu0 0.0
    %451 = vmatpush1.msra.mxu0 0.0
    %452 = vmatprep.subr.mxu0 0.0
    %453 = vmatpush1.msra.mxu0 0.0
    %454 = vmatprep.subr.mxu0 0.0
    %455 = vmatpush1.msra.mxu0 0.0
    %456 = vmatprep.subr.mxu0 0.0
    %457 = vmatpush1.msra.mxu0 0.0
    %458 = vmatprep.subr.mxu0 0.0
    %459 = vmatpush1.msra.mxu0 0.0
    %460 = vmatprep.subr.mxu0 0.0
    %461 = vmatpush1.msra.mxu0 0.0
    %462 = vmatprep.subr.mxu0 0.0
    %463 = vmatpush1.msra.mxu0 0.0
    %464 = vmatprep.mubr.f32.mxu0 0.0
    %465 = vmatmul.mubr.f32.gmra.mrb[0].mxu0 %v398
    %v466 = vpop.f32.mrb[0].mxu0
    %v467 = vadd.f32 %v285, %v466
    %v468 = vpop.f32.mrb[0].mxu0
    %469 = vdwg.mxu0
    %v470 = vxor.u32 %v467, 2147483648
    %v471 = vmul.f32 %v470, 1.442695
    %v472 = vpow.pop %v471
    %v473 = vadd.f32 %v472, 1.0
    %v474 = vrcp.pop %v473
    %v475 = vmul.f32 1.0, %v474
    %v476 = vtanh.pop %v467
    %v477 = vmul.f32 %v475, %v378
    %479 = vrot.lane.b32.xlu0 %v476, 64
    %v480 = vpop.permute.xlu0 %479
    %v482 = vmul.f32 %v475, %v480
    %484 = vrot.lane.b32.xlu0 %v482, 32
    %v485 = vpop.permute.xlu0 %484
    %v487 = vadd.f32 %v477, %v485
    %v488 = vtanh.pop %v487
    %490 = vrot.lane.b32.xlu0 %v488, 64
    %v491 = vpop.permute.xlu0 %490
    %v493 = vmul.f32 %v475, %v491
    %v494 = vld [vmem:[#allocation3 + $0x2] sm:$0x3]
    %496 = vrot.lane.b32.xlu0 %v493, 32
    %v497 = vpop.permute.xlu0 %496
    %v499 = vadd.f32 %v494, %v497
    %500 = vst.msk [vmem:[#allocation3 + $0x2] sm:$0x3] %vm163, %v499
    %v501 = vld [vmem:[#allocation2 + $0x4] sm:$0x3]
    %502 = vrot.lane.b32.xlu0 %v493, 64
    %v503 = vpop.permute.xlu0 %502
    %v505 = vsel %vm160, %v501, %v503
    %v507 = vsel %vm287, %v505, 0
    %509 = vmatprep.subr.mxu0 0.0
    %510 = vmatpush1.msra.mxu0 %v261
    %511 = vmatprep.subr.mxu0 0.0
    %512 = vmatpush1.msra.mxu0 %v262
    %513 = vmatprep.subr.mxu0 0.0
    %514 = vmatpush1.msra.mxu0 %v263
    %515 = vmatprep.subr.mxu0 0.0
    %516 = vmatpush1.msra.mxu0 %v264
    %517 = vmatprep.subr.mxu0 0.0
    %518 = vmatpush1.msra.mxu0 %v265
    %519 = vmatprep.subr.mxu0 0.0
    %520 = vmatpush1.msra.mxu0 %v266
    %521 = vmatprep.subr.mxu0 0.0
    %522 = vmatpush1.msra.mxu0 %v267
    %523 = vmatprep.subr.mxu0 0.0
    %524 = vmatpush1.msra.mxu0 %v268
    %525 = vmatprep.subr.mxu0 0.0
    %526 = vmatpush1.msra.mxu0 0.0
    %527 = vmatprep.subr.mxu0 0.0
    %528 = vmatpush1.msra.mxu0 0.0
    %529 = vmatprep.subr.mxu0 0.0
    %530 = vmatpush1.msra.mxu0 0.0
    %531 = vmatprep.subr.mxu0 0.0
    %532 = vmatpush1.msra.mxu0 0.0
    %533 = vmatprep.subr.mxu0 0.0
    %534 = vmatpush1.msra.mxu0 0.0
    %535 = vmatprep.subr.mxu0 0.0
    %536 = vmatpush1.msra.mxu0 0.0
    %537 = vmatprep.subr.mxu0 0.0
    %538 = vmatpush1.msra.mxu0 0.0
    %539 = vmatprep.subr.mxu0 0.0
    %540 = vmatpush1.msra.mxu0 0.0
    %541 = vmatprep.subr.mxu0 0.0
    %542 = vmatpush1.msra.mxu0 0.0
    %543 = vmatprep.subr.mxu0 0.0
    %544 = vmatpush1.msra.mxu0 0.0
    %545 = vmatprep.subr.mxu0 0.0
    %546 = vmatpush1.msra.mxu0 0.0
    %547 = vmatprep.subr.mxu0 0.0
    %548 = vmatpush1.msra.mxu0 0.0
    %549 = vmatprep.subr.mxu0 0.0
    %550 = vmatpush1.msra.mxu0 0.0
    %551 = vmatprep.subr.mxu0 0.0
    %552 = vmatpush1.msra.mxu0 0.0
    %553 = vmatprep.subr.mxu0 0.0
    %554 = vmatpush1.msra.mxu0 0.0
    %555 = vmatprep.subr.mxu0 0.0
    %556 = vmatpush1.msra.mxu0 0.0
    %557 = vmatprep.subr.mxu0 0.0
    %558 = vmatpush1.msra.mxu0 0.0
    %559 = vmatprep.subr.mxu0 0.0
    %560 = vmatpush1.msra.mxu0 0.0
    %561 = vmatprep.subr.mxu0 0.0
    %562 = vmatpush1.msra.mxu0 0.0
    %563 = vmatprep.subr.mxu0 0.0
    %564 = vmatpush1.msra.mxu0 0.0
    %565 = vmatprep.subr.mxu0 0.0
    %566 = vmatpush1.msra.mxu0 0.0
    %567 = vmatprep.subr.mxu0 0.0
    %568 = vmatpush1.msra.mxu0 0.0
    %569 = vmatprep.subr.mxu0 0.0
    %570 = vmatpush1.msra.mxu0 0.0
    %571 = vmatprep.subr.mxu0 0.0
    %572 = vmatpush1.msra.mxu0 0.0
    %573 = vmatprep.mubr.f32.mxu0 0.0
    %574 = vmatmul.mubr.f32.gmra.mrb[0].mxu0 %v507
    %v575 = vpop.f32.mrb[0].mxu0
    %v576 = vadd.f32 %v285, %v575
    %v577 = vpop.f32.mrb[0].mxu0
    %578 = vdwg.mxu0
    %v579 = vxor.u32 %v576, 2147483648
    %v580 = vmul.f32 %v579, 1.442695
    %v581 = vpow.pop %v580
    %v582 = vadd.f32 %v581, 1.0
    %v583 = vrcp.pop %v582
    %v584 = vmul.f32 1.0, %v583
    %v585 = vtanh.pop %v576
    %v586 = vmul.f32 %v584, %v487
    %588 = vrot.lane.b32.xlu0 %v585, 64
    %v589 = vpop.permute.xlu0 %588
    %v591 = vmul.f32 %v584, %v589
    %593 = vrot.lane.b32.xlu0 %v591, 32
    %v594 = vpop.permute.xlu0 %593
    %v596 = vadd.f32 %v586, %v594
    %v597 = vtanh.pop %v596
    %599 = vrot.lane.b32.xlu0 %v597, 64
    %v600 = vpop.permute.xlu0 %599
    %v602 = vmul.f32 %v584, %v600
    %v603 = vld [vmem:[#allocation3 + $0x4] sm:$0x3]
    %605 = vrot.lane.b32.xlu0 %v602, 32
    %v606 = vpop.permute.xlu0 %605
    %v608 = vadd.f32 %v603, %v606
    %609 = vst.msk [vmem:[#allocation3 + $0x4] sm:$0x3] %vm163, %v608
    %v610 = vld [vmem:[#allocation2 + $0x6] sm:$0x3]
    %611 = vrot.lane.b32.xlu0 %v602, 64
    %v612 = vpop.permute.xlu0 %611
    %v614 = vsel %vm160, %v610, %v612
    %v616 = vsel %vm287, %v614, 0
    %618 = vmatprep.subr.mxu0 0.0
    %619 = vmatpush1.msra.mxu0 %v261
    %620 = vmatprep.subr.mxu0 0.0
    %621 = vmatpush1.msra.mxu0 %v262
    %622 = vmatprep.subr.mxu0 0.0
    %623 = vmatpush1.msra.mxu0 %v263
    %624 = vmatprep.subr.mxu0 0.0
    %625 = vmatpush1.msra.mxu0 %v264
    %626 = vmatprep.subr.mxu0 0.0
    %627 = vmatpush1.msra.mxu0 %v265
    %628 = vmatprep.subr.mxu0 0.0
    %629 = vmatpush1.msra.mxu0 %v266
    %630 = vmatprep.subr.mxu0 0.0
    %631 = vmatpush1.msra.mxu0 %v267
    %632 = vmatprep.subr.mxu0 0.0
    %633 = vmatpush1.msra.mxu0 %v268
    %634 = vmatprep.subr.mxu0 0.0
    %635 = vmatpush1.msra.mxu0 0.0
    %636 = vmatprep.subr.mxu0 0.0
    %637 = vmatpush1.msra.mxu0 0.0
    %638 = vmatprep.subr.mxu0 0.0
    %639 = vmatpush1.msra.mxu0 0.0
    %640 = vmatprep.subr.mxu0 0.0
    %641 = vmatpush1.msra.mxu0 0.0
    %642 = vmatprep.subr.mxu0 0.0
    %643 = vmatpush1.msra.mxu0 0.0
    %644 = vmatprep.subr.mxu0 0.0
    %645 = vmatpush1.msra.mxu0 0.0
    %646 = vmatprep.subr.mxu0 0.0
    %647 = vmatpush1.msra.mxu0 0.0
    %648 = vmatprep.subr.mxu0 0.0
    %649 = vmatpush1.msra.mxu0 0.0
    %650 = vmatprep.subr.mxu0 0.0
    %651 = vmatpush1.msra.mxu0 0.0
    %652 = vmatprep.subr.mxu0 0.0
    %653 = vmatpush1.msra.mxu0 0.0
    %654 = vmatprep.subr.mxu0 0.0
    %655 = vmatpush1.msra.mxu0 0.0
    %656 = vmatprep.subr.mxu0 0.0
    %657 = vmatpush1.msra.mxu0 0.0
    %658 = vmatprep.subr.mxu0 0.0
    %659 = vmatpush1.msra.mxu0 0.0
    %660 = vmatprep.subr.mxu0 0.0
    %661 = vmatpush1.msra.mxu0 0.0
    %662 = vmatprep.subr.mxu0 0.0
    %663 = vmatpush1.msra.mxu0 0.0
    %664 = vmatprep.subr.mxu0 0.0
    %665 = vmatpush1.msra.mxu0 0.0
    %666 = vmatprep.subr.mxu0 0.0
    %667 = vmatpush1.msra.mxu0 0.0
    %668 = vmatprep.subr.mxu0 0.0
    %669 = vmatpush1.msra.mxu0 0.0
    %670 = vmatprep.subr.mxu0 0.0
    %671 = vmatpush1.msra.mxu0 0.0
    %672 = vmatprep.subr.mxu0 0.0
    %673 = vmatpush1.msra.mxu0 0.0
    %674 = vmatprep.subr.mxu0 0.0
    %675 = vmatpush1.msra.mxu0 0.0
    %676 = vmatprep.subr.mxu0 0.0
    %677 = vmatpush1.msra.mxu0 0.0
    %678 = vmatprep.subr.mxu0 0.0
    %679 = vmatpush1.msra.mxu0 0.0
    %680 = vmatprep.subr.mxu0 0.0
    %681 = vmatpush1.msra.mxu0 0.0
    %682 = vmatprep.mubr.f32.mxu0 0.0
    %683 = vmatmul.mubr.f32.gmra.mrb[0].mxu0 %v616
    %v684 = vpop.f32.mrb[0].mxu0
    %v685 = vadd.f32 %v285, %v684
    %v686 = vpop.f32.mrb[0].mxu0
    %687 = vdwg.mxu0
    %v688 = vxor.u32 %v685, 2147483648
    %v689 = vmul.f32 %v688, 1.442695
    %v690 = vpow.pop %v689
    %v691 = vadd.f32 %v690, 1.0
    %v692 = vrcp.pop %v691
    %v693 = vmul.f32 1.0, %v692
    %v694 = vtanh.pop %v685
    %v695 = vmul.f32 %v693, %v596
    %697 = vrot.lane.b32.xlu0 %v694, 64
    %v698 = vpop.permute.xlu0 %697
    %v700 = vmul.f32 %v693, %v698
    %702 = vrot.lane.b32.xlu0 %v700, 32
    %v703 = vpop.permute.xlu0 %702
    %v705 = vadd.f32 %v695, %v703
    %v706 = vtanh.pop %v705
    %708 = vrot.lane.b32.xlu0 %v706, 64
    %v709 = vpop.permute.xlu0 %708
    %v711 = vmul.f32 %v693, %v709
    %v712 = vld [vmem:[#allocation3 + $0x6] sm:$0x3]
    %714 = vrot.lane.b32.xlu0 %v711, 32
    %v715 = vpop.permute.xlu0 %714
    %v717 = vadd.f32 %v712, %v715
    %718 = vst.msk [vmem:[#allocation3 + $0x6] sm:$0x3] %vm163, %v717
    %v719 = vld [vmem:[#allocation2 + $0x8] sm:$0x3]
    %720 = vrot.lane.b32.xlu0 %v711, 64
    %v721 = vpop.permute.xlu0 %720
    %v723 = vsel %vm160, %v719, %v721
    %v725 = vsel %vm287, %v723, 0
    %727 = vmatprep.subr.mxu0 0.0
    %728 = vmatpush1.msra.mxu0 %v261
    %729 = vmatprep.subr.mxu0 0.0
    %730 = vmatpush1.msra.mxu0 %v262
    %731 = vmatprep.subr.mxu0 0.0
    %732 = vmatpush1.msra.mxu0 %v263
    %733 = vmatprep.subr.mxu0 0.0
    %734 = vmatpush1.msra.mxu0 %v264
    %735 = vmatprep.subr.mxu0 0.0
    %736 = vmatpush1.msra.mxu0 %v265
    %737 = vmatprep.subr.mxu0 0.0
    %738 = vmatpush1.msra.mxu0 %v266
    %739 = vmatprep.subr.mxu0 0.0
    %740 = vmatpush1.msra.mxu0 %v267
    %741 = vmatprep.subr.mxu0 0.0
    %742 = vmatpush1.msra.mxu0 %v268
    %743 = vmatprep.subr.mxu0 0.0
    %744 = vmatpush1.msra.mxu0 0.0
    %745 = vmatprep.subr.mxu0 0.0
    %746 = vmatpush1.msra.mxu0 0.0
    %747 = vmatprep.subr.mxu0 0.0
    %748 = vmatpush1.msra.mxu0 0.0
    %749 = vmatprep.subr.mxu0 0.0
    %750 = vmatpush1.msra.mxu0 0.0
    %751 = vmatprep.subr.mxu0 0.0
    %752 = vmatpush1.msra.mxu0 0.0
    %753 = vmatprep.subr.mxu0 0.0
    %754 = vmatpush1.msra.mxu0 0.0
    %755 = vmatprep.subr.mxu0 0.0
    %756 = vmatpush1.msra.mxu0 0.0
    %757 = vmatprep.subr.mxu0 0.0
    %758 = vmatpush1.msra.mxu0 0.0
    %759 = vmatprep.subr.mxu0 0.0
    %760 = vmatpush1.msra.mxu0 0.0
    %761 = vmatprep.subr.mxu0 0.0
    %762 = vmatpush1.msra.mxu0 0.0
    %763 = vmatprep.subr.mxu0 0.0
    %764 = vmatpush1.msra.mxu0 0.0
    %765 = vmatprep.subr.mxu0 0.0
    %766 = vmatpush1.msra.mxu0 0.0
    %767 = vmatprep.subr.mxu0 0.0
    %768 = vmatpush1.msra.mxu0 0.0
    %769 = vmatprep.subr.mxu0 0.0
    %770 = vmatpush1.msra.mxu0 0.0
    %771 = vmatprep.subr.mxu0 0.0
    %772 = vmatpush1.msra.mxu0 0.0
    %773 = vmatprep.subr.mxu0 0.0
    %774 = vmatpush1.msra.mxu0 0.0
    %775 = vmatprep.subr.mxu0 0.0
    %776 = vmatpush1.msra.mxu0 0.0
    %777 = vmatprep.subr.mxu0 0.0
    %778 = vmatpush1.msra.mxu0 0.0
    %779 = vmatprep.subr.mxu0 0.0
    %780 = vmatpush1.msra.mxu0 0.0
    %781 = vmatprep.subr.mxu0 0.0
    %782 = vmatpush1.msra.mxu0 0.0
    %783 = vmatprep.subr.mxu0 0.0
    %784 = vmatpush1.msra.mxu0 0.0
    %785 = vmatprep.subr.mxu0 0.0
    %786 = vmatpush1.msra.mxu0 0.0
    %787 = vmatprep.subr.mxu0 0.0
    %788 = vmatpush1.msra.mxu0 0.0
    %789 = vmatprep.subr.mxu0 0.0
    %790 = vmatpush1.msra.mxu0 0.0
    %791 = vmatprep.mubr.f32.mxu0 0.0
    %792 = vmatmul.mubr.f32.gmra.mrb[0].mxu0 %v725
    %v793 = vpop.f32.mrb[0].mxu0
    %v794 = vadd.f32 %v285, %v793
    %v795 = vpop.f32.mrb[0].mxu0
    %796 = vdwg.mxu0
    %v797 = vxor.u32 %v794, 2147483648
    %v798 = vmul.f32 %v797, 1.442695
    %v799 = vpow.pop %v798
    %v800 = vadd.f32 %v799, 1.0
    %v801 = vrcp.pop %v800
    %v802 = vmul.f32 1.0, %v801
    %v803 = vtanh.pop %v794
    %v804 = vmul.f32 %v802, %v705
    %806 = vrot.lane.b32.xlu0 %v803, 64
    %v807 = vpop.permute.xlu0 %806
    %v809 = vmul.f32 %v802, %v807
    %811 = vrot.lane.b32.xlu0 %v809, 32
    %v812 = vpop.permute.xlu0 %811
    %v814 = vadd.f32 %v804, %v812
    %v815 = vtanh.pop %v814
    %817 = vrot.lane.b32.xlu0 %v815, 64
    %v818 = vpop.permute.xlu0 %817
    %v820 = vmul.f32 %v802, %v818
    %v821 = vld [vmem:[#allocation3 + $0x8] sm:$0x3]
    %823 = vrot.lane.b32.xlu0 %v820, 32
    %v824 = vpop.permute.xlu0 %823
    %v826 = vadd.f32 %v821, %v824
    %827 = vst.msk [vmem:[#allocation3 + $0x8] sm:$0x3] %vm163, %v826
    %v828 = vld [vmem:[#allocation2 + $0xa] sm:$0x3]
    %829 = vrot.lane.b32.xlu0 %v820, 64
    %v830 = vpop.permute.xlu0 %829
    %v832 = vsel %vm160, %v828, %v830
    %v834 = vsel %vm287, %v832, 0
    %836 = vmatprep.subr.mxu0 0.0
    %837 = vmatpush1.msra.mxu0 %v261
    %838 = vmatprep.subr.mxu0 0.0
    %839 = vmatpush1.msra.mxu0 %v262
    %840 = vmatprep.subr.mxu0 0.0
    %841 = vmatpush1.msra.mxu0 %v263
    %842 = vmatprep.subr.mxu0 0.0
    %843 = vmatpush1.msra.mxu0 %v264
    %844 = vmatprep.subr.mxu0 0.0
    %845 = vmatpush1.msra.mxu0 %v265
    %846 = vmatprep.subr.mxu0 0.0
    %847 = vmatpush1.msra.mxu0 %v266
    %848 = vmatprep.subr.mxu0 0.0
    %849 = vmatpush1.msra.mxu0 %v267
    %850 = vmatprep.subr.mxu0 0.0
    %851 = vmatpush1.msra.mxu0 %v268
    %852 = vmatprep.subr.mxu0 0.0
    %853 = vmatpush1.msra.mxu0 0.0
    %854 = vmatprep.subr.mxu0 0.0
    %855 = vmatpush1.msra.mxu0 0.0
    %856 = vmatprep.subr.mxu0 0.0
    %857 = vmatpush1.msra.mxu0 0.0
    %858 = vmatprep.subr.mxu0 0.0
    %859 = vmatpush1.msra.mxu0 0.0
    %860 = vmatprep.subr.mxu0 0.0
    %861 = vmatpush1.msra.mxu0 0.0
    %862 = vmatprep.subr.mxu0 0.0
    %863 = vmatpush1.msra.mxu0 0.0
    %864 = vmatprep.subr.mxu0 0.0
    %865 = vmatpush1.msra.mxu0 0.0
    %866 = vmatprep.subr.mxu0 0.0
    %867 = vmatpush1.msra.mxu0 0.0
    %868 = vmatprep.subr.mxu0 0.0
    %869 = vmatpush1.msra.mxu0 0.0
    %870 = vmatprep.subr.mxu0 0.0
    %871 = vmatpush1.msra.mxu0 0.0
    %872 = vmatprep.subr.mxu0 0.0
    %873 = vmatpush1.msra.mxu0 0.0
    %874 = vmatprep.subr.mxu0 0.0
    %875 = vmatpush1.msra.mxu0 0.0
    %876 = vmatprep.subr.mxu0 0.0
    %877 = vmatpush1.msra.mxu0 0.0
    %878 = vmatprep.subr.mxu0 0.0
    %879 = vmatpush1.msra.mxu0 0.0
    %880 = vmatprep.subr.mxu0 0.0
    %881 = vmatpush1.msra.mxu0 0.0
    %882 = vmatprep.subr.mxu0 0.0
    %883 = vmatpush1.msra.mxu0 0.0
    %884 = vmatprep.subr.mxu0 0.0
    %885 = vmatpush1.msra.mxu0 0.0
    %886 = vmatprep.subr.mxu0 0.0
    %887 = vmatpush1.msra.mxu0 0.0
    %888 = vmatprep.subr.mxu0 0.0
    %889 = vmatpush1.msra.mxu0 0.0
    %890 = vmatprep.subr.mxu0 0.0
    %891 = vmatpush1.msra.mxu0 0.0
    %892 = vmatprep.subr.mxu0 0.0
    %893 = vmatpush1.msra.mxu0 0.0
    %894 = vmatprep.subr.mxu0 0.0
    %895 = vmatpush1.msra.mxu0 0.0
    %896 = vmatprep.subr.mxu0 0.0
    %897 = vmatpush1.msra.mxu0 0.0
    %898 = vmatprep.subr.mxu0 0.0
    %899 = vmatpush1.msra.mxu0 0.0
    %900 = vmatprep.mubr.f32.mxu0 0.0
    %901 = vmatmul.mubr.f32.gmra.mrb[0].mxu0 %v834
    %v902 = vpop.f32.mrb[0].mxu0
    %v903 = vadd.f32 %v285, %v902
    %v904 = vpop.f32.mrb[0].mxu0
    %905 = vdwg.mxu0
    %v906 = vxor.u32 %v903, 2147483648
    %v907 = vmul.f32 %v906, 1.442695
    %v908 = vpow.pop %v907
    %v909 = vadd.f32 %v908, 1.0
    %v910 = vrcp.pop %v909
    %v911 = vmul.f32 1.0, %v910
    %v912 = vtanh.pop %v903
    %v913 = vmul.f32 %v911, %v814
    %915 = vrot.lane.b32.xlu0 %v912, 64
    %v916 = vpop.permute.xlu0 %915
    %v918 = vmul.f32 %v911, %v916
    %920 = vrot.lane.b32.xlu0 %v918, 32
    %v921 = vpop.permute.xlu0 %920
    %v923 = vadd.f32 %v913, %v921
    %v924 = vtanh.pop %v923
    %926 = vrot.lane.b32.xlu0 %v924, 64
    %v927 = vpop.permute.xlu0 %926
    %v929 = vmul.f32 %v911, %v927
    %v930 = vld [vmem:[#allocation3 + $0xa] sm:$0x3]
    %932 = vrot.lane.b32.xlu0 %v929, 32
    %v933 = vpop.permute.xlu0 %932
    %v935 = vadd.f32 %v930, %v933
    %936 = vst.msk [vmem:[#allocation3 + $0xa] sm:$0x3] %vm163, %v935
    %v937 = vld [vmem:[#allocation2 + $0xc] sm:$0x3]
    %938 = vrot.lane.b32.xlu0 %v929, 64
    %v939 = vpop.permute.xlu0 %938
    %v941 = vsel %vm160, %v937, %v939
    %v943 = vsel %vm287, %v941, 0
    %945 = vmatprep.subr.mxu0 0.0
    %946 = vmatpush1.msra.mxu0 %v261
    %947 = vmatprep.subr.mxu0 0.0
    %948 = vmatpush1.msra.mxu0 %v262
    %949 = vmatprep.subr.mxu0 0.0
    %950 = vmatpush1.msra.mxu0 %v263
    %951 = vmatprep.subr.mxu0 0.0
    %952 = vmatpush1.msra.mxu0 %v264
    %953 = vmatprep.subr.mxu0 0.0
    %954 = vmatpush1.msra.mxu0 %v265
    %955 = vmatprep.subr.mxu0 0.0
    %956 = vmatpush1.msra.mxu0 %v266
    %957 = vmatprep.subr.mxu0 0.0
    %958 = vmatpush1.msra.mxu0 %v267
    %959 = vmatprep.subr.mxu0 0.0
    %960 = vmatpush1.msra.mxu0 %v268
    %961 = vmatprep.subr.mxu0 0.0
    %962 = vmatpush1.msra.mxu0 0.0
    %963 = vmatprep.subr.mxu0 0.0
    %964 = vmatpush1.msra.mxu0 0.0
    %965 = vmatprep.subr.mxu0 0.0
    %966 = vmatpush1.msra.mxu0 0.0
    %967 = vmatprep.subr.mxu0 0.0
    %968 = vmatpush1.msra.mxu0 0.0
    %969 = vmatprep.subr.mxu0 0.0
    %970 = vmatpush1.msra.mxu0 0.0
    %971 = vmatprep.subr.mxu0 0.0
    %972 = vmatpush1.msra.mxu0 0.0
    %973 = vmatprep.subr.mxu0 0.0
    %974 = vmatpush1.msra.mxu0 0.0
    %975 = vmatprep.subr.mxu0 0.0
    %976 = vmatpush1.msra.mxu0 0.0
    %977 = vmatprep.subr.mxu0 0.0
    %978 = vmatpush1.msra.mxu0 0.0
    %979 = vmatprep.subr.mxu0 0.0
    %980 = vmatpush1.msra.mxu0 0.0
    %981 = vmatprep.subr.mxu0 0.0
    %982 = vmatpush1.msra.mxu0 0.0
    %983 = vmatprep.subr.mxu0 0.0
    %984 = vmatpush1.msra.mxu0 0.0
    %985 = vmatprep.subr.mxu0 0.0
    %986 = vmatpush1.msra.mxu0 0.0
    %987 = vmatprep.subr.mxu0 0.0
    %988 = vmatpush1.msra.mxu0 0.0
    %989 = vmatprep.subr.mxu0 0.0
    %990 = vmatpush1.msra.mxu0 0.0
    %991 = vmatprep.subr.mxu0 0.0
    %992 = vmatpush1.msra.mxu0 0.0
    %993 = vmatprep.subr.mxu0 0.0
    %994 = vmatpush1.msra.mxu0 0.0
    %995 = vmatprep.subr.mxu0 0.0
    %996 = vmatpush1.msra.mxu0 0.0
    %997 = vmatprep.subr.mxu0 0.0
    %998 = vmatpush1.msra.mxu0 0.0
    %999 = vmatprep.subr.mxu0 0.0
    %1000 = vmatpush1.msra.mxu0 0.0
    %1001 = vmatprep.subr.mxu0 0.0
    %1002 = vmatpush1.msra.mxu0 0.0
    %1003 = vmatprep.subr.mxu0 0.0
    %1004 = vmatpush1.msra.mxu0 0.0
    %1005 = vmatprep.subr.mxu0 0.0
    %1006 = vmatpush1.msra.mxu0 0.0
    %1007 = vmatprep.subr.mxu0 0.0
    %1008 = vmatpush1.msra.mxu0 0.0
    %1009 = vmatprep.mubr.f32.mxu0 0.0
    %1010 = vmatmul.mubr.f32.gmra.mrb[0].mxu0 %v943
    %v1011 = vpop.f32.mrb[0].mxu0
    %v1012 = vadd.f32 %v285, %v1011
    %v1013 = vpop.f32.mrb[0].mxu0
    %1014 = vdwg.mxu0
    %v1015 = vxor.u32 %v1012, 2147483648
    %v1016 = vmul.f32 %v1015, 1.442695
    %v1017 = vpow.pop %v1016
    %v1018 = vadd.f32 %v1017, 1.0
    %v1019 = vrcp.pop %v1018
    %v1020 = vmul.f32 1.0, %v1019
    %v1021 = vtanh.pop %v1012
    %v1022 = vmul.f32 %v1020, %v923
    %1024 = vrot.lane.b32.xlu0 %v1021, 64
    %v1025 = vpop.permute.xlu0 %1024
    %v1027 = vmul.f32 %v1020, %v1025
    %1029 = vrot.lane.b32.xlu0 %v1027, 32
    %v1030 = vpop.permute.xlu0 %1029
    %v1032 = vadd.f32 %v1022, %v1030
    %v1033 = vtanh.pop %v1032
    %1035 = vrot.lane.b32.xlu0 %v1033, 64
    %v1036 = vpop.permute.xlu0 %1035
    %v1038 = vmul.f32 %v1020, %v1036
    %v1039 = vld [vmem:[#allocation3 + $0xc] sm:$0x3]
    %1041 = vrot.lane.b32.xlu0 %v1038, 32
    %v1042 = vpop.permute.xlu0 %1041
    %v1044 = vadd.f32 %v1039, %v1042
    %1045 = vst.msk [vmem:[#allocation3 + $0xc] sm:$0x3] %vm163, %v1044
    %v1046 = vld [vmem:[#allocation2 + $0xe] sm:$0x3]
    %1047 = vrot.lane.b32.xlu0 %v1038, 64
    %v1048 = vpop.permute.xlu0 %1047
    %v1050 = vsel %vm160, %v1046, %v1048
    %v1052 = vsel %vm287, %v1050, 0
    %1054 = vmatprep.subr.mxu0 0.0
    %1055 = vmatpush1.msra.mxu0 %v261
    %1056 = vmatprep.subr.mxu0 0.0
    %1057 = vmatpush1.msra.mxu0 %v262
    %1058 = vmatprep.subr.mxu0 0.0
    %1059 = vmatpush1.msra.mxu0 %v263
    %1060 = vmatprep.subr.mxu0 0.0
    %1061 = vmatpush1.msra.mxu0 %v264
    %1062 = vmatprep.subr.mxu0 0.0
    %1063 = vmatpush1.msra.mxu0 %v265
    %1064 = vmatprep.subr.mxu0 0.0
    %1065 = vmatpush1.msra.mxu0 %v266
    %1066 = vmatprep.subr.mxu0 0.0
    %1067 = vmatpush1.msra.mxu0 %v267
    %1068 = vmatprep.subr.mxu0 0.0
    %1069 = vmatpush1.msra.mxu0 %v268
    %1070 = vmatprep.subr.mxu0 0.0
    %1071 = vmatpush1.msra.mxu0 0.0
    %1072 = vmatprep.subr.mxu0 0.0
    %1073 = vmatpush1.msra.mxu0 0.0
    %1074 = vmatprep.subr.mxu0 0.0
    %1075 = vmatpush1.msra.mxu0 0.0
    %1076 = vmatprep.subr.mxu0 0.0
    %1077 = vmatpush1.msra.mxu0 0.0
    %1078 = vmatprep.subr.mxu0 0.0
    %1079 = vmatpush1.msra.mxu0 0.0
    %1080 = vmatprep.subr.mxu0 0.0
    %1081 = vmatpush1.msra.mxu0 0.0
    %1082 = vmatprep.subr.mxu0 0.0
    %1083 = vmatpush1.msra.mxu0 0.0
    %1084 = vmatprep.subr.mxu0 0.0
    %1085 = vmatpush1.msra.mxu0 0.0
    %1086 = vmatprep.subr.mxu0 0.0
    %1087 = vmatpush1.msra.mxu0 0.0
    %1088 = vmatprep.subr.mxu0 0.0
    %1089 = vmatpush1.msra.mxu0 0.0
    %1090 = vmatprep.subr.mxu0 0.0
    %1091 = vmatpush1.msra.mxu0 0.0
    %1092 = vmatprep.subr.mxu0 0.0
    %1093 = vmatpush1.msra.mxu0 0.0
    %1094 = vmatprep.subr.mxu0 0.0
    %1095 = vmatpush1.msra.mxu0 0.0
    %1096 = vmatprep.subr.mxu0 0.0
    %1097 = vmatpush1.msra.mxu0 0.0
    %1098 = vmatprep.subr.mxu0 0.0
    %1099 = vmatpush1.msra.mxu0 0.0
    %1100 = vmatprep.subr.mxu0 0.0
    %1101 = vmatpush1.msra.mxu0 0.0
    %1102 = vmatprep.subr.mxu0 0.0
    %1103 = vmatpush1.msra.mxu0 0.0
    %1104 = vmatprep.subr.mxu0 0.0
    %1105 = vmatpush1.msra.mxu0 0.0
    %1106 = vmatprep.subr.mxu0 0.0
    %1107 = vmatpush1.msra.mxu0 0.0
    %1108 = vmatprep.subr.mxu0 0.0
    %1109 = vmatpush1.msra.mxu0 0.0
    %1110 = vmatprep.subr.mxu0 0.0
    %1111 = vmatpush1.msra.mxu0 0.0
    %1112 = vmatprep.subr.mxu0 0.0
    %1113 = vmatpush1.msra.mxu0 0.0
    %1114 = vmatprep.subr.mxu0 0.0
    %1115 = vmatpush1.msra.mxu0 0.0
    %1116 = vmatprep.subr.mxu0 0.0
    %1117 = vmatpush1.msra.mxu0 0.0
    %1118 = vmatprep.mubr.f32.mxu0 0.0
    %1119 = vmatmul.mubr.f32.gmra.mrb[0].mxu0 %v1052
    %v1120 = vpop.f32.mrb[0].mxu0
    %v1121 = vadd.f32 %v285, %v1120
    %v1122 = vpop.f32.mrb[0].mxu0
    %1123 = vdwg.mxu0
    %v1124 = vxor.u32 %v1121, 2147483648
    %v1125 = vmul.f32 %v1124, 1.442695
    %v1126 = vpow.pop %v1125
    %v1127 = vadd.f32 %v1126, 1.0
    %v1128 = vrcp.pop %v1127
    %v1129 = vmul.f32 1.0, %v1128
    %v1130 = vtanh.pop %v1121
    %v1131 = vmul.f32 %v1129, %v1032
    %1133 = vrot.lane.b32.xlu0 %v1130, 64
    %v1134 = vpop.permute.xlu0 %1133
    %v1136 = vmul.f32 %v1129, %v1134
    %1138 = vrot.lane.b32.xlu0 %v1136, 32
    %v1139 = vpop.permute.xlu0 %1138
    %v1141 = vadd.f32 %v1131, %v1139
    %v1142 = vtanh.pop %v1141
    %1144 = vrot.lane.b32.xlu0 %v1142, 64
    %v1145 = vpop.permute.xlu0 %1144
    %v1147 = vmul.f32 %v1129, %v1145
    %v1148 = vld [vmem:[#allocation3 + $0xe] sm:$0x3]
    %1150 = vrot.lane.b32.xlu0 %v1147, 32
    %v1151 = vpop.permute.xlu0 %1150
    %v1153 = vadd.f32 %v1148, %v1151
    %1154 = vst.msk [vmem:[#allocation3 + $0xe] sm:$0x3] %vm163, %v1153
    %v1155 = vld [vmem:[#allocation2 + $0x10] sm:$0x3]
    %1156 = vrot.lane.b32.xlu0 %v1147, 64
    %v1157 = vpop.permute.xlu0 %1156
    %v1159 = vsel %vm160, %v1155, %v1157
    %v1161 = vsel %vm287, %v1159, 0
    %1163 = vmatprep.subr.mxu0 0.0
    %1164 = vmatpush1.msra.mxu0 %v261
    %1165 = vmatprep.subr.mxu0 0.0
    %1166 = vmatpush1.msra.mxu0 %v262
    %1167 = vmatprep.subr.mxu0 0.0
    %1168 = vmatpush1.msra.mxu0 %v263
    %1169 = vmatprep.subr.mxu0 0.0
    %1170 = vmatpush1.msra.mxu0 %v264
    %1171 = vmatprep.subr.mxu0 0.0
    %1172 = vmatpush1.msra.mxu0 %v265
    %1173 = vmatprep.subr.mxu0 0.0
    %1174 = vmatpush1.msra.mxu0 %v266
    %1175 = vmatprep.subr.mxu0 0.0
    %1176 = vmatpush1.msra.mxu0 %v267
    %1177 = vmatprep.subr.mxu0 0.0
    %1178 = vmatpush1.msra.mxu0 %v268
    %1179 = vmatprep.subr.mxu0 0.0
    %1180 = vmatpush1.msra.mxu0 0.0
    %1181 = vmatprep.subr.mxu0 0.0
    %1182 = vmatpush1.msra.mxu0 0.0
    %1183 = vmatprep.subr.mxu0 0.0
    %1184 = vmatpush1.msra.mxu0 0.0
    %1185 = vmatprep.subr.mxu0 0.0
    %1186 = vmatpush1.msra.mxu0 0.0
    %1187 = vmatprep.subr.mxu0 0.0
    %1188 = vmatpush1.msra.mxu0 0.0
    %1189 = vmatprep.subr.mxu0 0.0
    %1190 = vmatpush1.msra.mxu0 0.0
    %1191 = vmatprep.subr.mxu0 0.0
    %1192 = vmatpush1.msra.mxu0 0.0
    %1193 = vmatprep.subr.mxu0 0.0
    %1194 = vmatpush1.msra.mxu0 0.0
    %1195 = vmatprep.subr.mxu0 0.0
    %1196 = vmatpush1.msra.mxu0 0.0
    %1197 = vmatprep.subr.mxu0 0.0
    %1198 = vmatpush1.msra.mxu0 0.0
    %1199 = vmatprep.subr.mxu0 0.0
    %1200 = vmatpush1.msra.mxu0 0.0
    %1201 = vmatprep.subr.mxu0 0.0
    %1202 = vmatpush1.msra.mxu0 0.0
    %1203 = vmatprep.subr.mxu0 0.0
    %1204 = vmatpush1.msra.mxu0 0.0
    %1205 = vmatprep.subr.mxu0 0.0
    %1206 = vmatpush1.msra.mxu0 0.0
    %1207 = vmatprep.subr.mxu0 0.0
    %1208 = vmatpush1.msra.mxu0 0.0
    %1209 = vmatprep.subr.mxu0 0.0
    %1210 = vmatpush1.msra.mxu0 0.0
    %1211 = vmatprep.subr.mxu0 0.0
    %1212 = vmatpush1.msra.mxu0 0.0
    %1213 = vmatprep.subr.mxu0 0.0
    %1214 = vmatpush1.msra.mxu0 0.0
    %1215 = vmatprep.subr.mxu0 0.0
    %1216 = vmatpush1.msra.mxu0 0.0
    %1217 = vmatprep.subr.mxu0 0.0
    %1218 = vmatpush1.msra.mxu0 0.0
    %1219 = vmatprep.subr.mxu0 0.0
    %1220 = vmatpush1.msra.mxu0 0.0
    %1221 = vmatprep.subr.mxu0 0.0
    %1222 = vmatpush1.msra.mxu0 0.0
    %1223 = vmatprep.subr.mxu0 0.0
    %1224 = vmatpush1.msra.mxu0 0.0
    %1225 = vmatprep.subr.mxu0 0.0
    %1226 = vmatpush1.msra.mxu0 0.0
    %1227 = vmatprep.mubr.f32.mxu0 0.0
    %1228 = vmatmul.mubr.f32.gmra.mrb[0].mxu0 %v1161
    %v1229 = vpop.f32.mrb[0].mxu0
    %v1230 = vadd.f32 %v285, %v1229
    %v1231 = vpop.f32.mrb[0].mxu0
    %1232 = vdwg.mxu0
    %v1233 = vxor.u32 %v1230, 2147483648
    %v1234 = vmul.f32 %v1233, 1.442695
    %v1235 = vpow.pop %v1234
    %v1236 = vadd.f32 %v1235, 1.0
    %v1237 = vrcp.pop %v1236
    %v1238 = vmul.f32 1.0, %v1237
    %v1239 = vtanh.pop %v1230
    %v1240 = vmul.f32 %v1238, %v1141
    %1242 = vrot.lane.b32.xlu0 %v1239, 64
    %v1243 = vpop.permute.xlu0 %1242
    %v1245 = vmul.f32 %v1238, %v1243
    %1247 = vrot.lane.b32.xlu0 %v1245, 32
    %v1248 = vpop.permute.xlu0 %1247
    %v1250 = vadd.f32 %v1240, %v1248
    %v1251 = vtanh.pop %v1250
    %1253 = vrot.lane.b32.xlu0 %v1251, 64
    %v1254 = vpop.permute.xlu0 %1253
    %v1256 = vmul.f32 %v1238, %v1254
    %v1257 = vld [vmem:[#allocation3 + $0x10] sm:$0x3]
    %1259 = vrot.lane.b32.xlu0 %v1256, 32
    %v1260 = vpop.permute.xlu0 %1259
    %v1262 = vadd.f32 %v1257, %v1260
    %1263 = vst.msk [vmem:[#allocation3 + $0x10] sm:$0x3] %vm163, %v1262
    %v1264 = vld [vmem:[#allocation3] sm:$0x3]
    %v1265 = vsel %vm160, %v1264, 0.0
    %v1267 = vlaneseq
    %v1268 = vshrl.u32 %v1267, 7
    %v1269 = vsub.s32 0, %v1268
    %v1270 = vrot.slane %v278, %v1269
    %v1273 = vsel %vm287, %v1265, 0
    %1275 = vmatprep.subr.mxu0 0.0
    %1276 = vmatpush1.msra.mxu0 %v270
    %1277 = vmatprep.subr.mxu0 0.0
    %1278 = vmatpush1.msra.mxu0 %v271
    %1279 = vmatprep.subr.mxu0 0.0
    %1280 = vmatpush1.msra.mxu0 %v272
    %1281 = vmatprep.subr.mxu0 0.0
    %1282 = vmatpush1.msra.mxu0 %v273
    %1283 = vmatprep.subr.mxu0 0.0
    %1284 = vmatpush1.msra.mxu0 %v274
    %1285 = vmatprep.subr.mxu0 0.0
    %1286 = vmatpush1.msra.mxu0 %v275
    %1287 = vmatprep.subr.mxu0 0.0
    %1288 = vmatpush1.msra.mxu0 %v276
    %1289 = vmatprep.subr.mxu0 0.0
    %1290 = vmatpush1.msra.mxu0 %v277
    %1291 = vmatprep.subr.mxu0 0.0
    %1292 = vmatpush1.msra.mxu0 0.0
    %1293 = vmatprep.subr.mxu0 0.0
    %1294 = vmatpush1.msra.mxu0 0.0
    %1295 = vmatprep.subr.mxu0 0.0
    %1296 = vmatpush1.msra.mxu0 0.0
    %1297 = vmatprep.subr.mxu0 0.0
    %1298 = vmatpush1.msra.mxu0 0.0
    %1299 = vmatprep.subr.mxu0 0.0
    %1300 = vmatpush1.msra.mxu0 0.0
    %1301 = vmatprep.subr.mxu0 0.0
    %1302 = vmatpush1.msra.mxu0 0.0
    %1303 = vmatprep.subr.mxu0 0.0
    %1304 = vmatpush1.msra.mxu0 0.0
    %1305 = vmatprep.subr.mxu0 0.0
    %1306 = vmatpush1.msra.mxu0 0.0
    %1307 = vmatprep.subr.mxu0 0.0
    %1308 = vmatpush1.msra.mxu0 0.0
    %1309 = vmatprep.subr.mxu0 0.0
    %1310 = vmatpush1.msra.mxu0 0.0
    %1311 = vmatprep.subr.mxu0 0.0
    %1312 = vmatpush1.msra.mxu0 0.0
    %1313 = vmatprep.subr.mxu0 0.0
    %1314 = vmatpush1.msra.mxu0 0.0
    %1315 = vmatprep.subr.mxu0 0.0
    %1316 = vmatpush1.msra.mxu0 0.0
    %1317 = vmatprep.subr.mxu0 0.0
    %1318 = vmatpush1.msra.mxu0 0.0
    %1319 = vmatprep.subr.mxu0 0.0
    %1320 = vmatpush1.msra.mxu0 0.0
    %1321 = vmatprep.subr.mxu0 0.0
    %1322 = vmatpush1.msra.mxu0 0.0
    %1323 = vmatprep.subr.mxu0 0.0
    %1324 = vmatpush1.msra.mxu0 0.0
    %1325 = vmatprep.subr.mxu0 0.0
    %1326 = vmatpush1.msra.mxu0 0.0
    %1327 = vmatprep.subr.mxu0 0.0
    %1328 = vmatpush1.msra.mxu0 0.0
    %1329 = vmatprep.subr.mxu0 0.0
    %1330 = vmatpush1.msra.mxu0 0.0
    %1331 = vmatprep.subr.mxu0 0.0
    %1332 = vmatpush1.msra.mxu0 0.0
    %1333 = vmatprep.subr.mxu0 0.0
    %1334 = vmatpush1.msra.mxu0 0.0
    %1335 = vmatprep.subr.mxu0 0.0
    %1336 = vmatpush1.msra.mxu0 0.0
    %1337 = vmatprep.subr.mxu0 0.0
    %1338 = vmatpush1.msra.mxu0 0.0
    %1339 = vmatprep.mubr.f32.mxu0 0.0
    %1340 = vmatmul.mubr.f32.gmra.mrb[0].mxu0 %v1273
    %v1341 = vpop.f32.mrb[0].mxu0
    %v1342 = vadd.f32 %v1270, %v1341
    %v1343 = vpop.f32.mrb[0].mxu0
    %1344 = vdwg.mxu0
    %v1345 = vxor.u32 %v1342, 2147483648
    %v1346 = vmul.f32 %v1345, 1.442695
    %v1347 = vpow.pop %v1346
    %v1348 = vadd.f32 %v1347, 1.0
    %v1349 = vrcp.pop %v1348
    %v1350 = vmul.f32 1.0, %v1349
    %v1351 = vtanh.pop %v1342
    %v1352 = vmul.f32 %v1350, 0.0
    %1354 = vrot.lane.b32.xlu0 %v1351, 64
    %v1355 = vpop.permute.xlu0 %1354
    %v1357 = vmul.f32 %v1350, %v1355
    %1359 = vrot.lane.b32.xlu0 %v1357, 32
    %v1360 = vpop.permute.xlu0 %1359
    %v1362 = vadd.f32 %v1352, %v1360
    %v1363 = vtanh.pop %v1362
    %1365 = vrot.lane.b32.xlu0 %v1363, 64
    %v1366 = vpop.permute.xlu0 %1365
    %v1368 = vmul.f32 %v1350, %v1366
    %1370 = vrot.lane.b32.xlu0 %v1368, 32
    %v1371 = vpop.permute.xlu0 %1370
    %v1373 = vadd.f32 %v1264, %v1371
    %1374 = vst.msk [vmem:[#allocation3] sm:$0x3] %vm163, %v1373
    %v1375 = vld [vmem:[#allocation3 + $0x2] sm:$0x3]
    %1376 = vrot.lane.b32.xlu0 %v1368, 64
    %v1377 = vpop.permute.xlu0 %1376
    %v1379 = vsel %vm160, %v1375, %v1377
    %v1381 = vsel %vm287, %v1379, 0
    %1383 = vmatprep.subr.mxu0 0.0
    %1384 = vmatpush1.msra.mxu0 %v270
    %1385 = vmatprep.subr.mxu0 0.0
    %1386 = vmatpush1.msra.mxu0 %v271
    %1387 = vmatprep.subr.mxu0 0.0
    %1388 = vmatpush1.msra.mxu0 %v272
    %1389 = vmatprep.subr.mxu0 0.0
    %1390 = vmatpush1.msra.mxu0 %v273
    %1391 = vmatprep.subr.mxu0 0.0
    %1392 = vmatpush1.msra.mxu0 %v274
    %1393 = vmatprep.subr.mxu0 0.0
    %1394 = vmatpush1.msra.mxu0 %v275
    %1395 = vmatprep.subr.mxu0 0.0
    %1396 = vmatpush1.msra.mxu0 %v276
    %1397 = vmatprep.subr.mxu0 0.0
    %1398 = vmatpush1.msra.mxu0 %v277
    %1399 = vmatprep.subr.mxu0 0.0
    %1400 = vmatpush1.msra.mxu0 0.0
    %1401 = vmatprep.subr.mxu0 0.0
    %1402 = vmatpush1.msra.mxu0 0.0
    %1403 = vmatprep.subr.mxu0 0.0
    %1404 = vmatpush1.msra.mxu0 0.0
    %1405 = vmatprep.subr.mxu0 0.0
    %1406 = vmatpush1.msra.mxu0 0.0
    %1407 = vmatprep.subr.mxu0 0.0
    %1408 = vmatpush1.msra.mxu0 0.0
    %1409 = vmatprep.subr.mxu0 0.0
    %1410 = vmatpush1.msra.mxu0 0.0
    %1411 = vmatprep.subr.mxu0 0.0
    %1412 = vmatpush1.msra.mxu0 0.0
    %1413 = vmatprep.subr.mxu0 0.0
    %1414 = vmatpush1.msra.mxu0 0.0
    %1415 = vmatprep.subr.mxu0 0.0
    %1416 = vmatpush1.msra.mxu0 0.0
    %1417 = vmatprep.subr.mxu0 0.0
    %1418 = vmatpush1.msra.mxu0 0.0
    %1419 = vmatprep.subr.mxu0 0.0
    %1420 = vmatpush1.msra.mxu0 0.0
    %1421 = vmatprep.subr.mxu0 0.0
    %1422 = vmatpush1.msra.mxu0 0.0
    %1423 = vmatprep.subr.mxu0 0.0
    %1424 = vmatpush1.msra.mxu0 0.0
    %1425 = vmatprep.subr.mxu0 0.0
    %1426 = vmatpush1.msra.mxu0 0.0
    %1427 = vmatprep.subr.mxu0 0.0
    %1428 = vmatpush1.msra.mxu0 0.0
    %1429 = vmatprep.subr.mxu0 0.0
    %1430 = vmatpush1.msra.mxu0 0.0
    %1431 = vmatprep.subr.mxu0 0.0
    %1432 = vmatpush1.msra.mxu0 0.0
    %1433 = vmatprep.subr.mxu0 0.0
    %1434 = vmatpush1.msra.mxu0 0.0
    %1435 = vmatprep.subr.mxu0 0.0
    %1436 = vmatpush1.msra.mxu0 0.0
    %1437 = vmatprep.subr.mxu0 0.0
    %1438 = vmatpush1.msra.mxu0 0.0
    %1439 = vmatprep.subr.mxu0 0.0
    %1440 = vmatpush1.msra.mxu0 0.0
    %1441 = vmatprep.subr.mxu0 0.0
    %1442 = vmatpush1.msra.mxu0 0.0
    %1443 = vmatprep.subr.mxu0 0.0
    %1444 = vmatpush1.msra.mxu0 0.0
    %1445 = vmatprep.subr.mxu0 0.0
    %1446 = vmatpush1.msra.mxu0 0.0
    %1447 = vmatprep.mubr.f32.mxu0 0.0
    %1448 = vmatmul.mubr.f32.gmra.mrb[0].mxu0 %v1381
    %v1449 = vpop.f32.mrb[0].mxu0
    %v1450 = vadd.f32 %v1270, %v1449
    %v1451 = vpop.f32.mrb[0].mxu0
    %1452 = vdwg.mxu0
    %v1453 = vxor.u32 %v1450, 2147483648
    %v1454 = vmul.f32 %v1453, 1.442695
    %v1455 = vpow.pop %v1454
    %v1456 = vadd.f32 %v1455, 1.0
    %v1457 = vrcp.pop %v1456
    %v1458 = vmul.f32 1.0, %v1457
    %v1459 = vtanh.pop %v1450
    %v1460 = vmul.f32 %v1458, %v1362
    %1462 = vrot.lane.b32.xlu0 %v1459, 64
    %v1463 = vpop.permute.xlu0 %1462
    %v1465 = vmul.f32 %v1458, %v1463
    %1467 = vrot.lane.b32.xlu0 %v1465, 32
    %v1468 = vpop.permute.xlu0 %1467
    %v1470 = vadd.f32 %v1460, %v1468
    %v1471 = vtanh.pop %v1470
    %1473 = vrot.lane.b32.xlu0 %v1471, 64
    %v1474 = vpop.permute.xlu0 %1473
    %v1476 = vmul.f32 %v1458, %v1474
    %1478 = vrot.lane.b32.xlu0 %v1476, 32
    %v1479 = vpop.permute.xlu0 %1478
    %v1481 = vadd.f32 %v1375, %v1479
    %1482 = vst.msk [vmem:[#allocation3 + $0x2] sm:$0x3] %vm163, %v1481
    %v1483 = vld [vmem:[#allocation3 + $0x4] sm:$0x3]
    %1484 = vrot.lane.b32.xlu0 %v1476, 64
    %v1485 = vpop.permute.xlu0 %1484
    %v1487 = vsel %vm160, %v1483, %v1485
    %v1489 = vsel %vm287, %v1487, 0
    %1491 = vmatprep.subr.mxu0 0.0
    %1492 = vmatpush1.msra.mxu0 %v270
    %1493 = vmatprep.subr.mxu0 0.0
    %1494 = vmatpush1.msra.mxu0 %v271
    %1495 = vmatprep.subr.mxu0 0.0
    %1496 = vmatpush1.msra.mxu0 %v272
    %1497 = vmatprep.subr.mxu0 0.0
    %1498 = vmatpush1.msra.mxu0 %v273
    %1499 = vmatprep.subr.mxu0 0.0
    %1500 = vmatpush1.msra.mxu0 %v274
    %1501 = vmatprep.subr.mxu0 0.0
    %1502 = vmatpush1.msra.mxu0 %v275
    %1503 = vmatprep.subr.mxu0 0.0
    %1504 = vmatpush1.msra.mxu0 %v276
    %1505 = vmatprep.subr.mxu0 0.0
    %1506 = vmatpush1.msra.mxu0 %v277
    %1507 = vmatprep.subr.mxu0 0.0
    %1508 = vmatpush1.msra.mxu0 0.0
    %1509 = vmatprep.subr.mxu0 0.0
    %1510 = vmatpush1.msra.mxu0 0.0
    %1511 = vmatprep.subr.mxu0 0.0
    %1512 = vmatpush1.msra.mxu0 0.0
    %1513 = vmatprep.subr.mxu0 0.0
    %1514 = vmatpush1.msra.mxu0 0.0
    %1515 = vmatprep.subr.mxu0 0.0
    %1516 = vmatpush1.msra.mxu0 0.0
    %1517 = vmatprep.subr.mxu0 0.0
    %1518 = vmatpush1.msra.mxu0 0.0
    %1519 = vmatprep.subr.mxu0 0.0
    %1520 = vmatpush1.msra.mxu0 0.0
    %1521 = vmatprep.subr.mxu0 0.0
    %1522 = vmatpush1.msra.mxu0 0.0
    %1523 = vmatprep.subr.mxu0 0.0
    %1524 = vmatpush1.msra.mxu0 0.0
    %1525 = vmatprep.subr.mxu0 0.0
    %1526 = vmatpush1.msra.mxu0 0.0
    %1527 = vmatprep.subr.mxu0 0.0
    %1528 = vmatpush1.msra.mxu0 0.0
    %1529 = vmatprep.subr.mxu0 0.0
    %1530 = vmatpush1.msra.mxu0 0.0
    %1531 = vmatprep.subr.mxu0 0.0
    %1532 = vmatpush1.msra.mxu0 0.0
    %1533 = vmatprep.subr.mxu0 0.0
    %1534 = vmatpush1.msra.mxu0 0.0
    %1535 = vmatprep.subr.mxu0 0.0
    %1536 = vmatpush1.msra.mxu0 0.0
    %1537 = vmatprep.subr.mxu0 0.0
    %1538 = vmatpush1.msra.mxu0 0.0
    %1539 = vmatprep.subr.mxu0 0.0
    %1540 = vmatpush1.msra.mxu0 0.0
    %1541 = vmatprep.subr.mxu0 0.0
    %1542 = vmatpush1.msra.mxu0 0.0
    %1543 = vmatprep.subr.mxu0 0.0
    %1544 = vmatpush1.msra.mxu0 0.0
    %1545 = vmatprep.subr.mxu0 0.0
    %1546 = vmatpush1.msra.mxu0 0.0
    %1547 = vmatprep.subr.mxu0 0.0
    %1548 = vmatpush1.msra.mxu0 0.0
    %1549 = vmatprep.subr.mxu0 0.0
    %1550 = vmatpush1.msra.mxu0 0.0
    %1551 = vmatprep.subr.mxu0 0.0
    %1552 = vmatpush1.msra.mxu0 0.0
    %1553 = vmatprep.subr.mxu0 0.0
    %1554 = vmatpush1.msra.mxu0 0.0
    %1555 = vmatprep.mubr.f32.mxu0 0.0
    %1556 = vmatmul.mubr.f32.gmra.mrb[0].mxu0 %v1489
    %v1557 = vpop.f32.mrb[0].mxu0
    %v1558 = vadd.f32 %v1270, %v1557
    %v1559 = vpop.f32.mrb[0].mxu0
    %1560 = vdwg.mxu0
    %v1561 = vxor.u32 %v1558, 2147483648
    %v1562 = vmul.f32 %v1561, 1.442695
    %v1563 = vpow.pop %v1562
    %v1564 = vadd.f32 %v1563, 1.0
    %v1565 = vrcp.pop %v1564
    %v1566 = vmul.f32 1.0, %v1565
    %v1567 = vtanh.pop %v1558
    %v1568 = vmul.f32 %v1566, %v1470
    %1570 = vrot.lane.b32.xlu0 %v1567, 64
    %v1571 = vpop.permute.xlu0 %1570
    %v1573 = vmul.f32 %v1566, %v1571
    %1575 = vrot.lane.b32.xlu0 %v1573, 32
    %v1576 = vpop.permute.xlu0 %1575
    %v1578 = vadd.f32 %v1568, %v1576
    %v1579 = vtanh.pop %v1578
    %1581 = vrot.lane.b32.xlu0 %v1579, 64
    %v1582 = vpop.permute.xlu0 %1581
    %v1584 = vmul.f32 %v1566, %v1582
    %1586 = vrot.lane.b32.xlu0 %v1584, 32
    %v1587 = vpop.permute.xlu0 %1586
    %v1589 = vadd.f32 %v1483, %v1587
    %1590 = vst.msk [vmem:[#allocation3 + $0x4] sm:$0x3] %vm163, %v1589
    %v1591 = vld [vmem:[#allocation3 + $0x6] sm:$0x3]
    %1592 = vrot.lane.b32.xlu0 %v1584, 64
    %v1593 = vpop.permute.xlu0 %1592
    %v1595 = vsel %vm160, %v1591, %v1593
    %v1597 = vsel %vm287, %v1595, 0
    %1599 = vmatprep.subr.mxu0 0.0
    %1600 = vmatpush1.msra.mxu0 %v270
    %1601 = vmatprep.subr.mxu0 0.0
    %1602 = vmatpush1.msra.mxu0 %v271
    %1603 = vmatprep.subr.mxu0 0.0
    %1604 = vmatpush1.msra.mxu0 %v272
    %1605 = vmatprep.subr.mxu0 0.0
    %1606 = vmatpush1.msra.mxu0 %v273
    %1607 = vmatprep.subr.mxu0 0.0
    %1608 = vmatpush1.msra.mxu0 %v274
    %1609 = vmatprep.subr.mxu0 0.0
    %1610 = vmatpush1.msra.mxu0 %v275
    %1611 = vmatprep.subr.mxu0 0.0
    %1612 = vmatpush1.msra.mxu0 %v276
    %1613 = vmatprep.subr.mxu0 0.0
    %1614 = vmatpush1.msra.mxu0 %v277
    %1615 = vmatprep.subr.mxu0 0.0
    %1616 = vmatpush1.msra.mxu0 0.0
    %1617 = vmatprep.subr.mxu0 0.0
    %1618 = vmatpush1.msra.mxu0 0.0
    %1619 = vmatprep.subr.mxu0 0.0
    %1620 = vmatpush1.msra.mxu0 0.0
    %1621 = vmatprep.subr.mxu0 0.0
    %1622 = vmatpush1.msra.mxu0 0.0
    %1623 = vmatprep.subr.mxu0 0.0
    %1624 = vmatpush1.msra.mxu0 0.0
    %1625 = vmatprep.subr.mxu0 0.0
    %1626 = vmatpush1.msra.mxu0 0.0
    %1627 = vmatprep.subr.mxu0 0.0
    %1628 = vmatpush1.msra.mxu0 0.0
    %1629 = vmatprep.subr.mxu0 0.0
    %1630 = vmatpush1.msra.mxu0 0.0
    %1631 = vmatprep.subr.mxu0 0.0
    %1632 = vmatpush1.msra.mxu0 0.0
    %1633 = vmatprep.subr.mxu0 0.0
    %1634 = vmatpush1.msra.mxu0 0.0
    %1635 = vmatprep.subr.mxu0 0.0
    %1636 = vmatpush1.msra.mxu0 0.0
    %1637 = vmatprep.subr.mxu0 0.0
    %1638 = vmatpush1.msra.mxu0 0.0
    %1639 = vmatprep.subr.mxu0 0.0
    %1640 = vmatpush1.msra.mxu0 0.0
    %1641 = vmatprep.subr.mxu0 0.0
    %1642 = vmatpush1.msra.mxu0 0.0
    %1643 = vmatprep.subr.mxu0 0.0
    %1644 = vmatpush1.msra.mxu0 0.0
    %1645 = vmatprep.subr.mxu0 0.0
    %1646 = vmatpush1.msra.mxu0 0.0
    %1647 = vmatprep.subr.mxu0 0.0
    %1648 = vmatpush1.msra.mxu0 0.0
    %1649 = vmatprep.subr.mxu0 0.0
    %1650 = vmatpush1.msra.mxu0 0.0
    %1651 = vmatprep.subr.mxu0 0.0
    %1652 = vmatpush1.msra.mxu0 0.0
    %1653 = vmatprep.subr.mxu0 0.0
    %1654 = vmatpush1.msra.mxu0 0.0
    %1655 = vmatprep.subr.mxu0 0.0
    %1656 = vmatpush1.msra.mxu0 0.0
    %1657 = vmatprep.subr.mxu0 0.0
    %1658 = vmatpush1.msra.mxu0 0.0
    %1659 = vmatprep.subr.mxu0 0.0
    %1660 = vmatpush1.msra.mxu0 0.0
    %1661 = vmatprep.subr.mxu0 0.0
    %1662 = vmatpush1.msra.mxu0 0.0
    %1663 = vmatprep.mubr.f32.mxu0 0.0
    %1664 = vmatmul.mubr.f32.gmra.mrb[0].mxu0 %v1597
    %v1665 = vpop.f32.mrb[0].mxu0
    %v1666 = vadd.f32 %v1270, %v1665
    %v1667 = vpop.f32.mrb[0].mxu0
    %1668 = vdwg.mxu0
    %v1669 = vxor.u32 %v1666, 2147483648
    %v1670 = vmul.f32 %v1669, 1.442695
    %v1671 = vpow.pop %v1670
    %v1672 = vadd.f32 %v1671, 1.0
    %v1673 = vrcp.pop %v1672
    %v1674 = vmul.f32 1.0, %v1673
    %v1675 = vtanh.pop %v1666
    %v1676 = vmul.f32 %v1674, %v1578
    %1678 = vrot.lane.b32.xlu0 %v1675, 64
    %v1679 = vpop.permute.xlu0 %1678
    %v1681 = vmul.f32 %v1674, %v1679
    %1683 = vrot.lane.b32.xlu0 %v1681, 32
    %v1684 = vpop.permute.xlu0 %1683
    %v1686 = vadd.f32 %v1676, %v1684
    %v1687 = vtanh.pop %v1686
    %1689 = vrot.lane.b32.xlu0 %v1687, 64
    %v1690 = vpop.permute.xlu0 %1689
    %v1692 = vmul.f32 %v1674, %v1690
    %1694 = vrot.lane.b32.xlu0 %v1692, 32
    %v1695 = vpop.permute.xlu0 %1694
    %v1697 = vadd.f32 %v1591, %v1695
    %1698 = vst.msk [vmem:[#allocation3 + $0x6] sm:$0x3] %vm163, %v1697
    %v1699 = vld [vmem:[#allocation3 + $0x8] sm:$0x3]
    %1700 = vrot.lane.b32.xlu0 %v1692, 64
    %v1701 = vpop.permute.xlu0 %1700
    %v1703 = vsel %vm160, %v1699, %v1701
    %v1705 = vsel %vm287, %v1703, 0
    %1707 = vmatprep.subr.mxu0 0.0
    %1708 = vmatpush1.msra.mxu0 %v270
    %1709 = vmatprep.subr.mxu0 0.0
    %1710 = vmatpush1.msra.mxu0 %v271
    %1711 = vmatprep.subr.mxu0 0.0
    %1712 = vmatpush1.msra.mxu0 %v272
    %1713 = vmatprep.subr.mxu0 0.0
    %1714 = vmatpush1.msra.mxu0 %v273
    %1715 = vmatprep.subr.mxu0 0.0
    %1716 = vmatpush1.msra.mxu0 %v274
    %1717 = vmatprep.subr.mxu0 0.0
    %1718 = vmatpush1.msra.mxu0 %v275
    %1719 = vmatprep.subr.mxu0 0.0
    %1720 = vmatpush1.msra.mxu0 %v276
    %1721 = vmatprep.subr.mxu0 0.0
    %1722 = vmatpush1.msra.mxu0 %v277
    %1723 = vmatprep.subr.mxu0 0.0
    %1724 = vmatpush1.msra.mxu0 0.0
    %1725 = vmatprep.subr.mxu0 0.0
    %1726 = vmatpush1.msra.mxu0 0.0
    %1727 = vmatprep.subr.mxu0 0.0
    %1728 = vmatpush1.msra.mxu0 0.0
    %1729 = vmatprep.subr.mxu0 0.0
    %1730 = vmatpush1.msra.mxu0 0.0
    %1731 = vmatprep.subr.mxu0 0.0
    %1732 = vmatpush1.msra.mxu0 0.0
    %1733 = vmatprep.subr.mxu0 0.0
    %1734 = vmatpush1.msra.mxu0 0.0
    %1735 = vmatprep.subr.mxu0 0.0
    %1736 = vmatpush1.msra.mxu0 0.0
    %1737 = vmatprep.subr.mxu0 0.0
    %1738 = vmatpush1.msra.mxu0 0.0
    %1739 = vmatprep.subr.mxu0 0.0
    %1740 = vmatpush1.msra.mxu0 0.0
    %1741 = vmatprep.subr.mxu0 0.0
    %1742 = vmatpush1.msra.mxu0 0.0
    %1743 = vmatprep.subr.mxu0 0.0
    %1744 = vmatpush1.msra.mxu0 0.0
    %1745 = vmatprep.subr.mxu0 0.0
    %1746 = vmatpush1.msra.mxu0 0.0
    %1747 = vmatprep.subr.mxu0 0.0
    %1748 = vmatpush1.msra.mxu0 0.0
    %1749 = vmatprep.subr.mxu0 0.0
    %1750 = vmatpush1.msra.mxu0 0.0
    %1751 = vmatprep.subr.mxu0 0.0
    %1752 = vmatpush1.msra.mxu0 0.0
    %1753 = vmatprep.subr.mxu0 0.0
    %1754 = vmatpush1.msra.mxu0 0.0
    %1755 = vmatprep.subr.mxu0 0.0
    %1756 = vmatpush1.msra.mxu0 0.0
    %1757 = vmatprep.subr.mxu0 0.0
    %1758 = vmatpush1.msra.mxu0 0.0
    %1759 = vmatprep.subr.mxu0 0.0
    %1760 = vmatpush1.msra.mxu0 0.0
    %1761 = vmatprep.subr.mxu0 0.0
    %1762 = vmatpush1.msra.mxu0 0.0
    %1763 = vmatprep.subr.mxu0 0.0
    %1764 = vmatpush1.msra.mxu0 0.0
    %1765 = vmatprep.subr.mxu0 0.0
    %1766 = vmatpush1.msra.mxu0 0.0
    %1767 = vmatprep.subr.mxu0 0.0
    %1768 = vmatpush1.msra.mxu0 0.0
    %1769 = vmatprep.subr.mxu0 0.0
    %1770 = vmatpush1.msra.mxu0 0.0
    %1771 = vmatprep.mubr.f32.mxu0 0.0
    %1772 = vmatmul.mubr.f32.gmra.mrb[0].mxu0 %v1705
    %v1773 = vpop.f32.mrb[0].mxu0
    %v1774 = vadd.f32 %v1270, %v1773
    %v1775 = vpop.f32.mrb[0].mxu0
    %1776 = vdwg.mxu0
    %v1777 = vxor.u32 %v1774, 2147483648
    %v1778 = vmul.f32 %v1777, 1.442695
    %v1779 = vpow.pop %v1778
    %v1780 = vadd.f32 %v1779, 1.0
    %v1781 = vrcp.pop %v1780
    %v1782 = vmul.f32 1.0, %v1781
    %v1783 = vtanh.pop %v1774
    %v1784 = vmul.f32 %v1782, %v1686
    %1786 = vrot.lane.b32.xlu0 %v1783, 64
    %v1787 = vpop.permute.xlu0 %1786
    %v1789 = vmul.f32 %v1782, %v1787
    %1791 = vrot.lane.b32.xlu0 %v1789, 32
    %v1792 = vpop.permute.xlu0 %1791
    %v1794 = vadd.f32 %v1784, %v1792
    %v1795 = vtanh.pop %v1794
    %1797 = vrot.lane.b32.xlu0 %v1795, 64
    %v1798 = vpop.permute.xlu0 %1797
    %v1800 = vmul.f32 %v1782, %v1798
    %1802 = vrot.lane.b32.xlu0 %v1800, 32
    %v1803 = vpop.permute.xlu0 %1802
    %v1805 = vadd.f32 %v1699, %v1803
    %1806 = vst.msk [vmem:[#allocation3 + $0x8] sm:$0x3] %vm163, %v1805
    %v1807 = vld [vmem:[#allocation3 + $0xa] sm:$0x3]
    %1808 = vrot.lane.b32.xlu0 %v1800, 64
    %v1809 = vpop.permute.xlu0 %1808
    %v1811 = vsel %vm160, %v1807, %v1809
    %v1813 = vsel %vm287, %v1811, 0
    %1815 = vmatprep.subr.mxu0 0.0
    %1816 = vmatpush1.msra.mxu0 %v270
    %1817 = vmatprep.subr.mxu0 0.0
    %1818 = vmatpush1.msra.mxu0 %v271
    %1819 = vmatprep.subr.mxu0 0.0
    %1820 = vmatpush1.msra.mxu0 %v272
    %1821 = vmatprep.subr.mxu0 0.0
    %1822 = vmatpush1.msra.mxu0 %v273
    %1823 = vmatprep.subr.mxu0 0.0
    %1824 = vmatpush1.msra.mxu0 %v274
    %1825 = vmatprep.subr.mxu0 0.0
    %1826 = vmatpush1.msra.mxu0 %v275
    %1827 = vmatprep.subr.mxu0 0.0
    %1828 = vmatpush1.msra.mxu0 %v276
    %1829 = vmatprep.subr.mxu0 0.0
    %1830 = vmatpush1.msra.mxu0 %v277
    %1831 = vmatprep.subr.mxu0 0.0
    %1832 = vmatpush1.msra.mxu0 0.0
    %1833 = vmatprep.subr.mxu0 0.0
    %1834 = vmatpush1.msra.mxu0 0.0
    %1835 = vmatprep.subr.mxu0 0.0
    %1836 = vmatpush1.msra.mxu0 0.0
    %1837 = vmatprep.subr.mxu0 0.0
    %1838 = vmatpush1.msra.mxu0 0.0
    %1839 = vmatprep.subr.mxu0 0.0
    %1840 = vmatpush1.msra.mxu0 0.0
    %1841 = vmatprep.subr.mxu0 0.0
    %1842 = vmatpush1.msra.mxu0 0.0
    %1843 = vmatprep.subr.mxu0 0.0
    %1844 = vmatpush1.msra.mxu0 0.0
    %1845 = vmatprep.subr.mxu0 0.0
    %1846 = vmatpush1.msra.mxu0 0.0
    %1847 = vmatprep.subr.mxu0 0.0
    %1848 = vmatpush1.msra.mxu0 0.0
    %1849 = vmatprep.subr.mxu0 0.0
    %1850 = vmatpush1.msra.mxu0 0.0
    %1851 = vmatprep.subr.mxu0 0.0
    %1852 = vmatpush1.msra.mxu0 0.0
    %1853 = vmatprep.subr.mxu0 0.0
    %1854 = vmatpush1.msra.mxu0 0.0
    %1855 = vmatprep.subr.mxu0 0.0
    %1856 = vmatpush1.msra.mxu0 0.0
    %1857 = vmatprep.subr.mxu0 0.0
    %1858 = vmatpush1.msra.mxu0 0.0
    %1859 = vmatprep.subr.mxu0 0.0
    %1860 = vmatpush1.msra.mxu0 0.0
    %1861 = vmatprep.subr.mxu0 0.0
    %1862 = vmatpush1.msra.mxu0 0.0
    %1863 = vmatprep.subr.mxu0 0.0
    %1864 = vmatpush1.msra.mxu0 0.0
    %1865 = vmatprep.subr.mxu0 0.0
    %1866 = vmatpush1.msra.mxu0 0.0
    %1867 = vmatprep.subr.mxu0 0.0
    %1868 = vmatpush1.msra.mxu0 0.0
    %1869 = vmatprep.subr.mxu0 0.0
    %1870 = vmatpush1.msra.mxu0 0.0
    %1871 = vmatprep.subr.mxu0 0.0
    %1872 = vmatpush1.msra.mxu0 0.0
    %1873 = vmatprep.subr.mxu0 0.0
    %1874 = vmatpush1.msra.mxu0 0.0
    %1875 = vmatprep.subr.mxu0 0.0
    %1876 = vmatpush1.msra.mxu0 0.0
    %1877 = vmatprep.subr.mxu0 0.0
    %1878 = vmatpush1.msra.mxu0 0.0
    %1879 = vmatprep.mubr.f32.mxu0 0.0
    %1880 = vmatmul.mubr.f32.gmra.mrb[0].mxu0 %v1813
    %v1881 = vpop.f32.mrb[0].mxu0
    %v1882 = vadd.f32 %v1270, %v1881
    %v1883 = vpop.f32.mrb[0].mxu0
    %1884 = vdwg.mxu0
    %v1885 = vxor.u32 %v1882, 2147483648
    %v1886 = vmul.f32 %v1885, 1.442695
    %v1887 = vpow.pop %v1886
    %v1888 = vadd.f32 %v1887, 1.0
    %v1889 = vrcp.pop %v1888
    %v1890 = vmul.f32 1.0, %v1889
    %v1891 = vtanh.pop %v1882
    %v1892 = vmul.f32 %v1890, %v1794
    %1894 = vrot.lane.b32.xlu0 %v1891, 64
    %v1895 = vpop.permute.xlu0 %1894
    %v1897 = vmul.f32 %v1890, %v1895
    %1899 = vrot.lane.b32.xlu0 %v1897, 32
    %v1900 = vpop.permute.xlu0 %1899
    %v1902 = vadd.f32 %v1892, %v1900
    %v1903 = vtanh.pop %v1902
    %1905 = vrot.lane.b32.xlu0 %v1903, 64
    %v1906 = vpop.permute.xlu0 %1905
    %v1908 = vmul.f32 %v1890, %v1906
    %1910 = vrot.lane.b32.xlu0 %v1908, 32
    %v1911 = vpop.permute.xlu0 %1910
    %v1913 = vadd.f32 %v1807, %v1911
    %1914 = vst.msk [vmem:[#allocation3 + $0xa] sm:$0x3] %vm163, %v1913
    %v1915 = vld [vmem:[#allocation3 + $0xc] sm:$0x3]
    %1916 = vrot.lane.b32.xlu0 %v1908, 64
    %v1917 = vpop.permute.xlu0 %1916
    %v1919 = vsel %vm160, %v1915, %v1917
    %v1921 = vsel %vm287, %v1919, 0
    %1923 = vmatprep.subr.mxu0 0.0
    %1924 = vmatpush1.msra.mxu0 %v270
    %1925 = vmatprep.subr.mxu0 0.0
    %1926 = vmatpush1.msra.mxu0 %v271
    %1927 = vmatprep.subr.mxu0 0.0
    %1928 = vmatpush1.msra.mxu0 %v272
    %1929 = vmatprep.subr.mxu0 0.0
    %1930 = vmatpush1.msra.mxu0 %v273
    %1931 = vmatprep.subr.mxu0 0.0
    %1932 = vmatpush1.msra.mxu0 %v274
    %1933 = vmatprep.subr.mxu0 0.0
    %1934 = vmatpush1.msra.mxu0 %v275
    %1935 = vmatprep.subr.mxu0 0.0
    %1936 = vmatpush1.msra.mxu0 %v276
    %1937 = vmatprep.subr.mxu0 0.0
    %1938 = vmatpush1.msra.mxu0 %v277
    %1939 = vmatprep.subr.mxu0 0.0
    %1940 = vmatpush1.msra.mxu0 0.0
    %1941 = vmatprep.subr.mxu0 0.0
    %1942 = vmatpush1.msra.mxu0 0.0
    %1943 = vmatprep.subr.mxu0 0.0
    %1944 = vmatpush1.msra.mxu0 0.0
    %1945 = vmatprep.subr.mxu0 0.0
    %1946 = vmatpush1.msra.mxu0 0.0
    %1947 = vmatprep.subr.mxu0 0.0
    %1948 = vmatpush1.msra.mxu0 0.0
    %1949 = vmatprep.subr.mxu0 0.0
    %1950 = vmatpush1.msra.mxu0 0.0
    %1951 = vmatprep.subr.mxu0 0.0
    %1952 = vmatpush1.msra.mxu0 0.0
    %1953 = vmatprep.subr.mxu0 0.0
    %1954 = vmatpush1.msra.mxu0 0.0
    %1955 = vmatprep.subr.mxu0 0.0
    %1956 = vmatpush1.msra.mxu0 0.0
    %1957 = vmatprep.subr.mxu0 0.0
    %1958 = vmatpush1.msra.mxu0 0.0
    %1959 = vmatprep.subr.mxu0 0.0
    %1960 = vmatpush1.msra.mxu0 0.0
    %1961 = vmatprep.subr.mxu0 0.0
    %1962 = vmatpush1.msra.mxu0 0.0
    %1963 = vmatprep.subr.mxu0 0.0
    %1964 = vmatpush1.msra.mxu0 0.0
    %1965 = vmatprep.subr.mxu0 0.0
    %1966 = vmatpush1.msra.mxu0 0.0
    %1967 = vmatprep.subr.mxu0 0.0
    %1968 = vmatpush1.msra.mxu0 0.0
    %1969 = vmatprep.subr.mxu0 0.0
    %1970 = vmatpush1.msra.mxu0 0.0
    %1971 = vmatprep.subr.mxu0 0.0
    %1972 = vmatpush1.msra.mxu0 0.0
    %1973 = vmatprep.subr.mxu0 0.0
    %1974 = vmatpush1.msra.mxu0 0.0
    %1975 = vmatprep.subr.mxu0 0.0
    %1976 = vmatpush1.msra.mxu0 0.0
    %1977 = vmatprep.subr.mxu0 0.0
    %1978 = vmatpush1.msra.mxu0 0.0
    %1979 = vmatprep.subr.mxu0 0.0
    %1980 = vmatpush1.msra.mxu0 0.0
    %1981 = vmatprep.subr.mxu0 0.0
    %1982 = vmatpush1.msra.mxu0 0.0
    %1983 = vmatprep.subr.mxu0 0.0
    %1984 = vmatpush1.msra.mxu0 0.0
    %1985 = vmatprep.subr.mxu0 0.0
    %1986 = vmatpush1.msra.mxu0 0.0
    %1987 = vmatprep.mubr.f32.mxu0 0.0
    %1988 = vmatmul.mubr.f32.gmra.mrb[0].mxu0 %v1921
    %v1989 = vpop.f32.mrb[0].mxu0
    %v1990 = vadd.f32 %v1270, %v1989
    %v1991 = vpop.f32.mrb[0].mxu0
    %1992 = vdwg.mxu0
    %v1993 = vxor.u32 %v1990, 2147483648
    %v1994 = vmul.f32 %v1993, 1.442695
    %v1995 = vpow.pop %v1994
    %v1996 = vadd.f32 %v1995, 1.0
    %v1997 = vrcp.pop %v1996
    %v1998 = vmul.f32 1.0, %v1997
    %v1999 = vtanh.pop %v1990
    %v2000 = vmul.f32 %v1998, %v1902
    %2002 = vrot.lane.b32.xlu0 %v1999, 64
    %v2003 = vpop.permute.xlu0 %2002
    %v2005 = vmul.f32 %v1998, %v2003
    %2007 = vrot.lane.b32.xlu0 %v2005, 32
    %v2008 = vpop.permute.xlu0 %2007
    %v2010 = vadd.f32 %v2000, %v2008
    %v2011 = vtanh.pop %v2010
    %2013 = vrot.lane.b32.xlu0 %v2011, 64
    %v2014 = vpop.permute.xlu0 %2013
    %v2016 = vmul.f32 %v1998, %v2014
    %2018 = vrot.lane.b32.xlu0 %v2016, 32
    %v2019 = vpop.permute.xlu0 %2018
    %v2021 = vadd.f32 %v1915, %v2019
    %2022 = vst.msk [vmem:[#allocation3 + $0xc] sm:$0x3] %vm163, %v2021
    %v2023 = vld [vmem:[#allocation3 + $0xe] sm:$0x3]
    %2024 = vrot.lane.b32.xlu0 %v2016, 64
    %v2025 = vpop.permute.xlu0 %2024
    %v2027 = vsel %vm160, %v2023, %v2025
    %v2029 = vsel %vm287, %v2027, 0
    %2031 = vmatprep.subr.mxu0 0.0
    %2032 = vmatpush1.msra.mxu0 %v270
    %2033 = vmatprep.subr.mxu0 0.0
    %2034 = vmatpush1.msra.mxu0 %v271
    %2035 = vmatprep.subr.mxu0 0.0
    %2036 = vmatpush1.msra.mxu0 %v272
    %2037 = vmatprep.subr.mxu0 0.0
    %2038 = vmatpush1.msra.mxu0 %v273
    %2039 = vmatprep.subr.mxu0 0.0
    %2040 = vmatpush1.msra.mxu0 %v274
    %2041 = vmatprep.subr.mxu0 0.0
    %2042 = vmatpush1.msra.mxu0 %v275
    %2043 = vmatprep.subr.mxu0 0.0
    %2044 = vmatpush1.msra.mxu0 %v276
    %2045 = vmatprep.subr.mxu0 0.0
    %2046 = vmatpush1.msra.mxu0 %v277
    %2047 = vmatprep.subr.mxu0 0.0
    %2048 = vmatpush1.msra.mxu0 0.0
    %2049 = vmatprep.subr.mxu0 0.0
    %2050 = vmatpush1.msra.mxu0 0.0
    %2051 = vmatprep.subr.mxu0 0.0
    %2052 = vmatpush1.msra.mxu0 0.0
    %2053 = vmatprep.subr.mxu0 0.0
    %2054 = vmatpush1.msra.mxu0 0.0
    %2055 = vmatprep.subr.mxu0 0.0
    %2056 = vmatpush1.msra.mxu0 0.0
    %2057 = vmatprep.subr.mxu0 0.0
    %2058 = vmatpush1.msra.mxu0 0.0
    %2059 = vmatprep.subr.mxu0 0.0
    %2060 = vmatpush1.msra.mxu0 0.0
    %2061 = vmatprep.subr.mxu0 0.0
    %2062 = vmatpush1.msra.mxu0 0.0
    %2063 = vmatprep.subr.mxu0 0.0
    %2064 = vmatpush1.msra.mxu0 0.0
    %2065 = vmatprep.subr.mxu0 0.0
    %2066 = vmatpush1.msra.mxu0 0.0
    %2067 = vmatprep.subr.mxu0 0.0
    %2068 = vmatpush1.msra.mxu0 0.0
    %2069 = vmatprep.subr.mxu0 0.0
    %2070 = vmatpush1.msra.mxu0 0.0
    %2071 = vmatprep.subr.mxu0 0.0
    %2072 = vmatpush1.msra.mxu0 0.0
    %2073 = vmatprep.subr.mxu0 0.0
    %2074 = vmatpush1.msra.mxu0 0.0
    %2075 = vmatprep.subr.mxu0 0.0
    %2076 = vmatpush1.msra.mxu0 0.0
    %2077 = vmatprep.subr.mxu0 0.0
    %2078 = vmatpush1.msra.mxu0 0.0
    %2079 = vmatprep.subr.mxu0 0.0
    %2080 = vmatpush1.msra.mxu0 0.0
    %2081 = vmatprep.subr.mxu0 0.0
    %2082 = vmatpush1.msra.mxu0 0.0
    %2083 = vmatprep.subr.mxu0 0.0
    %2084 = vmatpush1.msra.mxu0 0.0
    %2085 = vmatprep.subr.mxu0 0.0
    %2086 = vmatpush1.msra.mxu0 0.0
    %2087 = vmatprep.subr.mxu0 0.0
    %2088 = vmatpush1.msra.mxu0 0.0
    %2089 = vmatprep.subr.mxu0 0.0
    %2090 = vmatpush1.msra.mxu0 0.0
    %2091 = vmatprep.subr.mxu0 0.0
    %2092 = vmatpush1.msra.mxu0 0.0
    %2093 = vmatprep.subr.mxu0 0.0
    %2094 = vmatpush1.msra.mxu0 0.0
    %2095 = vmatprep.mubr.f32.mxu0 0.0
    %2096 = vmatmul.mubr.f32.gmra.mrb[0].mxu0 %v2029
    %v2097 = vpop.f32.mrb[0].mxu0
    %v2098 = vadd.f32 %v1270, %v2097
    %v2099 = vpop.f32.mrb[0].mxu0
    %2100 = vdwg.mxu0
    %v2101 = vxor.u32 %v2098, 2147483648
    %v2102 = vmul.f32 %v2101, 1.442695
    %v2103 = vpow.pop %v2102
    %v2104 = vadd.f32 %v2103, 1.0
    %v2105 = vrcp.pop %v2104
    %v2106 = vmul.f32 1.0, %v2105
    %v2107 = vtanh.pop %v2098
    %v2108 = vmul.f32 %v2106, %v2010
    %2110 = vrot.lane.b32.xlu0 %v2107, 64
    %v2111 = vpop.permute.xlu0 %2110
    %v2113 = vmul.f32 %v2106, %v2111
    %2115 = vrot.lane.b32.xlu0 %v2113, 32
    %v2116 = vpop.permute.xlu0 %2115
    %v2118 = vadd.f32 %v2108, %v2116
    %v2119 = vtanh.pop %v2118
    %2121 = vrot.lane.b32.xlu0 %v2119, 64
    %v2122 = vpop.permute.xlu0 %2121
    %v2124 = vmul.f32 %v2106, %v2122
    %2126 = vrot.lane.b32.xlu0 %v2124, 32
    %v2127 = vpop.permute.xlu0 %2126
    %v2129 = vadd.f32 %v2023, %v2127
    %2130 = vst.msk [vmem:[#allocation3 + $0xe] sm:$0x3] %vm163, %v2129
    %v2131 = vld [vmem:[#allocation3 + $0x10] sm:$0x3]
    %2132 = vrot.lane.b32.xlu0 %v2124, 64
    %v2133 = vpop.permute.xlu0 %2132
    %v2135 = vsel %vm160, %v2131, %v2133
    %v2137 = vsel %vm287, %v2135, 0
    %2139 = vmatprep.subr.mxu0 0.0
    %2140 = vmatpush1.msra.mxu0 %v270
    %2141 = vmatprep.subr.mxu0 0.0
    %2142 = vmatpush1.msra.mxu0 %v271
    %2143 = vmatprep.subr.mxu0 0.0
    %2144 = vmatpush1.msra.mxu0 %v272
    %2145 = vmatprep.subr.mxu0 0.0
    %2146 = vmatpush1.msra.mxu0 %v273
    %2147 = vmatprep.subr.mxu0 0.0
    %2148 = vmatpush1.msra.mxu0 %v274
    %2149 = vmatprep.subr.mxu0 0.0
    %2150 = vmatpush1.msra.mxu0 %v275
    %2151 = vmatprep.subr.mxu0 0.0
    %2152 = vmatpush1.msra.mxu0 %v276
    %2153 = vmatprep.subr.mxu0 0.0
    %2154 = vmatpush1.msra.mxu0 %v277
    %2155 = vmatprep.subr.mxu0 0.0
    %2156 = vmatpush1.msra.mxu0 0.0
    %2157 = vmatprep.subr.mxu0 0.0
    %2158 = vmatpush1.msra.mxu0 0.0
    %2159 = vmatprep.subr.mxu0 0.0
    %2160 = vmatpush1.msra.mxu0 0.0
    %2161 = vmatprep.subr.mxu0 0.0
    %2162 = vmatpush1.msra.mxu0 0.0
    %2163 = vmatprep.subr.mxu0 0.0
    %2164 = vmatpush1.msra.mxu0 0.0
    %2165 = vmatprep.subr.mxu0 0.0
    %2166 = vmatpush1.msra.mxu0 0.0
    %2167 = vmatprep.subr.mxu0 0.0
    %2168 = vmatpush1.msra.mxu0 0.0
    %2169 = vmatprep.subr.mxu0 0.0
    %2170 = vmatpush1.msra.mxu0 0.0
    %2171 = vmatprep.subr.mxu0 0.0
    %2172 = vmatpush1.msra.mxu0 0.0
    %2173 = vmatprep.subr.mxu0 0.0
    %2174 = vmatpush1.msra.mxu0 0.0
    %2175 = vmatprep.subr.mxu0 0.0
    %2176 = vmatpush1.msra.mxu0 0.0
    %2177 = vmatprep.subr.mxu0 0.0
    %2178 = vmatpush1.msra.mxu0 0.0
    %2179 = vmatprep.subr.mxu0 0.0
    %2180 = vmatpush1.msra.mxu0 0.0
    %2181 = vmatprep.subr.mxu0 0.0
    %2182 = vmatpush1.msra.mxu0 0.0
    %2183 = vmatprep.subr.mxu0 0.0
    %2184 = vmatpush1.msra.mxu0 0.0
    %2185 = vmatprep.subr.mxu0 0.0
    %2186 = vmatpush1.msra.mxu0 0.0
    %2187 = vmatprep.subr.mxu0 0.0
    %2188 = vmatpush1.msra.mxu0 0.0
    %2189 = vmatprep.subr.mxu0 0.0
    %2190 = vmatpush1.msra.mxu0 0.0
    %2191 = vmatprep.subr.mxu0 0.0
    %2192 = vmatpush1.msra.mxu0 0.0
    %2193 = vmatprep.subr.mxu0 0.0
    %2194 = vmatpush1.msra.mxu0 0.0
    %2195 = vmatprep.subr.mxu0 0.0
    %2196 = vmatpush1.msra.mxu0 0.0
    %2197 = vmatprep.subr.mxu0 0.0
    %2198 = vmatpush1.msra.mxu0 0.0
    %2199 = vmatprep.subr.mxu0 0.0
    %2200 = vmatpush1.msra.mxu0 0.0
    %2201 = vmatprep.subr.mxu0 0.0
    %2202 = vmatpush1.msra.mxu0 0.0
    %2203 = vmatprep.mubr.f32.mxu0 0.0
    %2204 = vmatmul.mubr.f32.gmra.mrb[0].mxu0 %v2137
    %v2205 = vpop.f32.mrb[0].mxu0
    %v2206 = vadd.f32 %v1270, %v2205
    %v2207 = vpop.f32.mrb[0].mxu0
    %2208 = vdwg.mxu0
    %v2209 = vxor.u32 %v2206, 2147483648
    %v2210 = vmul.f32 %v2209, 1.442695
    %v2211 = vpow.pop %v2210
    %v2212 = vadd.f32 %v2211, 1.0
    %v2213 = vrcp.pop %v2212
    %v2214 = vmul.f32 1.0, %v2213
    %v2215 = vtanh.pop %v2206
    %v2216 = vmul.f32 %v2214, %v2118
    %2218 = vrot.lane.b32.xlu0 %v2215, 64
    %v2219 = vpop.permute.xlu0 %2218
    %v2221 = vmul.f32 %v2214, %v2219
    %2223 = vrot.lane.b32.xlu0 %v2221, 32
    %v2224 = vpop.permute.xlu0 %2223
    %v2226 = vadd.f32 %v2216, %v2224
    %v2227 = vtanh.pop %v2226
    %2229 = vrot.lane.b32.xlu0 %v2227, 64
    %v2230 = vpop.permute.xlu0 %2229
    %v2232 = vmul.f32 %v2214, %v2230
    %2234 = vrot.lane.b32.xlu0 %v2232, 32
    %v2235 = vpop.permute.xlu0 %2234
    %v2237 = vadd.f32 %v2131, %v2235
    %2238 = vst.msk [vmem:[#allocation3 + $0x10] sm:$0x3] %vm163, %v2237
    %v2239 = vld [vmem:[#allocation3] sm:$0xff]
    %v2240 = vld [vmem:[#allocation3 + $0x8] sm:$0xff]
    %v2241 = vld [vmem:[#allocation3 + $0x10] sm:$0x3]
    %v2242 = vld [vmem:[%s7] sm:$0xff]
    %v2243 = vld [vmem:[%s7 + $0x8] sm:$0xff]
    %v2244 = vld [vmem:[%s7 + $0x10] sm:$0xff]
    %v2245 = vld [vmem:[%s7 + $0x18] sm:$0xff]
    %v2247 = vsel %vm160, %v2239, 0
    %v2250 = vsel %vm160, %v2240, 0
    %v2253 = vsel %vm160, %v2241, 0
    %2255 = vmatprep.subr.mxu0 0.0
    %2256 = vmatpush1.msra.mxu0 %v2242
    %2257 = vmatprep.subr.mxu0 0.0
    %2258 = vmatpush1.msra.mxu0 %v2243
    %2259 = vmatprep.subr.mxu0 0.0
    %2260 = vmatpush1.msra.mxu0 %v2244
    %2261 = vmatprep.subr.mxu0 0.0
    %2262 = vmatpush1.msra.mxu0 %v2245
    %2263 = vmatprep.subr.mxu0 0.0
    %2264 = vmatpush1.msra.mxu0 0.0
    %2265 = vmatprep.subr.mxu0 0.0
    %2266 = vmatpush1.msra.mxu0 0.0
    %2267 = vmatprep.subr.mxu0 0.0
    %2268 = vmatpush1.msra.mxu0 0.0
    %2269 = vmatprep.subr.mxu0 0.0
    %2270 = vmatpush1.msra.mxu0 0.0
    %2271 = vmatprep.subr.mxu0 0.0
    %2272 = vmatpush1.msra.mxu0 0.0
    %2273 = vmatprep.subr.mxu0 0.0
    %2274 = vmatpush1.msra.mxu0 0.0
    %2275 = vmatprep.subr.mxu0 0.0
    %2276 = vmatpush1.msra.mxu0 0.0
    %2277 = vmatprep.subr.mxu0 0.0
    %2278 = vmatpush1.msra.mxu0 0.0
    %2279 = vmatprep.subr.mxu0 0.0
    %2280 = vmatpush1.msra.mxu0 0.0
    %2281 = vmatprep.subr.mxu0 0.0
    %2282 = vmatpush1.msra.mxu0 0.0
    %2283 = vmatprep.subr.mxu0 0.0
    %2284 = vmatpush1.msra.mxu0 0.0
    %2285 = vmatprep.subr.mxu0 0.0
    %2286 = vmatpush1.msra.mxu0 0.0
    %2287 = vmatprep.subr.mxu0 0.0
    %2288 = vmatpush1.msra.mxu0 0.0
    %2289 = vmatprep.subr.mxu0 0.0
    %2290 = vmatpush1.msra.mxu0 0.0
    %2291 = vmatprep.subr.mxu0 0.0
    %2292 = vmatpush1.msra.mxu0 0.0
    %2293 = vmatprep.subr.mxu0 0.0
    %2294 = vmatpush1.msra.mxu0 0.0
    %2295 = vmatprep.subr.mxu0 0.0
    %2296 = vmatpush1.msra.mxu0 0.0
    %2297 = vmatprep.subr.mxu0 0.0
    %2298 = vmatpush1.msra.mxu0 0.0
    %2299 = vmatprep.subr.mxu0 0.0
    %2300 = vmatpush1.msra.mxu0 0.0
    %2301 = vmatprep.subr.mxu0 0.0
    %2302 = vmatpush1.msra.mxu0 0.0
    %2303 = vmatprep.subr.mxu0 0.0
    %2304 = vmatpush1.msra.mxu0 0.0
    %2305 = vmatprep.subr.mxu0 0.0
    %2306 = vmatpush1.msra.mxu0 0.0
    %2307 = vmatprep.subr.mxu0 0.0
    %2308 = vmatpush1.msra.mxu0 0.0
    %2309 = vmatprep.subr.mxu0 0.0
    %2310 = vmatpush1.msra.mxu0 0.0
    %2311 = vmatprep.subr.mxu0 0.0
    %2312 = vmatpush1.msra.mxu0 0.0
    %2313 = vmatprep.subr.mxu0 0.0
    %2314 = vmatpush1.msra.mxu0 0.0
    %2315 = vmatprep.subr.mxu0 0.0
    %2316 = vmatpush1.msra.mxu0 0.0
    %2317 = vmatprep.subr.mxu0 0.0
    %2318 = vmatpush1.msra.mxu0 0.0
    %2319 = vmatprep.mubr.f32.mxu0 0.0
    %2320 = vmatmul.mubr.f32.gmra.mrb[0].mxu0 %v2247
    %v2321 = vpop.f32.mrb[0].mxu0
    %v2322 = vadd.f32 0.0, %v2321
    %v2323 = vpop.f32.mrb[0].mxu0
    %2324 = vmatprep.mubr.f32.mxu0 0.0
    %2325 = vmatmul.mubr.f32.gmra.mrb[0].mxu0 %v2250
    %v2326 = vpop.f32.mrb[0].mxu0
    %v2327 = vadd.f32 0.0, %v2326
    %v2328 = vpop.f32.mrb[0].mxu0
    %2329 = vmatprep.mubr.f32.mxu0 0.0
    %2330 = vmatmul.mubr.f32.gmra.mrb[0].mxu0 %v2253
    %v2331 = vpop.f32.mrb[0].mxu0
    %v2332 = vadd.f32 0.0, %v2331
    %v2333 = vpop.f32.mrb[0].mxu0
    %2334 = vdwg.mxu0
    %2335 = vst [vmem:[%s8] sm:$0xff] %v2322
    %2336 = vst [vmem:[%s8 + $0x8] sm:$0xff] %v2327
    %2337 = vst [vmem:[%s8 + $0x10] sm:$0x3] %v2332
    // Predicated region
    $region38: #{dec_elmo_forward.1} parent=1 // pred_check
      _
    $region39: #{dec_elmo_forward.1} parent=1 // pred_check_branch
      %2339 = sbr.rel (0) target = $region41
    $region40: #{dec_elmo_forward.1} parent=1 // pred_region
      _
    $region41: #{dec_elmo_forward.1} parent=1 // pred_fallthru
      _
    // Predicated region
    $region42: #{dec_elmo_forward.1} parent=1 // pred_check
      _
    $region43: #{dec_elmo_forward.1} parent=1 // pred_check_branch
      %2341 = sbr.rel (0) target = $region45
    $region44: #{dec_elmo_forward.1} parent=1 // pred_region
      _
    $region45: #{dec_elmo_forward.1} parent=1 // pred_fallthru
      _
    %2342 = vsyncpa [#allocation5], 1

</llo_original>
